<compile_context>
chip_gen: v7x
topology: tpu7x:2x2x1
jax: 0.10.0
libtpu: 0.0.40
codegen_flags: <defaults>
</compile_context>

<pallas_src>
import functools

import jax
import jax.numpy as jnp
from jax import lax
from jax.experimental import pallas as pl
from jax.experimental.pallas import tpu as pltpu


def _cblock_kernel(x_ref, wpos_ref, bpos_ref, wc1_ref, bc1_ref,
                   wsa_ref, bsa_ref, wf1_ref, bf1_ref,
                   wf2_ref, bf2_ref, o_ref, pad_ref, *, H, W, C):
    """One grid step = one image (all H*W tokens batched into each matmul).

    x_ref   : (1, H, W, C)  input image, channels-last
    w*_ref  : depthwise 3x3 weights as (9, C) f32; 1x1-conv weights as (Cin, Cout) bf16
              (BN1 / BN2 already folded into wc1 / wf1 wrapper-side)
    b*_ref  : (1, Cout) f32 biases (BN contribution already folded in for conv1 / fc1)
    o_ref   : (1, H, W, C)
    pad_ref : (H+2, W+16, C) f32 scratch holding the zero-padded depthwise-conv input.
              The interior is stored at row offset 1, col offset 8 (sublane-tile aligned);
              the 3x3 stencil reads rows 0..H+1 and cols 7..W+8 (zero border = "same" pad).
    """
    f32 = jnp.float32

    # Zero the padded scratch every grid step. Both depthwise convs only rewrite the
    # interior, so the zero border survives across the two conv calls within a step.
    pad_ref[...] = jnp.zeros_like(pad_ref)

    def dwconv3x3(val, w9_ref, b_ref):
        # out[h,w,c] = b[c] + sum_{kh,kw} w9[3*kh+kw, c] * val[h+kh-1, w+kw-1, c]
        pad_ref[1:H + 1, 8:W + 8, :] = val            # tile-aligned interior store
        xp = pad_ref[...]                             # (H+2, W+16, C)
        w9 = w9_ref[...]
        acc = None
        for i in range(9):
            kh, kw = divmod(i, 3)
            tap = xp[kh:kh + H, 7 + kw:7 + kw + W, :] * w9[i:i + 1, :].reshape(1, 1, C)
            acc = tap if acc is None else acc + tap
        return acc + b_ref[...].reshape(1, 1, C)

    def matmul_bf16(lhs2d, w_ref, b_ref):
        # MXU matmul with bf16 operands, f32 accumulation, f32 bias add.
        return jnp.dot(lhs2d.astype(jnp.bfloat16), w_ref[...],
                       preferred_element_type=f32) + b_ref[...]

    x = x_ref[0].astype(f32)                                             # (H, W, C)

    # --- pos_embed (depthwise 3x3) + residual -------------------------------------
    x1 = x + dwconv3x3(x, wpos_ref, bpos_ref)

    # --- BN1 (folded) -> conv1 (1x1) -> shallow_sa (depthwise 3x3) + residual ------
    t = matmul_bf16(x1.reshape(H * W, C), wc1_ref, bc1_ref).reshape(H, W, C)
    x2 = x1 + dwconv3x3(t, wsa_ref, bsa_ref)

    # --- BN2 (folded) -> CMlp (fc1 -> GELU -> fc2) + residual ----------------------
    # Dropout(0.5) is identity at inference.
    h = matmul_bf16(x2.reshape(H * W, C), wf1_ref, bf1_ref)
    # TODO(synk): torch.nn.GELU() is exact erf-GELU; tanh approximation is used here
    # (guaranteed EUP lowering on Mosaic), max deviation ~1e-3.
    h = jax.nn.gelu(h, approximate=True)
    y = matmul_bf16(h, wf2_ref, bf2_ref)

    o_ref[0] = (x2 + y.reshape(H, W, C)).astype(o_ref.dtype)


def cblock_pallas(x, p, *, eps=1e-5):
    """x: (B, C, H, W) float32; p: dict of parameters in PyTorch layouts (see __main__)."""
    B, C, H, W = x.shape
    xl = jnp.transpose(x, (0, 2, 3, 1))                      # NCHW -> NHWC
    f32 = jnp.float32

    def dw9(w):       # depthwise (C, 1, 3, 3) -> (9, C) f32
        return jnp.transpose(w[:, 0], (1, 2, 0)).reshape(9, C).astype(f32)

    def pw(w):        # 1x1 conv (Cout, Cin, 1, 1) -> (Cin, Cout) f32
        return jnp.transpose(w[:, :, 0, 0], (1, 0)).astype(f32)

    def bnfold(g, b, m, v):   # eval-mode BatchNorm -> per-channel scale / bias (f32)
        s = g / jnp.sqrt(v + eps)
        return s, b - m * s

    def fold_bn_into_pw(w_io, bias, s_bn, b_bn):
        # conv(BN(x)) = (w * s_bn[in]) @ x + (b_bn @ w + bias); folded in f32, cast to bf16.
        w_f = (w_io * s_bn[:, None]).astype(jnp.bfloat16)
        b_f = (b_bn @ w_io + bias).reshape(1, -1)
        return w_f, b_f

    wpos, bpos = dw9(p['pos_w']), p['pos_b'].reshape(1, C)
    wsa, bsa = dw9(p['sa_w']), p['sa_b'].reshape(1, C)

    s1, bb1 = bnfold(p['bn1_g'], p['bn1_b'], p['bn1_m'], p['bn1_v'])
    wc1, bc1 = fold_bn_into_pw(pw(p['conv1_w']), p['conv1_b'], s1, bb1)

    s2, bb2 = bnfold(p['bn2_g'], p['bn2_b'], p['bn2_m'], p['bn2_v'])
    wf1, bf1 = fold_bn_into_pw(pw(p['fc1_w']), p['fc1_b'], s2, bb2)

    wf2 = pw(p['fc2_w']).astype(jnp.bfloat16)
    bf2 = p['fc2_b'].reshape(1, C)
    hid = wf1.shape[1]

    def full2d(shape):
        return pl.BlockSpec(shape, lambda b: (0, 0))

    kernel = functools.partial(_cblock_kernel, H=H, W=W, C=C)

    out = pl.pallas_call(
        kernel,
        out_shape=jax.ShapeDtypeStruct((B, H, W, C), x.dtype),
        grid_spec=pltpu.PrefetchScalarGridSpec(
            num_scalar_prefetch=0,
            grid=(B,),                       # one image per step; parallel -> both TCs on v7x
            in_specs=[
                pl.BlockSpec((1, H, W, C), lambda b: (b, 0, 0, 0)),
                full2d((9, C)), full2d((1, C)),                 # pos_embed
                full2d((C, C)), full2d((1, C)),                 # BN1-folded conv1
                full2d((9, C)), full2d((1, C)),                 # shallow_sa
                full2d((C, hid)), full2d((1, hid)),             # BN2-folded mlp.fc1
                full2d((hid, C)), full2d((1, C)),               # mlp.fc2
            ],
            out_specs=pl.BlockSpec((1, H, W, C), lambda b: (b, 0, 0, 0)),
            # NOTE(v7x): at production C (320/512) budget VMEM explicitly
            # (vmem_limit_bytes / single-buffer the constant-index weight specs).
            scratch_shapes=[pltpu.VMEM((H + 2, W + 16, C), jnp.float32)],
        ),
        compiler_params=pltpu.CompilerParams(
            dimension_semantics=("parallel",)),
    )(xl, wpos, bpos, wc1, bc1, wsa, bsa, wf1, bf1, wf2, bf2)

    return jnp.transpose(out, (0, 3, 1, 2))                   # NHWC -> NCHW


def cblock_ref(x, p, *, eps=1e-5):
    """Pure-JAX (f32) reference mirroring the PyTorch forward in eval mode."""
    C = x.shape[1]
    dimn = ('NCHW', 'OIHW', 'NCHW')

    def dwconv(v, w, b):
        o = lax.conv_general_dilated(v, w, (1, 1), [(1, 1), (1, 1)],
                                     dimension_numbers=dimn, feature_group_count=C)
        return o + b.reshape(1, -1, 1, 1)

    def pwconv(v, w, b):
        o = lax.conv_general_dilated(v, w, (1, 1), [(0, 0), (0, 0)],
                                     dimension_numbers=dimn)
        return o + b.reshape(1, -1, 1, 1)

    def bn(v, g, be, m, var):
        return ((v - m.reshape(1, -1, 1, 1))
                * (g.reshape(1, -1, 1, 1) / jnp.sqrt(var.reshape(1, -1, 1, 1) + eps))
                + be.reshape(1, -1, 1, 1))

    x = x + dwconv(x, p['pos_w'], p['pos_b'])
    x = x + dwconv(pwconv(bn(x, p['bn1_g'], p['bn1_b'], p['bn1_m'], p['bn1_v']),
                          p['conv1_w'], p['conv1_b']),
                   p['sa_w'], p['sa_b'])
    u = pwconv(bn(x, p['bn2_g'], p['bn2_b'], p['bn2_m'], p['bn2_v']),
               p['fc1_w'], p['fc1_b'])
    u = jax.nn.gelu(u, approximate=True)
    u = pwconv(u, p['fc2_w'], p['fc2_b'])
    return x + u


if __name__ == "__main__":
    B, C, H, W = 2, 32, 16, 16
    key = jax.random.PRNGKey(0)
    ks = jax.random.split(key, 19)

    def nrm(k, shape, s=0.05):
        return jax.random.normal(k, shape, dtype=jnp.float32) * s

    x = jax.random.normal(ks[0], (B, C, H, W), dtype=jnp.float32)
    p = dict(
        pos_w=nrm(ks[1], (C, 1, 3, 3), 0.1),  pos_b=nrm(ks[2], (C,), 0.1),
        bn1_g=1.0 + nrm(ks[3], (C,), 0.1),    bn1_b=nrm(ks[4], (C,), 0.1),
        bn1_m=nrm(ks[5], (C,), 0.1),
        bn1_v=1.0 + 0.5 * jax.nn.sigmoid(jax.random.normal(ks[6], (C,), jnp.float32)),
        conv1_w=nrm(ks[7], (C, C, 1, 1)),     conv1_b=nrm(ks[8], (C,), 0.1),
        sa_w=nrm(ks[9], (C, 1, 3, 3), 0.1),   sa_b=nrm(ks[10], (C,), 0.1),
        bn2_g=1.0 + nrm(ks[11], (C,), 0.1),   bn2_b=nrm(ks[12], (C,), 0.1),
        bn2_m=nrm(ks[13], (C,), 0.1),
        bn2_v=1.0 + 0.5 * jax.nn.sigmoid(jax.random.normal(ks[14], (C,), jnp.float32)),
        fc1_w=nrm(ks[15], (C, C, 1, 1)),      fc1_b=nrm(ks[16], (C,), 0.1),
        fc2_w=nrm(ks[17], (C, C, 1, 1)),      fc2_b=nrm(ks[18], (C,), 0.1),
    )

    out = jax.block_until_ready(cblock_pallas(x, p))
    ref = cblock_ref(x, p)

    assert out.shape == x.shape
    max_err = float(jnp.max(jnp.abs(out - ref)))
    # Tolerance accounts for the three 1x1-conv matmuls running with bf16 operands
    # (f32 accumulation) and BN folded into the bf16 weights.
    assert jnp.allclose(out, ref, atol=3e-2, rtol=3e-2), \
        f"mismatch vs reference (max abs err {max_err})"
    print("KERNEL_OK")
</pallas_src>

<mosaic_0001>
module attributes {stable_mosaic.version = 11 : i64} {
  func.func @_cblock_kernel(%arg0: i32, %arg1: memref<1x16x16x32xf32, #tpu.memory_space<vmem>>, %arg2: memref<9x32xf32, #tpu.memory_space<vmem>>, %arg3: memref<1x32xf32, #tpu.memory_space<vmem>>, %arg4: memref<32x32xbf16, #tpu.memory_space<vmem>>, %arg5: memref<1x32xf32, #tpu.memory_space<vmem>>, %arg6: memref<9x32xf32, #tpu.memory_space<vmem>>, %arg7: memref<1x32xf32, #tpu.memory_space<vmem>>, %arg8: memref<32x32xbf16, #tpu.memory_space<vmem>>, %arg9: memref<1x32xf32, #tpu.memory_space<vmem>>, %arg10: memref<32x32xbf16, #tpu.memory_space<vmem>>, %arg11: memref<1x32xf32, #tpu.memory_space<vmem>>, %arg12: memref<1x16x16x32xf32, #tpu.memory_space<vmem>>, %arg13: memref<18x32x32xf32, #tpu.memory_space<vmem>>) attributes {dimension_semantics = [#tpu.dimension_semantics<parallel>], iteration_bounds = array<i64: 2>, scalar_prefetch = 0 : i64, scratch_operands = 1 : i64, tpu.core_type = #tpu.core_type<tc>, window_params = [{transform_indices = @transform_0, window_bounds = array<i64: 1, 16, 16, 32>}, {pipeline_mode = #tpu.pipeline_mode<synchronous>, transform_indices = @transform_1, window_bounds = array<i64: 9, 32>}, {pipeline_mode = #tpu.pipeline_mode<synchronous>, transform_indices = @transform_2, window_bounds = array<i64: 1, 32>}, {pipeline_mode = #tpu.pipeline_mode<synchronous>, transform_indices = @transform_3, window_bounds = array<i64: 32, 32>}, {pipeline_mode = #tpu.pipeline_mode<synchronous>, transform_indices = @transform_4, window_bounds = array<i64: 1, 32>}, {pipeline_mode = #tpu.pipeline_mode<synchronous>, transform_indices = @transform_5, window_bounds = array<i64: 9, 32>}, {pipeline_mode = #tpu.pipeline_mode<synchronous>, transform_indices = @transform_6, window_bounds = array<i64: 1, 32>}, {pipeline_mode = #tpu.pipeline_mode<synchronous>, transform_indices = @transform_7, window_bounds = array<i64: 32, 32>}, {pipeline_mode = #tpu.pipeline_mode<synchronous>, transform_indices = @transform_8, window_bounds = array<i64: 1, 32>}, {pipeline_mode = #tpu.pipeline_mode<synchronous>, transform_indices = @transform_9, window_bounds = array<i64: 32, 32>}, {pipeline_mode = #tpu.pipeline_mode<synchronous>, transform_indices = @transform_10, window_bounds = array<i64: 1, 32>}, {transform_indices = @transform_11, window_bounds = array<i64: 1, 16, 16, 32>}]} {
    %cst = arith.constant 0.000000e+00 : f32
    %0 = vector.broadcast %cst : f32 to vector<18x32x32xf32>
    %c0 = arith.constant 0 : index
    %c0_0 = arith.constant 0 : index
    %c0_1 = arith.constant 0 : index
    %1 = vector.load %arg13[%c0, %c0_0, %c0_1] : memref<18x32x32xf32, #tpu.memory_space<vmem>>, vector<18x32x32xf32>
    tpu.vector_store %arg13[%c0, %c0_0, %c0_1], %0 {strides = array<i32>} : memref<18x32x32xf32, #tpu.memory_space<vmem>>, vector<18x32x32xf32>,
    %c0_2 = arith.constant 0 : index
    %c0_3 = arith.constant 0 : index
    %c0_4 = arith.constant 0 : index
    %c0_5 = arith.constant 0 : index
    %2 = vector.load %arg1[%c0_2, %c0_3, %c0_4, %c0_5] : memref<1x16x16x32xf32, #tpu.memory_space<vmem>>, vector<1x16x16x32xf32>
    %3 = vector.shape_cast %2 : vector<1x16x16x32xf32> to vector<16x16x32xf32>
    %c1 = arith.constant 1 : index
    %c8 = arith.constant 8 : index
    %c0_6 = arith.constant 0 : index
    %4 = vector.load %arg13[%c1, %c8, %c0_6] : memref<18x32x32xf32, #tpu.memory_space<vmem>>, vector<16x16x32xf32>
    tpu.vector_store %arg13[%c1, %c8, %c0_6], %3 {strides = array<i32>} : memref<18x32x32xf32, #tpu.memory_space<vmem>>, vector<16x16x32xf32>,
    %c0_7 = arith.constant 0 : index
    %c0_8 = arith.constant 0 : index
    %c0_9 = arith.constant 0 : index
    %5 = vector.load %arg13[%c0_7, %c0_8, %c0_9] : memref<18x32x32xf32, #tpu.memory_space<vmem>>, vector<18x32x32xf32>
    %c0_10 = arith.constant 0 : index
    %c0_11 = arith.constant 0 : index
    %6 = vector.load %arg2[%c0_10, %c0_11] : memref<9x32xf32, #tpu.memory_space<vmem>>, vector<9x32xf32>
    %7 = vector.extract_strided_slice %5 {offsets = [0, 7, 0], sizes = [16, 16, 32], strides = [1, 1, 1]} : vector<18x32x32xf32> to vector<16x16x32xf32>
    %8 = vector.extract_strided_slice %6 {offsets = [0, 0], sizes = [1, 32], strides = [1, 1]} : vector<9x32xf32> to vector<1x32xf32>
    %9 = vector.shape_cast %8 : vector<1x32xf32> to vector<1x1x32xf32>
    %10 = vector.broadcast %9 : vector<1x1x32xf32> to vector<16x16x32xf32>
    %11 = arith.mulf %7, %10 : vector<16x16x32xf32>
    %12 = vector.extract_strided_slice %5 {offsets = [0, 8, 0], sizes = [16, 16, 32], strides = [1, 1, 1]} : vector<18x32x32xf32> to vector<16x16x32xf32>
    %13 = vector.extract_strided_slice %6 {offsets = [1, 0], sizes = [1, 32], strides = [1, 1]} : vector<9x32xf32> to vector<1x32xf32>
    %14 = vector.shape_cast %13 : vector<1x32xf32> to vector<1x1x32xf32>
    %15 = vector.broadcast %14 : vector<1x1x32xf32> to vector<16x16x32xf32>
    %16 = arith.mulf %12, %15 : vector<16x16x32xf32>
    %17 = arith.addf %11, %16 : vector<16x16x32xf32>
    %18 = vector.extract_strided_slice %5 {offsets = [0, 9, 0], sizes = [16, 16, 32], strides = [1, 1, 1]} : vector<18x32x32xf32> to vector<16x16x32xf32>
    %19 = vector.extract_strided_slice %6 {offsets = [2, 0], sizes = [1, 32], strides = [1, 1]} : vector<9x32xf32> to vector<1x32xf32>
    %20 = vector.shape_cast %19 : vector<1x32xf32> to vector<1x1x32xf32>
    %21 = vector.broadcast %20 : vector<1x1x32xf32> to vector<16x16x32xf32>
    %22 = arith.mulf %18, %21 : vector<16x16x32xf32>
    %23 = arith.addf %17, %22 : vector<16x16x32xf32>
    %24 = vector.extract_strided_slice %5 {offsets = [1, 7, 0], sizes = [16, 16, 32], strides = [1, 1, 1]} : vector<18x32x32xf32> to vector<16x16x32xf32>
    %25 = vector.extract_strided_slice %6 {offsets = [3, 0], sizes = [1, 32], strides = [1, 1]} : vector<9x32xf32> to vector<1x32xf32>
    %26 = vector.shape_cast %25 : vector<1x32xf32> to vector<1x1x32xf32>
    %27 = vector.broadcast %26 : vector<1x1x32xf32> to vector<16x16x32xf32>
    %28 = arith.mulf %24, %27 : vector<16x16x32xf32>
    %29 = arith.addf %23, %28 : vector<16x16x32xf32>
    %30 = vector.extract_strided_slice %5 {offsets = [1, 8, 0], sizes = [16, 16, 32], strides = [1, 1, 1]} : vector<18x32x32xf32> to vector<16x16x32xf32>
    %31 = vector.extract_strided_slice %6 {offsets = [4, 0], sizes = [1, 32], strides = [1, 1]} : vector<9x32xf32> to vector<1x32xf32>
    %32 = vector.shape_cast %31 : vector<1x32xf32> to vector<1x1x32xf32>
    %33 = vector.broadcast %32 : vector<1x1x32xf32> to vector<16x16x32xf32>
    %34 = arith.mulf %30, %33 : vector<16x16x32xf32>
    %35 = arith.addf %29, %34 : vector<16x16x32xf32>
    %36 = vector.extract_strided_slice %5 {offsets = [1, 9, 0], sizes = [16, 16, 32], strides = [1, 1, 1]} : vector<18x32x32xf32> to vector<16x16x32xf32>
    %37 = vector.extract_strided_slice %6 {offsets = [5, 0], sizes = [1, 32], strides = [1, 1]} : vector<9x32xf32> to vector<1x32xf32>
    %38 = vector.shape_cast %37 : vector<1x32xf32> to vector<1x1x32xf32>
    %39 = vector.broadcast %38 : vector<1x1x32xf32> to vector<16x16x32xf32>
    %40 = arith.mulf %36, %39 : vector<16x16x32xf32>
    %41 = arith.addf %35, %40 : vector<16x16x32xf32>
    %42 = vector.extract_strided_slice %5 {offsets = [2, 7, 0], sizes = [16, 16, 32], strides = [1, 1, 1]} : vector<18x32x32xf32> to vector<16x16x32xf32>
    %43 = vector.extract_strided_slice %6 {offsets = [6, 0], sizes = [1, 32], strides = [1, 1]} : vector<9x32xf32> to vector<1x32xf32>
    %44 = vector.shape_cast %43 : vector<1x32xf32> to vector<1x1x32xf32>
    %45 = vector.broadcast %44 : vector<1x1x32xf32> to vector<16x16x32xf32>
    %46 = arith.mulf %42, %45 : vector<16x16x32xf32>
    %47 = arith.addf %41, %46 : vector<16x16x32xf32>
    %48 = vector.extract_strided_slice %5 {offsets = [2, 8, 0], sizes = [16, 16, 32], strides = [1, 1, 1]} : vector<18x32x32xf32> to vector<16x16x32xf32>
    %49 = vector.extract_strided_slice %6 {offsets = [7, 0], sizes = [1, 32], strides = [1, 1]} : vector<9x32xf32> to vector<1x32xf32>
    %50 = vector.shape_cast %49 : vector<1x32xf32> to vector<1x1x32xf32>
    %51 = vector.broadcast %50 : vector<1x1x32xf32> to vector<16x16x32xf32>
    %52 = arith.mulf %48, %51 : vector<16x16x32xf32>
    %53 = arith.addf %47, %52 : vector<16x16x32xf32>
    %54 = vector.extract_strided_slice %5 {offsets = [2, 9, 0], sizes = [16, 16, 32], strides = [1, 1, 1]} : vector<18x32x32xf32> to vector<16x16x32xf32>
    %55 = vector.extract_strided_slice %6 {offsets = [8, 0], sizes = [1, 32], strides = [1, 1]} : vector<9x32xf32> to vector<1x32xf32>
    %56 = vector.shape_cast %55 : vector<1x32xf32> to vector<1x1x32xf32>
    %57 = vector.broadcast %56 : vector<1x1x32xf32> to vector<16x16x32xf32>
    %58 = arith.mulf %54, %57 : vector<16x16x32xf32>
    %59 = arith.addf %53, %58 : vector<16x16x32xf32>
    %c0_12 = arith.constant 0 : index
    %c0_13 = arith.constant 0 : index
    %60 = vector.load %arg3[%c0_12, %c0_13] : memref<1x32xf32, #tpu.memory_space<vmem>>, vector<1x32xf32>
    %61 = vector.shape_cast %60 : vector<1x32xf32> to vector<1x1x32xf32>
    %62 = vector.broadcast %61 : vector<1x1x32xf32> to vector<16x16x32xf32>
    %63 = arith.addf %59, %62 : vector<16x16x32xf32>
    %64 = arith.addf %3, %63 : vector<16x16x32xf32>
    %65 = vector.shape_cast %64 : vector<16x16x32xf32> to vector<256x32xf32>
    %66 = arith.truncf %65 : vector<256x32xf32> to vector<256x32xbf16>
    %c0_14 = arith.constant 0 : index
    %c0_15 = arith.constant 0 : index
    %67 = vector.load %arg4[%c0_14, %c0_15] : memref<32x32xbf16, #tpu.memory_space<vmem>>, vector<32x32xbf16>
    %cst_16 = arith.constant dense<0.000000e+00> : vector<256x32xf32>
    %68 = tpu.matmul %66, %67, %cst_16 {dimension_numbers = #tpu.dot_dimension_numbers<[1], [0], [0], [1], [0, 0, 1, 1], [], []>} : vector<256x32xbf16>, vector<32x32xbf16>, vector<256x32xf32> -> vector<256x32xf32>
    %c0_17 = arith.constant 0 : index
    %c0_18 = arith.constant 0 : index
    %69 = vector.load %arg5[%c0_17, %c0_18] : memref<1x32xf32, #tpu.memory_space<vmem>>, vector<1x32xf32>
    %70 = vector.broadcast %69 : vector<1x32xf32> to vector<256x32xf32>
    %71 = arith.addf %68, %70 : vector<256x32xf32>
    %72 = vector.shape_cast %71 : vector<256x32xf32> to vector<16x16x32xf32>
    %c1_19 = arith.constant 1 : index
    %c8_20 = arith.constant 8 : index
    %c0_21 = arith.constant 0 : index
    %73 = vector.load %arg13[%c1_19, %c8_20, %c0_21] : memref<18x32x32xf32, #tpu.memory_space<vmem>>, vector<16x16x32xf32>
    tpu.vector_store %arg13[%c1_19, %c8_20, %c0_21], %72 {strides = array<i32>} : memref<18x32x32xf32, #tpu.memory_space<vmem>>, vector<16x16x32xf32>,
    %c0_22 = arith.constant 0 : index
    %c0_23 = arith.constant 0 : index
    %c0_24 = arith.constant 0 : index
    %74 = vector.load %arg13[%c0_22, %c0_23, %c0_24] : memref<18x32x32xf32, #tpu.memory_space<vmem>>, vector<18x32x32xf32>
    %c0_25 = arith.constant 0 : index
    %c0_26 = arith.constant 0 : index
    %75 = vector.load %arg6[%c0_25, %c0_26] : memref<9x32xf32, #tpu.memory_space<vmem>>, vector<9x32xf32>
    %76 = vector.extract_strided_slice %74 {offsets = [0, 7, 0], sizes = [16, 16, 32], strides = [1, 1, 1]} : vector<18x32x32xf32> to vector<16x16x32xf32>
    %77 = vector.extract_strided_slice %75 {offsets = [0, 0], sizes = [1, 32], strides = [1, 1]} : vector<9x32xf32> to vector<1x32xf32>
    %78 = vector.shape_cast %77 : vector<1x32xf32> to vector<1x1x32xf32>
    %79 = vector.broadcast %78 : vector<1x1x32xf32> to vector<16x16x32xf32>
    %80 = arith.mulf %76, %79 : vector<16x16x32xf32>
    %81 = vector.extract_strided_slice %74 {offsets = [0, 8, 0], sizes = [16, 16, 32], strides = [1, 1, 1]} : vector<18x32x32xf32> to vector<16x16x32xf32>
    %82 = vector.extract_strided_slice %75 {offsets = [1, 0], sizes = [1, 32], strides = [1, 1]} : vector<9x32xf32> to vector<1x32xf32>
    %83 = vector.shape_cast %82 : vector<1x32xf32> to vector<1x1x32xf32>
    %84 = vector.broadcast %83 : vector<1x1x32xf32> to vector<16x16x32xf32>
    %85 = arith.mulf %81, %84 : vector<16x16x32xf32>
    %86 = arith.addf %80, %85 : vector<16x16x32xf32>
    %87 = vector.extract_strided_slice %74 {offsets = [0, 9, 0], sizes = [16, 16, 32], strides = [1, 1, 1]} : vector<18x32x32xf32> to vector<16x16x32xf32>
    %88 = vector.extract_strided_slice %75 {offsets = [2, 0], sizes = [1, 32], strides = [1, 1]} : vector<9x32xf32> to vector<1x32xf32>
    %89 = vector.shape_cast %88 : vector<1x32xf32> to vector<1x1x32xf32>
    %90 = vector.broadcast %89 : vector<1x1x32xf32> to vector<16x16x32xf32>
    %91 = arith.mulf %87, %90 : vector<16x16x32xf32>
    %92 = arith.addf %86, %91 : vector<16x16x32xf32>
    %93 = vector.extract_strided_slice %74 {offsets = [1, 7, 0], sizes = [16, 16, 32], strides = [1, 1, 1]} : vector<18x32x32xf32> to vector<16x16x32xf32>
    %94 = vector.extract_strided_slice %75 {offsets = [3, 0], sizes = [1, 32], strides = [1, 1]} : vector<9x32xf32> to vector<1x32xf32>
    %95 = vector.shape_cast %94 : vector<1x32xf32> to vector<1x1x32xf32>
    %96 = vector.broadcast %95 : vector<1x1x32xf32> to vector<16x16x32xf32>
    %97 = arith.mulf %93, %96 : vector<16x16x32xf32>
    %98 = arith.addf %92, %97 : vector<16x16x32xf32>
    %99 = vector.extract_strided_slice %74 {offsets = [1, 8, 0], sizes = [16, 16, 32], strides = [1, 1, 1]} : vector<18x32x32xf32> to vector<16x16x32xf32>
    %100 = vector.extract_strided_slice %75 {offsets = [4, 0], sizes = [1, 32], strides = [1, 1]} : vector<9x32xf32> to vector<1x32xf32>
    %101 = vector.shape_cast %100 : vector<1x32xf32> to vector<1x1x32xf32>
    %102 = vector.broadcast %101 : vector<1x1x32xf32> to vector<16x16x32xf32>
    %103 = arith.mulf %99, %102 : vector<16x16x32xf32>
    %104 = arith.addf %98, %103 : vector<16x16x32xf32>
    %105 = vector.extract_strided_slice %74 {offsets = [1, 9, 0], sizes = [16, 16, 32], strides = [1, 1, 1]} : vector<18x32x32xf32> to vector<16x16x32xf32>
    %106 = vector.extract_strided_slice %75 {offsets = [5, 0], sizes = [1, 32], strides = [1, 1]} : vector<9x32xf32> to vector<1x32xf32>
    %107 = vector.shape_cast %106 : vector<1x32xf32> to vector<1x1x32xf32>
    %108 = vector.broadcast %107 : vector<1x1x32xf32> to vector<16x16x32xf32>
    %109 = arith.mulf %105, %108 : vector<16x16x32xf32>
    %110 = arith.addf %104, %109 : vector<16x16x32xf32>
    %111 = vector.extract_strided_slice %74 {offsets = [2, 7, 0], sizes = [16, 16, 32], strides = [1, 1, 1]} : vector<18x32x32xf32> to vector<16x16x32xf32>
    %112 = vector.extract_strided_slice %75 {offsets = [6, 0], sizes = [1, 32], strides = [1, 1]} : vector<9x32xf32> to vector<1x32xf32>
    %113 = vector.shape_cast %112 : vector<1x32xf32> to vector<1x1x32xf32>
    %114 = vector.broadcast %113 : vector<1x1x32xf32> to vector<16x16x32xf32>
    %115 = arith.mulf %111, %114 : vector<16x16x32xf32>
    %116 = arith.addf %110, %115 : vector<16x16x32xf32>
    %117 = vector.extract_strided_slice %74 {offsets = [2, 8, 0], sizes = [16, 16, 32], strides = [1, 1, 1]} : vector<18x32x32xf32> to vector<16x16x32xf32>
    %118 = vector.extract_strided_slice %75 {offsets = [7, 0], sizes = [1, 32], strides = [1, 1]} : vector<9x32xf32> to vector<1x32xf32>
    %119 = vector.shape_cast %118 : vector<1x32xf32> to vector<1x1x32xf32>
    %120 = vector.broadcast %119 : vector<1x1x32xf32> to vector<16x16x32xf32>
    %121 = arith.mulf %117, %120 : vector<16x16x32xf32>
    %122 = arith.addf %116, %121 : vector<16x16x32xf32>
    %123 = vector.extract_strided_slice %74 {offsets = [2, 9, 0], sizes = [16, 16, 32], strides = [1, 1, 1]} : vector<18x32x32xf32> to vector<16x16x32xf32>
    %124 = vector.extract_strided_slice %75 {offsets = [8, 0], sizes = [1, 32], strides = [1, 1]} : vector<9x32xf32> to vector<1x32xf32>
    %125 = vector.shape_cast %124 : vector<1x32xf32> to vector<1x1x32xf32>
    %126 = vector.broadcast %125 : vector<1x1x32xf32> to vector<16x16x32xf32>
    %127 = arith.mulf %123, %126 : vector<16x16x32xf32>
    %128 = arith.addf %122, %127 : vector<16x16x32xf32>
    %c0_27 = arith.constant 0 : index
    %c0_28 = arith.constant 0 : index
    %129 = vector.load %arg7[%c0_27, %c0_28] : memref<1x32xf32, #tpu.memory_space<vmem>>, vector<1x32xf32>
    %130 = vector.shape_cast %129 : vector<1x32xf32> to vector<1x1x32xf32>
    %131 = vector.broadcast %130 : vector<1x1x32xf32> to vector<16x16x32xf32>
    %132 = arith.addf %128, %131 : vector<16x16x32xf32>
    %133 = arith.addf %64, %132 : vector<16x16x32xf32>
    %134 = vector.shape_cast %133 : vector<16x16x32xf32> to vector<256x32xf32>
    %135 = arith.truncf %134 : vector<256x32xf32> to vector<256x32xbf16>
    %c0_29 = arith.constant 0 : index
    %c0_30 = arith.constant 0 : index
    %136 = vector.load %arg8[%c0_29, %c0_30] : memref<32x32xbf16, #tpu.memory_space<vmem>>, vector<32x32xbf16>
    %cst_31 = arith.constant dense<0.000000e+00> : vector<256x32xf32>
    %137 = tpu.matmul %135, %136, %cst_31 {dimension_numbers = #tpu.dot_dimension_numbers<[1], [0], [0], [1], [0, 0, 1, 1], [], []>} : vector<256x32xbf16>, vector<32x32xbf16>, vector<256x32xf32> -> vector<256x32xf32>
    %c0_32 = arith.constant 0 : index
    %c0_33 = arith.constant 0 : index
    %138 = vector.load %arg9[%c0_32, %c0_33] : memref<1x32xf32, #tpu.memory_space<vmem>>, vector<1x32xf32>
    %139 = vector.broadcast %138 : vector<1x32xf32> to vector<256x32xf32>
    %140 = arith.addf %137, %139 : vector<256x32xf32>
    %141 = arith.mulf %140, %140 : vector<256x32xf32>
    %142 = arith.mulf %140, %141 : vector<256x32xf32>
    %cst_34 = arith.constant 4.471500e-02 : f32
    %143 = vector.broadcast %cst_34 : f32 to vector<256x32xf32>
    %144 = arith.mulf %143, %142 : vector<256x32xf32>
    %145 = arith.addf %140, %144 : vector<256x32xf32>
    %cst_35 = arith.constant 0.797884583 : f32
    %146 = vector.broadcast %cst_35 : f32 to vector<256x32xf32>
    %147 = arith.mulf %146, %145 : vector<256x32xf32>
    %148 = math.tanh %147 : vector<256x32xf32>
    %cst_36 = arith.constant 1.000000e+00 : f32
    %149 = vector.broadcast %cst_36 : f32 to vector<256x32xf32>
    %150 = arith.addf %149, %148 : vector<256x32xf32>
    %cst_37 = arith.constant 5.000000e-01 : f32
    %151 = vector.broadcast %cst_37 : f32 to vector<256x32xf32>
    %152 = arith.mulf %151, %150 : vector<256x32xf32>
    %153 = arith.mulf %140, %152 : vector<256x32xf32>
    %154 = arith.truncf %153 : vector<256x32xf32> to vector<256x32xbf16>
    %c0_38 = arith.constant 0 : index
    %c0_39 = arith.constant 0 : index
    %155 = vector.load %arg10[%c0_38, %c0_39] : memref<32x32xbf16, #tpu.memory_space<vmem>>, vector<32x32xbf16>
    %cst_40 = arith.constant dense<0.000000e+00> : vector<256x32xf32>
    %156 = tpu.matmul %154, %155, %cst_40 {dimension_numbers = #tpu.dot_dimension_numbers<[1], [0], [0], [1], [0, 0, 1, 1], [], []>} : vector<256x32xbf16>, vector<32x32xbf16>, vector<256x32xf32> -> vector<256x32xf32>
    %c0_41 = arith.constant 0 : index
    %c0_42 = arith.constant 0 : index
    %157 = vector.load %arg11[%c0_41, %c0_42] : memref<1x32xf32, #tpu.memory_space<vmem>>, vector<1x32xf32>
    %158 = vector.broadcast %157 : vector<1x32xf32> to vector<256x32xf32>
    %159 = arith.addf %156, %158 : vector<256x32xf32>
    %160 = vector.shape_cast %159 : vector<256x32xf32> to vector<16x16x32xf32>
    %161 = arith.addf %133, %160 : vector<16x16x32xf32>
    %c0_43 = arith.constant 0 : index
    %c0_44 = arith.constant 0 : index
    %c0_45 = arith.constant 0 : index
    %c0_46 = arith.constant 0 : index
    %162 = vector.load %arg12[%c0_43, %c0_44, %c0_45, %c0_46] : memref<1x16x16x32xf32, #tpu.memory_space<vmem>>, vector<1x16x16x32xf32>
    %163 = vector.shape_cast %162 : vector<1x16x16x32xf32> to vector<16x16x32xf32>
    %164 = vector.shape_cast %161 : vector<16x16x32xf32> to vector<1x16x16x32xf32>
    tpu.vector_store %arg12[%c0_43, %c0_44, %c0_45, %c0_46], %164 {strides = array<i32>} : memref<1x16x16x32xf32, #tpu.memory_space<vmem>>, vector<1x16x16x32xf32>,
    return
  }
  func.func @transform_0(%arg0: i32) -> (i32, i32, i32, i32) {
    %c0_i32 = arith.constant 0 : i32
    %c0_i32_0 = arith.constant 0 : i32
    %c0_i32_1 = arith.constant 0 : i32
    %c0_i32_2 = arith.constant 0 : i32
    return %arg0, %c0_i32, %c0_i32_0, %c0_i32_1 : i32, i32, i32, i32
  }
  func.func @transform_1(%arg0: i32) -> (i32, i32) {
    %c0_i32 = arith.constant 0 : i32
    %c0_i32_0 = arith.constant 0 : i32
    %c0_i32_1 = arith.constant 0 : i32
    return %c0_i32, %c0_i32_0 : i32, i32
  }
  func.func @transform_2(%arg0: i32) -> (i32, i32) {
    %c0_i32 = arith.constant 0 : i32
    %c0_i32_0 = arith.constant 0 : i32
    %c0_i32_1 = arith.constant 0 : i32
    return %c0_i32, %c0_i32_0 : i32, i32
  }
  func.func @transform_3(%arg0: i32) -> (i32, i32) {
    %c0_i32 = arith.constant 0 : i32
    %c0_i32_0 = arith.constant 0 : i32
    %c0_i32_1 = arith.constant 0 : i32
    return %c0_i32, %c0_i32_0 : i32, i32
  }
  func.func @transform_4(%arg0: i32) -> (i32, i32) {
    %c0_i32 = arith.constant 0 : i32
    %c0_i32_0 = arith.constant 0 : i32
    %c0_i32_1 = arith.constant 0 : i32
    return %c0_i32, %c0_i32_0 : i32, i32
  }
  func.func @transform_5(%arg0: i32) -> (i32, i32) {
    %c0_i32 = arith.constant 0 : i32
    %c0_i32_0 = arith.constant 0 : i32
    %c0_i32_1 = arith.constant 0 : i32
    return %c0_i32, %c0_i32_0 : i32, i32
  }
  func.func @transform_6(%arg0: i32) -> (i32, i32) {
    %c0_i32 = arith.constant 0 : i32
    %c0_i32_0 = arith.constant 0 : i32
    %c0_i32_1 = arith.constant 0 : i32
    return %c0_i32, %c0_i32_0 : i32, i32
  }
  func.func @transform_7(%arg0: i32) -> (i32, i32) {
    %c0_i32 = arith.constant 0 : i32
    %c0_i32_0 = arith.constant 0 : i32
    %c0_i32_1 = arith.constant 0 : i32
    return %c0_i32, %c0_i32_0 : i32, i32
  }
  func.func @transform_8(%arg0: i32) -> (i32, i32) {
    %c0_i32 = arith.constant 0 : i32
    %c0_i32_0 = arith.constant 0 : i32
    %c0_i32_1 = arith.constant 0 : i32
    return %c0_i32, %c0_i32_0 : i32, i32
  }
  func.func @transform_9(%arg0: i32) -> (i32, i32) {
    %c0_i32 = arith.constant 0 : i32
    %c0_i32_0 = arith.constant 0 : i32
    %c0_i32_1 = arith.constant 0 : i32
    return %c0_i32, %c0_i32_0 : i32, i32
  }
  func.func @transform_10(%arg0: i32) -> (i32, i32) {
    %c0_i32 = arith.constant 0 : i32
    %c0_i32_0 = arith.constant 0 : i32
    %c0_i32_1 = arith.constant 0 : i32
    return %c0_i32, %c0_i32_0 : i32, i32
  }
  func.func @transform_11(%arg0: i32) -> (i32, i32, i32, i32) {
    %c0_i32 = arith.constant 0 : i32
    %c0_i32_0 = arith.constant 0 : i32
    %c0_i32_1 = arith.constant 0 : i32
    %c0_i32_2 = arith.constant 0 : i32
    return %arg0, %c0_i32, %c0_i32_0, %c0_i32_1 : i32, i32, i32, i32
  }
}

</mosaic_0001>

<llo_original>
// kernel: tpu_custom_call.1
$region0: #{tpu_custom_call.1}
  #allocation0 [shape = 'u32[]', space=smem, size = 0x4, offset = 0x4, fixed_abs, tag = 'smem constant byte address 0x4 - core index']
  #allocation1 [shape = 'u32[144,128]{1,0:T(1,128)}', space=vmem, size = 0x12000, scoped, tag = 'internal scratch']
  #allocation2 [shape = 'f32[18,32,32]{2,1,0:T(8,128)}', space=vmem, size = 0x48000, scoped, tag = 'scratch operand']
  %s0 = inlined_call_operand.hbm [shape: f32[2,16,16,32], index: 0, kind: input, shape index: {}]
  %s1 = inlined_call_operand.hbm [shape: f32[9,32], index: 1, kind: input, shape index: {}]
  %s2 = inlined_call_operand.vmem [shape: f32[1,32], index: 2, kind: input, shape index: {}]
  %s3 = inlined_call_operand.hbm [shape: bf16[32,32], index: 3, kind: input, shape index: {}]
  %s4 = inlined_call_operand.vmem [shape: f32[1,32], index: 4, kind: input, shape index: {}]
  %s5 = inlined_call_operand.vmem [shape: f32[9,32], index: 5, kind: input, shape index: {}]
  %s6 = inlined_call_operand.hbm [shape: f32[1,32], index: 6, kind: input, shape index: {}]
  %s7 = inlined_call_operand.hbm [shape: bf16[32,32], index: 7, kind: input, shape index: {}]
  %s8 = inlined_call_operand.hbm [shape: f32[1,32], index: 8, kind: input, shape index: {}]
  %s9 = inlined_call_operand.vmem [shape: bf16[32,32], index: 9, kind: input, shape index: {}]
  %s10 = inlined_call_operand.vmem [shape: f32[1,32], index: 10, kind: input, shape index: {}]
  %s11 = inlined_call_operand.hbm [shape: f32[2,16,16,32], index: 11, kind: output, shape index: {}]
  %s12 = sld [smem:[#allocation0]]
  $region101: #{tpu_custom_call.1} parent=0
    _
  %s14 = ssub.s32 1, %s12
  %s15 = scalar_select 0, %s14, %s12
  $region1: #{tpu_custom_call.1} parent=0
    #allocation3 [shape = 'u8[262144]{0}', space=vmem, size = 0x40000, scoped, tag = 'input window, operand 0']
    #allocation4 [shape = 's32[2]{0}', space=sflag, size = 0x8, scoped, tag = 'scoped memory for tpu_custom_call.1']
    #allocation5 [shape = 's32[2]{0}', space=sflag, size = 0x8, scoped, tag = 'scoped memory for tpu_custom_call.1']
    #allocation6 [shape = 'u8[8192]{0}', space=vmem, size = 0x2000, scoped, tag = 'input window, operand 1, single buffered']
    #allocation7 [shape = 's32[1]{0}', space=sflag, size = 0x4, scoped, tag = 'scoped memory for tpu_custom_call.1']
    #allocation8 [shape = 'u8[8192]{0}', space=vmem, size = 0x2000, scoped, tag = 'input window, operand 3, single buffered']
    #allocation9 [shape = 'u8[512]{0}', space=vmem, size = 0x400, scoped, tag = 'input window, operand 6, single buffered']
    #allocation10 [shape = 's32[1]{0}', space=sflag, size = 0x4, scoped, tag = 'scoped memory for tpu_custom_call.1']
    #allocation11 [shape = 'u8[8192]{0}', space=vmem, size = 0x2000, scoped, tag = 'input window, operand 7, single buffered']
    #allocation12 [shape = 'u8[512]{0}', space=vmem, size = 0x400, scoped, tag = 'input window, operand 8, single buffered']
    #allocation13 [shape = 's32[1]{0}', space=sflag, size = 0x4, scoped, tag = 'scoped memory for tpu_custom_call.1']
    #allocation14 [shape = 'u8[262144]{0}', space=vmem, size = 0x40000, scoped, tag = 'output window, operand 0']
    %16 = vsyncpa [#allocation4], 0
    %s17 = scalar_lea.sflag [#allocation4], 1
    %18 = vsyncpa %s17, 0
    %19 = vsyncpa [#allocation7], 0
    %20 = vsyncpa [#allocation10], 0
    %21 = vsyncpa [#allocation13], 0
    %22 = vsyncpa [#allocation5], 0
    %s23 = scalar_lea.sflag [#allocation5], 1
    %24 = vsyncpa %s23, 0
    loop: start=0, step=1, limit=4
    $region2: #{tpu_custom_call.1} parent=1 // loop_pre_header
      _
    $region3: #{tpu_custom_call.1} parent=1 // loop_header
      %s26 = sphi 0, %s30
      %p27 = scmp.ge.s32.totalorder %s26, 4
      %s36 = sphi 0, %s38
      %s39 = sphi 0, %s36
      %s40 = sphi 0, %s39
      %s56 = sphi 0, %s40
      %s60 = sphi 0, %s60
      %s62 = sphi 0, %s60
      %s63 = sphi 0, %s62
      %s77 = sphi 0, %s63
      %s81 = sphi 0, %s81
      %s83 = sphi 0, %s81
      %s84 = sphi 0, %s83
      %s98 = sphi 0, %s84
      %s102 = sphi 0, %s102
      %s104 = sphi 0, %s102
      %s105 = sphi 0, %s104
      %s119 = sphi 0, %s105
      %s123 = sphi 0, %s123
      %s125 = sphi 0, %s123
      %s126 = sphi 0, %s125
      %s140 = sphi 0, %s126
      %s144 = sphi 0, %s144
      %s146 = sphi 0, %s144
      %s147 = sphi 0, %s146
      %s161 = sphi 0, %s147
      %s165 = sphi 0, %s165
      %s167 = sphi 0, %s165
      %s168 = sphi 0, %s167
      %s182 = sphi 0, %s168
      %s186 = sphi 0, %s186
      %s188 = sphi 0, %s186
      %s189 = sphi 0, %s188
      %s203 = sphi 0, %s189
      %s207 = sphi 0, %s207
      %s209 = sphi 0, %s207
      %s210 = sphi 0, %s209
      %s224 = sphi 0, %s210
      %s228 = sphi 0, %s228
      %s230 = sphi 0, %s228
      %s231 = sphi 0, %s230
      %s245 = sphi 0, %s231
      %s249 = sphi 0, %s249
      %s251 = sphi 0, %s249
      %s252 = sphi 0, %s251
      %s266 = sphi 0, %s252
      %s272 = sphi 0, %s274
      %s275 = sphi 0, %s272
      %s276 = sphi 0, %s275
      %s292 = sphi 0, %s276
    $region4: #{tpu_custom_call.1} parent=1 // loop_header_branch
      %29 = sbr.rel (%p27) target = $region8
    $region5: #{tpu_custom_call.1} parent=1 // loop_body
      %s31 = ssub.s32 %s26, 1
      %s32 = ssub.s32 %s26, 2
      %s33 = sadd.s32 %s26, 1
      %s34 = ssub.s32 %s26, %s33
      %p35 = scmp.eq.s32.totalorder %s34, 0
      %s37 = sadd.s32 %s36, 1
      %s38 = scalar_select %p35, %s36, %s37
      %p41 = pneg %p35
      %p42 = scmp.eq.s32.totalorder %s26, 1
      %p43 = por %p41, %p42
      %p44 = scmp.ne.s32.totalorder %s36, %s39
      %p45 = scmp.eq.s32.totalorder %s26, 0
      %p46 = por %p44, %p45
      %p47 = scmp.ne.s32.totalorder %s36, %s39
      %p48 = scmp.eq.s32.totalorder %s31, 1
      %p49 = por %p47, %p48
      %p50 = scmp.ne.s32.totalorder %s39, %s40
      %p51 = scmp.eq.s32.totalorder %s31, 0
      %p52 = por %p50, %p51
      %p53 = scmp.ne.s32.totalorder %s39, %s40
      %p54 = scmp.eq.s32.totalorder %s32, 1
      %p55 = por %p53, %p54
      %p57 = scmp.ne.s32.totalorder %s40, %s56
      %p58 = scmp.eq.s32.totalorder %s32, 0
      %p59 = por %p57, %p58
      %s61 = sadd.s32 %s60, 1
      %p64 = scmp.eq.s32.totalorder %s26, 1
      %p65 = scmp.ne.s32.totalorder %s60, %s62
      %p66 = scmp.eq.s32.totalorder %s26, 0
      %p67 = por %p65, %p66
      %p68 = scmp.ne.s32.totalorder %s60, %s62
      %p69 = scmp.eq.s32.totalorder %s31, 1
      %p70 = por %p68, %p69
      %p71 = scmp.ne.s32.totalorder %s62, %s63
      %p72 = scmp.eq.s32.totalorder %s31, 0
      %p73 = por %p71, %p72
      %p74 = scmp.ne.s32.totalorder %s62, %s63
      %p75 = scmp.eq.s32.totalorder %s32, 1
      %p76 = por %p74, %p75
      %p78 = scmp.ne.s32.totalorder %s63, %s77
      %p79 = scmp.eq.s32.totalorder %s32, 0
      %p80 = por %p78, %p79
      %s82 = sadd.s32 %s81, 1
      %p85 = scmp.eq.s32.totalorder %s26, 1
      %p86 = scmp.ne.s32.totalorder %s81, %s83
      %p87 = scmp.eq.s32.totalorder %s26, 0
      %p88 = por %p86, %p87
      %p89 = scmp.ne.s32.totalorder %s81, %s83
      %p90 = scmp.eq.s32.totalorder %s31, 1
      %p91 = por %p89, %p90
      %p92 = scmp.ne.s32.totalorder %s83, %s84
      %p93 = scmp.eq.s32.totalorder %s31, 0
      %p94 = por %p92, %p93
      %p95 = scmp.ne.s32.totalorder %s83, %s84
      %p96 = scmp.eq.s32.totalorder %s32, 1
      %p97 = por %p95, %p96
      %p99 = scmp.ne.s32.totalorder %s84, %s98
      %p100 = scmp.eq.s32.totalorder %s32, 0
      %p101 = por %p99, %p100
      %s103 = sadd.s32 %s102, 1
      %p106 = scmp.eq.s32.totalorder %s26, 1
      %p107 = scmp.ne.s32.totalorder %s102, %s104
      %p108 = scmp.eq.s32.totalorder %s26, 0
      %p109 = por %p107, %p108
      %p110 = scmp.ne.s32.totalorder %s102, %s104
      %p111 = scmp.eq.s32.totalorder %s31, 1
      %p112 = por %p110, %p111
      %p113 = scmp.ne.s32.totalorder %s104, %s105
      %p114 = scmp.eq.s32.totalorder %s31, 0
      %p115 = por %p113, %p114
      %p116 = scmp.ne.s32.totalorder %s104, %s105
      %p117 = scmp.eq.s32.totalorder %s32, 1
      %p118 = por %p116, %p117
      %p120 = scmp.ne.s32.totalorder %s105, %s119
      %p121 = scmp.eq.s32.totalorder %s32, 0
      %p122 = por %p120, %p121
      %s124 = sadd.s32 %s123, 1
      %p127 = scmp.eq.s32.totalorder %s26, 1
      %p128 = scmp.ne.s32.totalorder %s123, %s125
      %p129 = scmp.eq.s32.totalorder %s26, 0
      %p130 = por %p128, %p129
      %p131 = scmp.ne.s32.totalorder %s123, %s125
      %p132 = scmp.eq.s32.totalorder %s31, 1
      %p133 = por %p131, %p132
      %p134 = scmp.ne.s32.totalorder %s125, %s126
      %p135 = scmp.eq.s32.totalorder %s31, 0
      %p136 = por %p134, %p135
      %p137 = scmp.ne.s32.totalorder %s125, %s126
      %p138 = scmp.eq.s32.totalorder %s32, 1
      %p139 = por %p137, %p138
      %p141 = scmp.ne.s32.totalorder %s126, %s140
      %p142 = scmp.eq.s32.totalorder %s32, 0
      %p143 = por %p141, %p142
      %s145 = sadd.s32 %s144, 1
      %p148 = scmp.eq.s32.totalorder %s26, 1
      %p149 = scmp.ne.s32.totalorder %s144, %s146
      %p150 = scmp.eq.s32.totalorder %s26, 0
      %p151 = por %p149, %p150
      %p152 = scmp.ne.s32.totalorder %s144, %s146
      %p153 = scmp.eq.s32.totalorder %s31, 1
      %p154 = por %p152, %p153
      %p155 = scmp.ne.s32.totalorder %s146, %s147
      %p156 = scmp.eq.s32.totalorder %s31, 0
      %p157 = por %p155, %p156
      %p158 = scmp.ne.s32.totalorder %s146, %s147
      %p159 = scmp.eq.s32.totalorder %s32, 1
      %p160 = por %p158, %p159
      %p162 = scmp.ne.s32.totalorder %s147, %s161
      %p163 = scmp.eq.s32.totalorder %s32, 0
      %p164 = por %p162, %p163
      %s166 = sadd.s32 %s165, 1
      %p169 = scmp.eq.s32.totalorder %s26, 1
      %p170 = scmp.ne.s32.totalorder %s165, %s167
      %p171 = scmp.eq.s32.totalorder %s26, 0
      %p172 = por %p170, %p171
      %p173 = scmp.ne.s32.totalorder %s165, %s167
      %p174 = scmp.eq.s32.totalorder %s31, 1
      %p175 = por %p173, %p174
      %p176 = scmp.ne.s32.totalorder %s167, %s168
      %p177 = scmp.eq.s32.totalorder %s31, 0
      %p178 = por %p176, %p177
      %p179 = scmp.ne.s32.totalorder %s167, %s168
      %p180 = scmp.eq.s32.totalorder %s32, 1
      %p181 = por %p179, %p180
      %p183 = scmp.ne.s32.totalorder %s168, %s182
      %p184 = scmp.eq.s32.totalorder %s32, 0
      %p185 = por %p183, %p184
      %s187 = sadd.s32 %s186, 1
      %p190 = scmp.eq.s32.totalorder %s26, 1
      %p191 = scmp.ne.s32.totalorder %s186, %s188
      %p192 = scmp.eq.s32.totalorder %s26, 0
      %p193 = por %p191, %p192
      %p194 = scmp.ne.s32.totalorder %s186, %s188
      %p195 = scmp.eq.s32.totalorder %s31, 1
      %p196 = por %p194, %p195
      %p197 = scmp.ne.s32.totalorder %s188, %s189
      %p198 = scmp.eq.s32.totalorder %s31, 0
      %p199 = por %p197, %p198
      %p200 = scmp.ne.s32.totalorder %s188, %s189
      %p201 = scmp.eq.s32.totalorder %s32, 1
      %p202 = por %p200, %p201
      %p204 = scmp.ne.s32.totalorder %s189, %s203
      %p205 = scmp.eq.s32.totalorder %s32, 0
      %p206 = por %p204, %p205
      %s208 = sadd.s32 %s207, 1
      %p211 = scmp.eq.s32.totalorder %s26, 1
      %p212 = scmp.ne.s32.totalorder %s207, %s209
      %p213 = scmp.eq.s32.totalorder %s26, 0
      %p214 = por %p212, %p213
      %p215 = scmp.ne.s32.totalorder %s207, %s209
      %p216 = scmp.eq.s32.totalorder %s31, 1
      %p217 = por %p215, %p216
      %p218 = scmp.ne.s32.totalorder %s209, %s210
      %p219 = scmp.eq.s32.totalorder %s31, 0
      %p220 = por %p218, %p219
      %p221 = scmp.ne.s32.totalorder %s209, %s210
      %p222 = scmp.eq.s32.totalorder %s32, 1
      %p223 = por %p221, %p222
      %p225 = scmp.ne.s32.totalorder %s210, %s224
      %p226 = scmp.eq.s32.totalorder %s32, 0
      %p227 = por %p225, %p226
      %s229 = sadd.s32 %s228, 1
      %p232 = scmp.eq.s32.totalorder %s26, 1
      %p233 = scmp.ne.s32.totalorder %s228, %s230
      %p234 = scmp.eq.s32.totalorder %s26, 0
      %p235 = por %p233, %p234
      %p236 = scmp.ne.s32.totalorder %s228, %s230
      %p237 = scmp.eq.s32.totalorder %s31, 1
      %p238 = por %p236, %p237
      %p239 = scmp.ne.s32.totalorder %s230, %s231
      %p240 = scmp.eq.s32.totalorder %s31, 0
      %p241 = por %p239, %p240
      %p242 = scmp.ne.s32.totalorder %s230, %s231
      %p243 = scmp.eq.s32.totalorder %s32, 1
      %p244 = por %p242, %p243
      %p246 = scmp.ne.s32.totalorder %s231, %s245
      %p247 = scmp.eq.s32.totalorder %s32, 0
      %p248 = por %p246, %p247
      %s250 = sadd.s32 %s249, 1
      %p253 = scmp.eq.s32.totalorder %s26, 1
      %p254 = scmp.ne.s32.totalorder %s249, %s251
      %p255 = scmp.eq.s32.totalorder %s26, 0
      %p256 = por %p254, %p255
      %p257 = scmp.ne.s32.totalorder %s249, %s251
      %p258 = scmp.eq.s32.totalorder %s31, 1
      %p259 = por %p257, %p258
      %p260 = scmp.ne.s32.totalorder %s251, %s252
      %p261 = scmp.eq.s32.totalorder %s31, 0
      %p262 = por %p260, %p261
      %p263 = scmp.ne.s32.totalorder %s251, %s252
      %p264 = scmp.eq.s32.totalorder %s32, 1
      %p265 = por %p263, %p264
      %p267 = scmp.ne.s32.totalorder %s252, %s266
      %p268 = scmp.eq.s32.totalorder %s32, 0
      %p269 = por %p267, %p268
      %s270 = ssub.s32 %s26, %s33
      %p271 = scmp.eq.s32.totalorder %s270, 0
      %s273 = sadd.s32 %s272, 1
      %s274 = scalar_select %p271, %s272, %s273
      %p277 = pneg %p271
      %p278 = scmp.eq.s32.totalorder %s26, 1
      %p279 = por %p277, %p278
      %p280 = scmp.ne.s32.totalorder %s272, %s275
      %p281 = scmp.eq.s32.totalorder %s26, 0
      %p282 = por %p280, %p281
      %p283 = scmp.ne.s32.totalorder %s272, %s275
      %p284 = scmp.eq.s32.totalorder %s31, 1
      %p285 = por %p283, %p284
      %p286 = scmp.ne.s32.totalorder %s275, %s276
      %p287 = scmp.eq.s32.totalorder %s31, 0
      %p288 = por %p286, %p287
      %p289 = scmp.ne.s32.totalorder %s275, %s276
      %p290 = scmp.eq.s32.totalorder %s32, 1
      %p291 = por %p289, %p290
      %p293 = scmp.ne.s32.totalorder %s276, %s292
      %p294 = scmp.eq.s32.totalorder %s32, 0
      %p295 = por %p293, %p294
      %p296 = scmp.le.s32.totalorder 1, %s26
      %p297 = scmp.lt.s32.totalorder %s26, 3
      %p298 = pnand %p296, %p297
      %p299 = pneg %p298
      // Predicated region
      $region9: #{tpu_custom_call.1} parent=5 // pred_check
        _
      $region10: #{tpu_custom_call.1} parent=5 // pred_check_branch
        %301 = sbr.rel (%p298) target = $region12
      $region11: #{tpu_custom_call.1} parent=5 // pred_region
        %s302 = ssub.s32 %s26, 1
        // Predicated region
        $region13: #{tpu_custom_call.1} parent=11 // pred_check
          %p303 = pneg %p73
        $region14: #{tpu_custom_call.1} parent=11 // pred_check_branch
          %305 = sbr.rel (%p303) target = $region16
        $region15: #{tpu_custom_call.1} parent=11 // pred_region
          %s307 = ssub.s32 256, 256
          %308 = vsyncadd [#allocation7], %s307
          %s309 = sshll.u32 [#allocation6], 4
          %s310 = int_to_ptr.vmem [resolvable:$true] %s309
          %315 = dma.hbm_to_vmem [thread:$0]  %s1, 256, %s310, [#allocation7], 128, 128, 8
        $region16: #{tpu_custom_call.1} parent=11 // pred_fallthru
          _
        // Predicated region
        $region17: #{tpu_custom_call.1} parent=11 // pred_check
          %p316 = pneg %p94
        $region18: #{tpu_custom_call.1} parent=11 // pred_check_branch
          %318 = sbr.rel (%p316) target = $region20
        $region19: #{tpu_custom_call.1} parent=11 // pred_region
          _
        $region20: #{tpu_custom_call.1} parent=11 // pred_fallthru
          _
        // Predicated region
        $region21: #{tpu_custom_call.1} parent=11 // pred_check
          %p319 = pneg %p115
        $region22: #{tpu_custom_call.1} parent=11 // pred_check_branch
          %321 = sbr.rel (%p319) target = $region24
        $region23: #{tpu_custom_call.1} parent=11 // pred_region
          %s323 = ssub.s32 256, 256
          %324 = vsyncadd [#allocation7], %s323
          %s325 = sshll.u32 [#allocation8], 4
          %s326 = int_to_ptr.vmem [resolvable:$true] %s325
          %331 = dma.hbm_to_vmem [thread:$0]  %s3, 256, %s326, [#allocation7], 64, 64, 4
        $region24: #{tpu_custom_call.1} parent=11 // pred_fallthru
          _
        // Predicated region
        $region25: #{tpu_custom_call.1} parent=11 // pred_check
          %p332 = pneg %p136
        $region26: #{tpu_custom_call.1} parent=11 // pred_check_branch
          %334 = sbr.rel (%p332) target = $region28
        $region27: #{tpu_custom_call.1} parent=11 // pred_region
          _
        $region28: #{tpu_custom_call.1} parent=11 // pred_fallthru
          _
        // Predicated region
        $region29: #{tpu_custom_call.1} parent=11 // pred_check
          %p335 = pneg %p157
        $region30: #{tpu_custom_call.1} parent=11 // pred_check_branch
          %337 = sbr.rel (%p335) target = $region32
        $region31: #{tpu_custom_call.1} parent=11 // pred_region
          _
        $region32: #{tpu_custom_call.1} parent=11 // pred_fallthru
          _
        // Predicated region
        $region33: #{tpu_custom_call.1} parent=11 // pred_check
          %p338 = pneg %p178
        $region34: #{tpu_custom_call.1} parent=11 // pred_check_branch
          %340 = sbr.rel (%p338) target = $region36
        $region35: #{tpu_custom_call.1} parent=11 // pred_region
          %s342 = ssub.s32 16, 16
          %343 = vsyncadd [#allocation10], %s342
          %s345 = sshll.u32 [#allocation9], 4
          %s346 = int_to_ptr.vmem [resolvable:$true] %s345
          %348 = dma.hbm_to_vmem [thread:$0]  %s6, 16, %s346, [#allocation10]
        $region36: #{tpu_custom_call.1} parent=11 // pred_fallthru
          _
        // Predicated region
        $region37: #{tpu_custom_call.1} parent=11 // pred_check
          %p349 = pneg %p199
        $region38: #{tpu_custom_call.1} parent=11 // pred_check_branch
          %351 = sbr.rel (%p349) target = $region40
        $region39: #{tpu_custom_call.1} parent=11 // pred_region
          %s353 = ssub.s32 256, 256
          %354 = vsyncadd [#allocation10], %s353
          %s355 = sshll.u32 [#allocation11], 4
          %s356 = int_to_ptr.vmem [resolvable:$true] %s355
          %361 = dma.hbm_to_vmem [thread:$0]  %s7, 256, %s356, [#allocation10], 64, 64, 4
        $region40: #{tpu_custom_call.1} parent=11 // pred_fallthru
          _
        // Predicated region
        $region41: #{tpu_custom_call.1} parent=11 // pred_check
          %p362 = pneg %p220
        $region42: #{tpu_custom_call.1} parent=11 // pred_check_branch
          %364 = sbr.rel (%p362) target = $region44
        $region43: #{tpu_custom_call.1} parent=11 // pred_region
          %s366 = ssub.s32 16, 16
          %367 = vsyncadd [#allocation13], %s366
          %s369 = sshll.u32 [#allocation12], 4
          %s370 = int_to_ptr.vmem [resolvable:$true] %s369
          %372 = dma.hbm_to_vmem [thread:$0]  %s8, 16, %s370, [#allocation13]
        $region44: #{tpu_custom_call.1} parent=11 // pred_fallthru
          _
        // Predicated region
        $region45: #{tpu_custom_call.1} parent=11 // pred_check
          %p373 = pneg %p241
        $region46: #{tpu_custom_call.1} parent=11 // pred_check_branch
          %375 = sbr.rel (%p373) target = $region48
        $region47: #{tpu_custom_call.1} parent=11 // pred_region
          _
        $region48: #{tpu_custom_call.1} parent=11 // pred_fallthru
          _
        // Predicated region
        $region49: #{tpu_custom_call.1} parent=11 // pred_check
          %p376 = pneg %p262
        $region50: #{tpu_custom_call.1} parent=11 // pred_check_branch
          %378 = sbr.rel (%p376) target = $region52
        $region51: #{tpu_custom_call.1} parent=11 // pred_region
          _
        $region52: #{tpu_custom_call.1} parent=11 // pred_fallthru
          _
      $region12: #{tpu_custom_call.1} parent=5 // pred_fallthru
        _
      %p379 = scmp.lt.s32.totalorder %s26, 2
      // Predicated region
      $region53: #{tpu_custom_call.1} parent=5 // pred_check
        %p380 = pneg %p379
      $region54: #{tpu_custom_call.1} parent=5 // pred_check_branch
        %382 = sbr.rel (%p380) target = $region56
      $region55: #{tpu_custom_call.1} parent=5 // pred_region
        // Predicated region
        $region57: #{tpu_custom_call.1} parent=55 // pred_check
          %p383 = pneg %p46
        $region58: #{tpu_custom_call.1} parent=55 // pred_check_branch
          %385 = sbr.rel (%p383) target = $region60
        $region59: #{tpu_custom_call.1} parent=55 // pred_region
          %s386 = sand.u32 %s36, 1
          %s387 = scalar_lea.sflag [#allocation4], %s386
          %s388 = sand.u32 %s36, 1
          %s389 = smul.addr %s388, 256
          %s390 = scalar_lea.vmem [#allocation3], %s389
          %s392 = ssub.s32 4096, 4096
          %393 = vsyncadd %s387, %s392
          %s394 = smul.addr %s26, 32
          %s395 = smul.addr %s394, 128
          %s396 = scalar_lea.hbm %s0, %s395
          %s397 = sshll.u32 %s390, 4
          %s398 = int_to_ptr.vmem [resolvable:$true] %s397
          %403 = dma.hbm_to_vmem [thread:$0]  %s396, 4096, %s398, %s387, 128, 128, 8
        $region60: #{tpu_custom_call.1} parent=55 // pred_fallthru
          _
      $region56: #{tpu_custom_call.1} parent=5 // pred_fallthru
        _
      %p404 = scmp.le.s32.totalorder 1, %s26
      %p405 = scmp.lt.s32.totalorder %s26, 3
      %p406 = pnand %p404, %p405
      %p407 = pneg %p406
      // Predicated region
      $region61: #{tpu_custom_call.1} parent=5 // pred_check
        _
      $region62: #{tpu_custom_call.1} parent=5 // pred_check_branch
        %409 = sbr.rel (%p406) target = $region64
      $region63: #{tpu_custom_call.1} parent=5 // pred_region
        %s410 = ssub.s32 %s26, 1
        %s411 = sand.u32 %s39, 1
        %s412 = scalar_lea.sflag [#allocation4], %s411
        %s413 = sand.u32 %s39, 1
        %s414 = smul.addr %s413, 256
        %s415 = scalar_lea.vmem [#allocation3], %s414
        // Predicated region
        $region65: #{tpu_custom_call.1} parent=63 // pred_check
          %p416 = pneg %p52
        $region66: #{tpu_custom_call.1} parent=63 // pred_check_branch
          %418 = sbr.rel (%p416) target = $region68
        $region67: #{tpu_custom_call.1} parent=63 // pred_region
          %419 = dma.done %s412, 4096
        $region68: #{tpu_custom_call.1} parent=63 // pred_fallthru
          _
        // Predicated region
        $region69: #{tpu_custom_call.1} parent=63 // pred_check
          %p420 = pneg %p73
        $region70: #{tpu_custom_call.1} parent=63 // pred_check_branch
          %422 = sbr.rel (%p420) target = $region72
        $region71: #{tpu_custom_call.1} parent=63 // pred_region
          %423 = dma.done [#allocation7], 256
        $region72: #{tpu_custom_call.1} parent=63 // pred_fallthru
          _
        // Predicated region
        $region73: #{tpu_custom_call.1} parent=63 // pred_check
          %p424 = pneg %p115
        $region74: #{tpu_custom_call.1} parent=63 // pred_check_branch
          %426 = sbr.rel (%p424) target = $region76
        $region75: #{tpu_custom_call.1} parent=63 // pred_region
          %427 = dma.done [#allocation7], 256
        $region76: #{tpu_custom_call.1} parent=63 // pred_fallthru
          _
        // Predicated region
        $region77: #{tpu_custom_call.1} parent=63 // pred_check
          %p428 = pneg %p178
        $region78: #{tpu_custom_call.1} parent=63 // pred_check_branch
          %430 = sbr.rel (%p428) target = $region80
        $region79: #{tpu_custom_call.1} parent=63 // pred_region
          %431 = dma.done [#allocation10], 16
        $region80: #{tpu_custom_call.1} parent=63 // pred_fallthru
          _
        // Predicated region
        $region81: #{tpu_custom_call.1} parent=63 // pred_check
          %p432 = pneg %p199
        $region82: #{tpu_custom_call.1} parent=63 // pred_check_branch
          %434 = sbr.rel (%p432) target = $region84
        $region83: #{tpu_custom_call.1} parent=63 // pred_region
          %435 = dma.done [#allocation10], 256
        $region84: #{tpu_custom_call.1} parent=63 // pred_fallthru
          _
        // Predicated region
        $region85: #{tpu_custom_call.1} parent=63 // pred_check
          %p436 = pneg %p220
        $region86: #{tpu_custom_call.1} parent=63 // pred_check_branch
          %438 = sbr.rel (%p436) target = $region88
        $region87: #{tpu_custom_call.1} parent=63 // pred_region
          %439 = dma.done [#allocation13], 16
        $region88: #{tpu_custom_call.1} parent=63 // pred_fallthru
          _
        %s440 = sand.u32 %s39, 1
        %s441 = scalar_lea.sflag [#allocation4], %s440
        %s442 = sand.u32 %s39, 1
        %s443 = smul.addr %s442, 256
        %s444 = scalar_lea.vmem [#allocation3], %s443
        %p445 = pneg %p52
        %p446 = pneg %p49
        %p447 = pneg %p73
        %p448 = pneg %p70
        %p449 = pneg %p94
        %p450 = pneg %p91
        %p451 = pneg %p115
        %p452 = pneg %p112
        %p453 = pneg %p136
        %p454 = pneg %p133
        %p455 = pneg %p157
        %p456 = pneg %p154
        %p457 = pneg %p178
        %p458 = pneg %p175
        %p459 = pneg %p199
        %p460 = pneg %p196
        %p461 = pneg %p220
        %p462 = pneg %p217
        %p463 = pneg %p241
        %p464 = pneg %p238
        %p465 = pneg %p262
        %p466 = pneg %p259
        %p467 = pneg %p288
        %p468 = pneg %p285
        %s469 = sand.u32 %s275, 1
        %s470 = scalar_lea.sflag [#allocation5], %s469
        %s471 = sand.u32 %s275, 1
        %s472 = smul.addr %s471, 256
        %s473 = scalar_lea.vmem [#allocation14], %s472
        %vm475 = vcmask 261120
        %476 = vst.msk [vmem:[#allocation2] sm:$0xff] %vm475, 0.0
        %477 = vst.msk [vmem:[#allocation2 + $0x8] sm:$0xff] %vm475, 0.0
        %478 = vst.msk [vmem:[#allocation2 + $0x10] sm:$0xff] %vm475, 0.0
        %479 = vst.msk [vmem:[#allocation2 + $0x18] sm:$0xff] %vm475, 0.0
        %480 = vst.msk [vmem:[#allocation2 + $0x20] sm:$0xff] %vm475, 0.0
        %481 = vst.msk [vmem:[#allocation2 + $0x28] sm:$0xff] %vm475, 0.0
        %482 = vst.msk [vmem:[#allocation2 + $0x30] sm:$0xff] %vm475, 0.0
        %483 = vst.msk [vmem:[#allocation2 + $0x38] sm:$0xff] %vm475, 0.0
        %484 = vst.msk [vmem:[#allocation2 + $0x40] sm:$0xff] %vm475, 0.0
        %485 = vst.msk [vmem:[#allocation2 + $0x48] sm:$0xff] %vm475, 0.0
        %486 = vst.msk [vmem:[#allocation2 + $0x50] sm:$0xff] %vm475, 0.0
        %487 = vst.msk [vmem:[#allocation2 + $0x58] sm:$0xff] %vm475, 0.0
        %488 = vst.msk [vmem:[#allocation2 + $0x60] sm:$0xff] %vm475, 0.0
        %489 = vst.msk [vmem:[#allocation2 + $0x68] sm:$0xff] %vm475, 0.0
        %490 = vst.msk [vmem:[#allocation2 + $0x70] sm:$0xff] %vm475, 0.0
        %491 = vst.msk [vmem:[#allocation2 + $0x78] sm:$0xff] %vm475, 0.0
        %492 = vst.msk [vmem:[#allocation2 + $0x80] sm:$0xff] %vm475, 0.0
        %493 = vst.msk [vmem:[#allocation2 + $0x88] sm:$0xff] %vm475, 0.0
        %494 = vst.msk [vmem:[#allocation2 + $0x90] sm:$0xff] %vm475, 0.0
        %495 = vst.msk [vmem:[#allocation2 + $0x98] sm:$0xff] %vm475, 0.0
        %496 = vst.msk [vmem:[#allocation2 + $0xa0] sm:$0xff] %vm475, 0.0
        %497 = vst.msk [vmem:[#allocation2 + $0xa8] sm:$0xff] %vm475, 0.0
        %498 = vst.msk [vmem:[#allocation2 + $0xb0] sm:$0xff] %vm475, 0.0
        %499 = vst.msk [vmem:[#allocation2 + $0xb8] sm:$0xff] %vm475, 0.0
        %500 = vst.msk [vmem:[#allocation2 + $0xc0] sm:$0xff] %vm475, 0.0
        %501 = vst.msk [vmem:[#allocation2 + $0xc8] sm:$0xff] %vm475, 0.0
        %502 = vst.msk [vmem:[#allocation2 + $0xd0] sm:$0xff] %vm475, 0.0
        %503 = vst.msk [vmem:[#allocation2 + $0xd8] sm:$0xff] %vm475, 0.0
        %504 = vst.msk [vmem:[#allocation2 + $0xe0] sm:$0xff] %vm475, 0.0
        %505 = vst.msk [vmem:[#allocation2 + $0xe8] sm:$0xff] %vm475, 0.0
        %506 = vst.msk [vmem:[#allocation2 + $0xf0] sm:$0xff] %vm475, 0.0
        %507 = vst.msk [vmem:[#allocation2 + $0xf8] sm:$0xff] %vm475, 0.0
        %508 = vst.msk [vmem:[#allocation2 + $0x100] sm:$0xff] %vm475, 0.0
        %509 = vst.msk [vmem:[#allocation2 + $0x108] sm:$0xff] %vm475, 0.0
        %510 = vst.msk [vmem:[#allocation2 + $0x110] sm:$0xff] %vm475, 0.0
        %511 = vst.msk [vmem:[#allocation2 + $0x118] sm:$0xff] %vm475, 0.0
        %512 = vst.msk [vmem:[#allocation2 + $0x120] sm:$0xff] %vm475, 0.0
        %513 = vst.msk [vmem:[#allocation2 + $0x128] sm:$0xff] %vm475, 0.0
        %514 = vst.msk [vmem:[#allocation2 + $0x130] sm:$0xff] %vm475, 0.0
        %515 = vst.msk [vmem:[#allocation2 + $0x138] sm:$0xff] %vm475, 0.0
        %516 = vst.msk [vmem:[#allocation2 + $0x140] sm:$0xff] %vm475, 0.0
        %517 = vst.msk [vmem:[#allocation2 + $0x148] sm:$0xff] %vm475, 0.0
        %518 = vst.msk [vmem:[#allocation2 + $0x150] sm:$0xff] %vm475, 0.0
        %519 = vst.msk [vmem:[#allocation2 + $0x158] sm:$0xff] %vm475, 0.0
        %520 = vst.msk [vmem:[#allocation2 + $0x160] sm:$0xff] %vm475, 0.0
        %521 = vst.msk [vmem:[#allocation2 + $0x168] sm:$0xff] %vm475, 0.0
        %522 = vst.msk [vmem:[#allocation2 + $0x170] sm:$0xff] %vm475, 0.0
        %523 = vst.msk [vmem:[#allocation2 + $0x178] sm:$0xff] %vm475, 0.0
        %524 = vst.msk [vmem:[#allocation2 + $0x180] sm:$0xff] %vm475, 0.0
        %525 = vst.msk [vmem:[#allocation2 + $0x188] sm:$0xff] %vm475, 0.0
        %526 = vst.msk [vmem:[#allocation2 + $0x190] sm:$0xff] %vm475, 0.0
        %527 = vst.msk [vmem:[#allocation2 + $0x198] sm:$0xff] %vm475, 0.0
        %528 = vst.msk [vmem:[#allocation2 + $0x1a0] sm:$0xff] %vm475, 0.0
        %529 = vst.msk [vmem:[#allocation2 + $0x1a8] sm:$0xff] %vm475, 0.0
        %530 = vst.msk [vmem:[#allocation2 + $0x1b0] sm:$0xff] %vm475, 0.0
        %531 = vst.msk [vmem:[#allocation2 + $0x1b8] sm:$0xff] %vm475, 0.0
        %532 = vst.msk [vmem:[#allocation2 + $0x1c0] sm:$0xff] %vm475, 0.0
        %533 = vst.msk [vmem:[#allocation2 + $0x1c8] sm:$0xff] %vm475, 0.0
        %534 = vst.msk [vmem:[#allocation2 + $0x1d0] sm:$0xff] %vm475, 0.0
        %535 = vst.msk [vmem:[#allocation2 + $0x1d8] sm:$0xff] %vm475, 0.0
        %536 = vst.msk [vmem:[#allocation2 + $0x1e0] sm:$0xff] %vm475, 0.0
        %537 = vst.msk [vmem:[#allocation2 + $0x1e8] sm:$0xff] %vm475, 0.0
        %538 = vst.msk [vmem:[#allocation2 + $0x1f0] sm:$0xff] %vm475, 0.0
        %539 = vst.msk [vmem:[#allocation2 + $0x1f8] sm:$0xff] %vm475, 0.0
        %540 = vst.msk [vmem:[#allocation2 + $0x200] sm:$0xff] %vm475, 0.0
        %541 = vst.msk [vmem:[#allocation2 + $0x208] sm:$0xff] %vm475, 0.0
        %542 = vst.msk [vmem:[#allocation2 + $0x210] sm:$0xff] %vm475, 0.0
        %543 = vst.msk [vmem:[#allocation2 + $0x218] sm:$0xff] %vm475, 0.0
        %544 = vst.msk [vmem:[#allocation2 + $0x220] sm:$0xff] %vm475, 0.0
        %545 = vst.msk [vmem:[#allocation2 + $0x228] sm:$0xff] %vm475, 0.0
        %546 = vst.msk [vmem:[#allocation2 + $0x230] sm:$0xff] %vm475, 0.0
        %547 = vst.msk [vmem:[#allocation2 + $0x238] sm:$0xff] %vm475, 0.0
        %v548 = vld [vmem:[%s415] sm:$0xff]
        %v549 = vld [vmem:[%s415 + $0x8] sm:$0xff]
        %v550 = vld [vmem:[%s415 + $0x10] sm:$0xff]
        %v551 = vld [vmem:[%s415 + $0x18] sm:$0xff]
        %v552 = vld [vmem:[%s415 + $0x20] sm:$0xff]
        %v553 = vld [vmem:[%s415 + $0x28] sm:$0xff]
        %v554 = vld [vmem:[%s415 + $0x30] sm:$0xff]
        %v555 = vld [vmem:[%s415 + $0x38] sm:$0xff]
        %v556 = vld [vmem:[%s415 + $0x40] sm:$0xff]
        %v557 = vld [vmem:[%s415 + $0x48] sm:$0xff]
        %v558 = vld [vmem:[%s415 + $0x50] sm:$0xff]
        %v559 = vld [vmem:[%s415 + $0x58] sm:$0xff]
        %v560 = vld [vmem:[%s415 + $0x60] sm:$0xff]
        %v561 = vld [vmem:[%s415 + $0x68] sm:$0xff]
        %v562 = vld [vmem:[%s415 + $0x70] sm:$0xff]
        %v563 = vld [vmem:[%s415 + $0x78] sm:$0xff]
        %v564 = vld [vmem:[%s415 + $0x80] sm:$0xff]
        %v565 = vld [vmem:[%s415 + $0x88] sm:$0xff]
        %v566 = vld [vmem:[%s415 + $0x90] sm:$0xff]
        %v567 = vld [vmem:[%s415 + $0x98] sm:$0xff]
        %v568 = vld [vmem:[%s415 + $0xa0] sm:$0xff]
        %v569 = vld [vmem:[%s415 + $0xa8] sm:$0xff]
        %v570 = vld [vmem:[%s415 + $0xb0] sm:$0xff]
        %v571 = vld [vmem:[%s415 + $0xb8] sm:$0xff]
        %v572 = vld [vmem:[%s415 + $0xc0] sm:$0xff]
        %v573 = vld [vmem:[%s415 + $0xc8] sm:$0xff]
        %v574 = vld [vmem:[%s415 + $0xd0] sm:$0xff]
        %v575 = vld [vmem:[%s415 + $0xd8] sm:$0xff]
        %v576 = vld [vmem:[%s415 + $0xe0] sm:$0xff]
        %v577 = vld [vmem:[%s415 + $0xe8] sm:$0xff]
        %v578 = vld [vmem:[%s415 + $0xf0] sm:$0xff]
        %v579 = vld [vmem:[%s415 + $0xf8] sm:$0xff]
        %s580 = scalar_lea.vmem [#allocation2], 32
        %581 = vst.msk [vmem:[%s580 + $0x8] sm:$0xff] %vm475, %v548
        %582 = vst.msk [vmem:[%s580 + $0x10] sm:$0xff] %vm475, %v549
        %583 = vst.msk [vmem:[%s580 + $0x28] sm:$0xff] %vm475, %v550
        %584 = vst.msk [vmem:[%s580 + $0x30] sm:$0xff] %vm475, %v551
        %585 = vst.msk [vmem:[%s580 + $0x48] sm:$0xff] %vm475, %v552
        %586 = vst.msk [vmem:[%s580 + $0x50] sm:$0xff] %vm475, %v553
        %587 = vst.msk [vmem:[%s580 + $0x68] sm:$0xff] %vm475, %v554
        %588 = vst.msk [vmem:[%s580 + $0x70] sm:$0xff] %vm475, %v555
        %589 = vst.msk [vmem:[%s580 + $0x88] sm:$0xff] %vm475, %v556
        %590 = vst.msk [vmem:[%s580 + $0x90] sm:$0xff] %vm475, %v557
        %591 = vst.msk [vmem:[%s580 + $0xa8] sm:$0xff] %vm475, %v558
        %592 = vst.msk [vmem:[%s580 + $0xb0] sm:$0xff] %vm475, %v559
        %593 = vst.msk [vmem:[%s580 + $0xc8] sm:$0xff] %vm475, %v560
        %594 = vst.msk [vmem:[%s580 + $0xd0] sm:$0xff] %vm475, %v561
        %595 = vst.msk [vmem:[%s580 + $0xe8] sm:$0xff] %vm475, %v562
        %596 = vst.msk [vmem:[%s580 + $0xf0] sm:$0xff] %vm475, %v563
        %597 = vst.msk [vmem:[%s580 + $0x108] sm:$0xff] %vm475, %v564
        %598 = vst.msk [vmem:[%s580 + $0x110] sm:$0xff] %vm475, %v565
        %599 = vst.msk [vmem:[%s580 + $0x128] sm:$0xff] %vm475, %v566
        %600 = vst.msk [vmem:[%s580 + $0x130] sm:$0xff] %vm475, %v567
        %601 = vst.msk [vmem:[%s580 + $0x148] sm:$0xff] %vm475, %v568
        %602 = vst.msk [vmem:[%s580 + $0x150] sm:$0xff] %vm475, %v569
        %603 = vst.msk [vmem:[%s580 + $0x168] sm:$0xff] %vm475, %v570
        %604 = vst.msk [vmem:[%s580 + $0x170] sm:$0xff] %vm475, %v571
        %605 = vst.msk [vmem:[%s580 + $0x188] sm:$0xff] %vm475, %v572
        %606 = vst.msk [vmem:[%s580 + $0x190] sm:$0xff] %vm475, %v573
        %607 = vst.msk [vmem:[%s580 + $0x1a8] sm:$0xff] %vm475, %v574
        %608 = vst.msk [vmem:[%s580 + $0x1b0] sm:$0xff] %vm475, %v575
        %609 = vst.msk [vmem:[%s580 + $0x1c8] sm:$0xff] %vm475, %v576
        %610 = vst.msk [vmem:[%s580 + $0x1d0] sm:$0xff] %vm475, %v577
        %611 = vst.msk [vmem:[%s580 + $0x1e8] sm:$0xff] %vm475, %v578
        %612 = vst.msk [vmem:[%s580 + $0x1f0] sm:$0xff] %vm475, %v579
        %v613 = vld [vmem:[#allocation2] sm:$0xff]
        %v614 = vld [vmem:[#allocation2 + $0x8] sm:$0xff]
        %v615 = vld [vmem:[#allocation2 + $0x10] sm:$0xff]
        %v616 = vld [vmem:[#allocation2 + $0x18] sm:$0xff]
        %v617 = vld [vmem:[#allocation2 + $0x20] sm:$0xff]
        %v618 = vld [vmem:[#allocation2 + $0x28] sm:$0xff]
        %v619 = vld [vmem:[#allocation2 + $0x30] sm:$0xff]
        %v620 = vld [vmem:[#allocation2 + $0x38] sm:$0xff]
        %v621 = vld [vmem:[#allocation2 + $0x40] sm:$0xff]
        %v622 = vld [vmem:[#allocation2 + $0x48] sm:$0xff]
        %v623 = vld [vmem:[#allocation2 + $0x50] sm:$0xff]
        %v624 = vld [vmem:[#allocation2 + $0x58] sm:$0xff]
        %v625 = vld [vmem:[#allocation2 + $0x60] sm:$0xff]
        %v626 = vld [vmem:[#allocation2 + $0x68] sm:$0xff]
        %v627 = vld [vmem:[#allocation2 + $0x70] sm:$0xff]
        %v628 = vld [vmem:[#allocation2 + $0x78] sm:$0xff]
        %v629 = vld [vmem:[#allocation2 + $0x80] sm:$0xff]
        %v630 = vld [vmem:[#allocation2 + $0x88] sm:$0xff]
        %v631 = vld [vmem:[#allocation2 + $0x90] sm:$0xff]
        %v632 = vld [vmem:[#allocation2 + $0x98] sm:$0xff]
        %v633 = vld [vmem:[#allocation2 + $0xa0] sm:$0xff]
        %v634 = vld [vmem:[#allocation2 + $0xa8] sm:$0xff]
        %v635 = vld [vmem:[#allocation2 + $0xb0] sm:$0xff]
        %v636 = vld [vmem:[#allocation2 + $0xb8] sm:$0xff]
        %v637 = vld [vmem:[#allocation2 + $0xc0] sm:$0xff]
        %v638 = vld [vmem:[#allocation2 + $0xc8] sm:$0xff]
        %v639 = vld [vmem:[#allocation2 + $0xd0] sm:$0xff]
        %v640 = vld [vmem:[#allocation2 + $0xd8] sm:$0xff]
        %v641 = vld [vmem:[#allocation2 + $0xe0] sm:$0xff]
        %v642 = vld [vmem:[#allocation2 + $0xe8] sm:$0xff]
        %v643 = vld [vmem:[#allocation2 + $0xf0] sm:$0xff]
        %v644 = vld [vmem:[#allocation2 + $0xf8] sm:$0xff]
        %v645 = vld [vmem:[#allocation2 + $0x100] sm:$0xff]
        %v646 = vld [vmem:[#allocation2 + $0x108] sm:$0xff]
        %v647 = vld [vmem:[#allocation2 + $0x110] sm:$0xff]
        %v648 = vld [vmem:[#allocation2 + $0x118] sm:$0xff]
        %v649 = vld [vmem:[#allocation2 + $0x120] sm:$0xff]
        %v650 = vld [vmem:[#allocation2 + $0x128] sm:$0xff]
        %v651 = vld [vmem:[#allocation2 + $0x130] sm:$0xff]
        %v652 = vld [vmem:[#allocation2 + $0x138] sm:$0xff]
        %v653 = vld [vmem:[#allocation2 + $0x140] sm:$0xff]
        %v654 = vld [vmem:[#allocation2 + $0x148] sm:$0xff]
        %v655 = vld [vmem:[#allocation2 + $0x150] sm:$0xff]
        %v656 = vld [vmem:[#allocation2 + $0x158] sm:$0xff]
        %v657 = vld [vmem:[#allocation2 + $0x160] sm:$0xff]
        %v658 = vld [vmem:[#allocation2 + $0x168] sm:$0xff]
        %v659 = vld [vmem:[#allocation2 + $0x170] sm:$0xff]
        %v660 = vld [vmem:[#allocation2 + $0x178] sm:$0xff]
        %v661 = vld [vmem:[#allocation2 + $0x180] sm:$0xff]
        %v662 = vld [vmem:[#allocation2 + $0x188] sm:$0xff]
        %v663 = vld [vmem:[#allocation2 + $0x190] sm:$0xff]
        %v664 = vld [vmem:[#allocation2 + $0x198] sm:$0xff]
        %v665 = vld [vmem:[#allocation2 + $0x1a0] sm:$0xff]
        %v666 = vld [vmem:[#allocation2 + $0x1a8] sm:$0xff]
        %v667 = vld [vmem:[#allocation2 + $0x1b0] sm:$0xff]
        %v668 = vld [vmem:[#allocation2 + $0x1b8] sm:$0xff]
        %v669 = vld [vmem:[#allocation2 + $0x1c0] sm:$0xff]
        %v670 = vld [vmem:[#allocation2 + $0x1c8] sm:$0xff]
        %v671 = vld [vmem:[#allocation2 + $0x1d0] sm:$0xff]
        %v672 = vld [vmem:[#allocation2 + $0x1d8] sm:$0xff]
        %v673 = vld [vmem:[#allocation2 + $0x1e0] sm:$0xff]
        %v674 = vld [vmem:[#allocation2 + $0x1e8] sm:$0xff]
        %v675 = vld [vmem:[#allocation2 + $0x1f0] sm:$0xff]
        %v676 = vld [vmem:[#allocation2 + $0x1f8] sm:$0xff]
        %v677 = vld [vmem:[#allocation2 + $0x200] sm:$0xff]
        %v678 = vld [vmem:[#allocation2 + $0x208] sm:$0xff]
        %v679 = vld [vmem:[#allocation2 + $0x210] sm:$0xff]
        %v680 = vld [vmem:[#allocation2 + $0x218] sm:$0xff]
        %v681 = vld [vmem:[#allocation2 + $0x220] sm:$0xff]
        %v682 = vld [vmem:[#allocation2 + $0x228] sm:$0xff]
        %v683 = vld [vmem:[#allocation2 + $0x230] sm:$0xff]
        %v684 = vld [vmem:[#allocation2 + $0x238] sm:$0xff]
        %v685 = vld [vmem:[#allocation6] sm:$0xff]
        %v686 = vld [vmem:[#allocation6 + $0x8] sm:$0x1]
        %v687 = vlaneseq
        %v688 = vshrl.u32 %v687, 7
        %v689 = vsub.s32 0, %v688
        %v690 = vrot.slane %v685, %v689
        %v691 = vmul.f32 %v613, %v690
        %v692 = vmul.f32 %v614, %v690
        %v693 = vmul.f32 %v615, %v690
        %v694 = vmul.f32 %v617, %v690
        %v695 = vmul.f32 %v618, %v690
        %v696 = vmul.f32 %v619, %v690
        %v697 = vmul.f32 %v621, %v690
        %v698 = vmul.f32 %v622, %v690
        %v699 = vmul.f32 %v623, %v690
        %v700 = vmul.f32 %v625, %v690
        %v701 = vmul.f32 %v626, %v690
        %v702 = vmul.f32 %v627, %v690
        %v703 = vmul.f32 %v629, %v690
        %v704 = vmul.f32 %v630, %v690
        %v705 = vmul.f32 %v631, %v690
        %v706 = vmul.f32 %v633, %v690
        %v707 = vmul.f32 %v634, %v690
        %v708 = vmul.f32 %v635, %v690
        %v709 = vmul.f32 %v637, %v690
        %v710 = vmul.f32 %v638, %v690
        %v711 = vmul.f32 %v639, %v690
        %v712 = vmul.f32 %v641, %v690
        %v713 = vmul.f32 %v642, %v690
        %v714 = vmul.f32 %v643, %v690
        %v715 = vmul.f32 %v645, %v690
        %v716 = vmul.f32 %v646, %v690
        %v717 = vmul.f32 %v647, %v690
        %v718 = vmul.f32 %v649, %v690
        %v719 = vmul.f32 %v650, %v690
        %v720 = vmul.f32 %v651, %v690
        %v721 = vmul.f32 %v653, %v690
        %v722 = vmul.f32 %v654, %v690
        %v723 = vmul.f32 %v655, %v690
        %v724 = vmul.f32 %v657, %v690
        %v725 = vmul.f32 %v658, %v690
        %v726 = vmul.f32 %v659, %v690
        %v727 = vmul.f32 %v661, %v690
        %v728 = vmul.f32 %v662, %v690
        %v729 = vmul.f32 %v663, %v690
        %v730 = vmul.f32 %v665, %v690
        %v731 = vmul.f32 %v666, %v690
        %v732 = vmul.f32 %v667, %v690
        %v733 = vmul.f32 %v669, %v690
        %v734 = vmul.f32 %v670, %v690
        %v735 = vmul.f32 %v671, %v690
        %v736 = vmul.f32 %v673, %v690
        %v737 = vmul.f32 %v674, %v690
        %v738 = vmul.f32 %v675, %v690
        %v739 = vlaneseq
        %v740 = vshrl.u32 %v739, 7
        %v741 = vsub.s32 1, %v740
        %v742 = vrot.slane %v685, %v741
        %v743 = vmul.f32 %v614, %v742
        %v744 = vmul.f32 %v615, %v742
        %v745 = vmul.f32 %v618, %v742
        %v746 = vmul.f32 %v619, %v742
        %v747 = vmul.f32 %v622, %v742
        %v748 = vmul.f32 %v623, %v742
        %v749 = vmul.f32 %v626, %v742
        %v750 = vmul.f32 %v627, %v742
        %v751 = vmul.f32 %v630, %v742
        %v752 = vmul.f32 %v631, %v742
        %v753 = vmul.f32 %v634, %v742
        %v754 = vmul.f32 %v635, %v742
        %v755 = vmul.f32 %v638, %v742
        %v756 = vmul.f32 %v639, %v742
        %v757 = vmul.f32 %v642, %v742
        %v758 = vmul.f32 %v643, %v742
        %v759 = vmul.f32 %v646, %v742
        %v760 = vmul.f32 %v647, %v742
        %v761 = vmul.f32 %v650, %v742
        %v762 = vmul.f32 %v651, %v742
        %v763 = vmul.f32 %v654, %v742
        %v764 = vmul.f32 %v655, %v742
        %v765 = vmul.f32 %v658, %v742
        %v766 = vmul.f32 %v659, %v742
        %v767 = vmul.f32 %v662, %v742
        %v768 = vmul.f32 %v663, %v742
        %v769 = vmul.f32 %v666, %v742
        %v770 = vmul.f32 %v667, %v742
        %v771 = vmul.f32 %v670, %v742
        %v772 = vmul.f32 %v671, %v742
        %v773 = vmul.f32 %v674, %v742
        %v774 = vmul.f32 %v675, %v742
        %vm807 = vcmask 1046528
        %v808 = vrot.slane %v743, 1
        %v809 = vrot.slane %v744, 1
        %v810 = vsel %vm807, %v808, %v809
        %v811 = vrot.slane %v745, 1
        %v812 = vrot.slane %v746, 1
        %v813 = vsel %vm807, %v811, %v812
        %v814 = vrot.slane %v747, 1
        %v815 = vrot.slane %v748, 1
        %v816 = vsel %vm807, %v814, %v815
        %v817 = vrot.slane %v749, 1
        %v818 = vrot.slane %v750, 1
        %v819 = vsel %vm807, %v817, %v818
        %v820 = vrot.slane %v751, 1
        %v821 = vrot.slane %v752, 1
        %v822 = vsel %vm807, %v820, %v821
        %v823 = vrot.slane %v753, 1
        %v824 = vrot.slane %v754, 1
        %v825 = vsel %vm807, %v823, %v824
        %v826 = vrot.slane %v755, 1
        %v827 = vrot.slane %v756, 1
        %v828 = vsel %vm807, %v826, %v827
        %v829 = vrot.slane %v757, 1
        %v830 = vrot.slane %v758, 1
        %v831 = vsel %vm807, %v829, %v830
        %v832 = vrot.slane %v759, 1
        %v833 = vrot.slane %v760, 1
        %v834 = vsel %vm807, %v832, %v833
        %v835 = vrot.slane %v761, 1
        %v836 = vrot.slane %v762, 1
        %v837 = vsel %vm807, %v835, %v836
        %v838 = vrot.slane %v763, 1
        %v839 = vrot.slane %v764, 1
        %v840 = vsel %vm807, %v838, %v839
        %v841 = vrot.slane %v765, 1
        %v842 = vrot.slane %v766, 1
        %v843 = vsel %vm807, %v841, %v842
        %v844 = vrot.slane %v767, 1
        %v845 = vrot.slane %v768, 1
        %v846 = vsel %vm807, %v844, %v845
        %v847 = vrot.slane %v769, 1
        %v848 = vrot.slane %v770, 1
        %v849 = vsel %vm807, %v847, %v848
        %v850 = vrot.slane %v771, 1
        %v851 = vrot.slane %v772, 1
        %v852 = vsel %vm807, %v850, %v851
        %v853 = vrot.slane %v773, 1
        %v854 = vrot.slane %v774, 1
        %v855 = vsel %vm807, %v853, %v854
        %v904 = vadd.f32 %v691, %v808
        %v905 = vadd.f32 %v692, %v810
        %v906 = vadd.f32 %v693, %v809
        %v907 = vadd.f32 %v694, %v811
        %v908 = vadd.f32 %v695, %v813
        %v909 = vadd.f32 %v696, %v812
        %v910 = vadd.f32 %v697, %v814
        %v911 = vadd.f32 %v698, %v816
        %v912 = vadd.f32 %v699, %v815
        %v913 = vadd.f32 %v700, %v817
        %v914 = vadd.f32 %v701, %v819
        %v915 = vadd.f32 %v702, %v818
        %v916 = vadd.f32 %v703, %v820
        %v917 = vadd.f32 %v704, %v822
        %v918 = vadd.f32 %v705, %v821
        %v919 = vadd.f32 %v706, %v823
        %v920 = vadd.f32 %v707, %v825
        %v921 = vadd.f32 %v708, %v824
        %v922 = vadd.f32 %v709, %v826
        %v923 = vadd.f32 %v710, %v828
        %v924 = vadd.f32 %v711, %v827
        %v925 = vadd.f32 %v712, %v829
        %v926 = vadd.f32 %v713, %v831
        %v927 = vadd.f32 %v714, %v830
        %v928 = vadd.f32 %v715, %v832
        %v929 = vadd.f32 %v716, %v834
        %v930 = vadd.f32 %v717, %v833
        %v931 = vadd.f32 %v718, %v835
        %v932 = vadd.f32 %v719, %v837
        %v933 = vadd.f32 %v720, %v836
        %v934 = vadd.f32 %v721, %v838
        %v935 = vadd.f32 %v722, %v840
        %v936 = vadd.f32 %v723, %v839
        %v937 = vadd.f32 %v724, %v841
        %v938 = vadd.f32 %v725, %v843
        %v939 = vadd.f32 %v726, %v842
        %v940 = vadd.f32 %v727, %v844
        %v941 = vadd.f32 %v728, %v846
        %v942 = vadd.f32 %v729, %v845
        %v943 = vadd.f32 %v730, %v847
        %v944 = vadd.f32 %v731, %v849
        %v945 = vadd.f32 %v732, %v848
        %v946 = vadd.f32 %v733, %v850
        %v947 = vadd.f32 %v734, %v852
        %v948 = vadd.f32 %v735, %v851
        %v949 = vadd.f32 %v736, %v853
        %v950 = vadd.f32 %v737, %v855
        %v951 = vadd.f32 %v738, %v854
        %v952 = vlaneseq
        %v953 = vshrl.u32 %v952, 7
        %v954 = vsub.s32 2, %v953
        %v955 = vrot.slane %v685, %v954
        %v956 = vmul.f32 %v614, %v955
        %v957 = vmul.f32 %v615, %v955
        %v958 = vmul.f32 %v616, %v955
        %v959 = vmul.f32 %v618, %v955
        %v960 = vmul.f32 %v619, %v955
        %v961 = vmul.f32 %v620, %v955
        %v962 = vmul.f32 %v622, %v955
        %v963 = vmul.f32 %v623, %v955
        %v964 = vmul.f32 %v624, %v955
        %v965 = vmul.f32 %v626, %v955
        %v966 = vmul.f32 %v627, %v955
        %v967 = vmul.f32 %v628, %v955
        %v968 = vmul.f32 %v630, %v955
        %v969 = vmul.f32 %v631, %v955
        %v970 = vmul.f32 %v632, %v955
        %v971 = vmul.f32 %v634, %v955
        %v972 = vmul.f32 %v635, %v955
        %v973 = vmul.f32 %v636, %v955
        %v974 = vmul.f32 %v638, %v955
        %v975 = vmul.f32 %v639, %v955
        %v976 = vmul.f32 %v640, %v955
        %v977 = vmul.f32 %v642, %v955
        %v978 = vmul.f32 %v643, %v955
        %v979 = vmul.f32 %v644, %v955
        %v980 = vmul.f32 %v646, %v955
        %v981 = vmul.f32 %v647, %v955
        %v982 = vmul.f32 %v648, %v955
        %v983 = vmul.f32 %v650, %v955
        %v984 = vmul.f32 %v651, %v955
        %v985 = vmul.f32 %v652, %v955
        %v986 = vmul.f32 %v654, %v955
        %v987 = vmul.f32 %v655, %v955
        %v988 = vmul.f32 %v656, %v955
        %v989 = vmul.f32 %v658, %v955
        %v990 = vmul.f32 %v659, %v955
        %v991 = vmul.f32 %v660, %v955
        %v992 = vmul.f32 %v662, %v955
        %v993 = vmul.f32 %v663, %v955
        %v994 = vmul.f32 %v664, %v955
        %v995 = vmul.f32 %v666, %v955
        %v996 = vmul.f32 %v667, %v955
        %v997 = vmul.f32 %v668, %v955
        %v998 = vmul.f32 %v670, %v955
        %v999 = vmul.f32 %v671, %v955
        %v1000 = vmul.f32 %v672, %v955
        %v1001 = vmul.f32 %v674, %v955
        %v1002 = vmul.f32 %v675, %v955
        %v1003 = vmul.f32 %v676, %v955
        %vm1052 = vcmask 1045504
        %v1053 = vrot.slane %v956, 2
        %v1054 = vrot.slane %v957, 2
        %v1055 = vsel %vm1052, %v1053, %v1054
        %v1056 = vrot.slane %v958, 2
        %v1057 = vsel %vm1052, %v1054, %v1056
        %v1058 = vrot.slane %v959, 2
        %v1059 = vrot.slane %v960, 2
        %v1060 = vsel %vm1052, %v1058, %v1059
        %v1061 = vrot.slane %v961, 2
        %v1062 = vsel %vm1052, %v1059, %v1061
        %v1063 = vrot.slane %v962, 2
        %v1064 = vrot.slane %v963, 2
        %v1065 = vsel %vm1052, %v1063, %v1064
        %v1066 = vrot.slane %v964, 2
        %v1067 = vsel %vm1052, %v1064, %v1066
        %v1068 = vrot.slane %v965, 2
        %v1069 = vrot.slane %v966, 2
        %v1070 = vsel %vm1052, %v1068, %v1069
        %v1071 = vrot.slane %v967, 2
        %v1072 = vsel %vm1052, %v1069, %v1071
        %v1073 = vrot.slane %v968, 2
        %v1074 = vrot.slane %v969, 2
        %v1075 = vsel %vm1052, %v1073, %v1074
        %v1076 = vrot.slane %v970, 2
        %v1077 = vsel %vm1052, %v1074, %v1076
        %v1078 = vrot.slane %v971, 2
        %v1079 = vrot.slane %v972, 2
        %v1080 = vsel %vm1052, %v1078, %v1079
        %v1081 = vrot.slane %v973, 2
        %v1082 = vsel %vm1052, %v1079, %v1081
        %v1083 = vrot.slane %v974, 2
        %v1084 = vrot.slane %v975, 2
        %v1085 = vsel %vm1052, %v1083, %v1084
        %v1086 = vrot.slane %v976, 2
        %v1087 = vsel %vm1052, %v1084, %v1086
        %v1088 = vrot.slane %v977, 2
        %v1089 = vrot.slane %v978, 2
        %v1090 = vsel %vm1052, %v1088, %v1089
        %v1091 = vrot.slane %v979, 2
        %v1092 = vsel %vm1052, %v1089, %v1091
        %v1093 = vrot.slane %v980, 2
        %v1094 = vrot.slane %v981, 2
        %v1095 = vsel %vm1052, %v1093, %v1094
        %v1096 = vrot.slane %v982, 2
        %v1097 = vsel %vm1052, %v1094, %v1096
        %v1098 = vrot.slane %v983, 2
        %v1099 = vrot.slane %v984, 2
        %v1100 = vsel %vm1052, %v1098, %v1099
        %v1101 = vrot.slane %v985, 2
        %v1102 = vsel %vm1052, %v1099, %v1101
        %v1103 = vrot.slane %v986, 2
        %v1104 = vrot.slane %v987, 2
        %v1105 = vsel %vm1052, %v1103, %v1104
        %v1106 = vrot.slane %v988, 2
        %v1107 = vsel %vm1052, %v1104, %v1106
        %v1108 = vrot.slane %v989, 2
        %v1109 = vrot.slane %v990, 2
        %v1110 = vsel %vm1052, %v1108, %v1109
        %v1111 = vrot.slane %v991, 2
        %v1112 = vsel %vm1052, %v1109, %v1111
        %v1113 = vrot.slane %v992, 2
        %v1114 = vrot.slane %v993, 2
        %v1115 = vsel %vm1052, %v1113, %v1114
        %v1116 = vrot.slane %v994, 2
        %v1117 = vsel %vm1052, %v1114, %v1116
        %v1118 = vrot.slane %v995, 2
        %v1119 = vrot.slane %v996, 2
        %v1120 = vsel %vm1052, %v1118, %v1119
        %v1121 = vrot.slane %v997, 2
        %v1122 = vsel %vm1052, %v1119, %v1121
        %v1123 = vrot.slane %v998, 2
        %v1124 = vrot.slane %v999, 2
        %v1125 = vsel %vm1052, %v1123, %v1124
        %v1126 = vrot.slane %v1000, 2
        %v1127 = vsel %vm1052, %v1124, %v1126
        %v1128 = vrot.slane %v1001, 2
        %v1129 = vrot.slane %v1002, 2
        %v1130 = vsel %vm1052, %v1128, %v1129
        %v1131 = vrot.slane %v1003, 2
        %v1132 = vsel %vm1052, %v1129, %v1131
        %v1181 = vadd.f32 %v904, %v1053
        %v1182 = vadd.f32 %v905, %v1055
        %v1183 = vadd.f32 %v906, %v1057
        %v1184 = vadd.f32 %v907, %v1058
        %v1185 = vadd.f32 %v908, %v1060
        %v1186 = vadd.f32 %v909, %v1062
        %v1187 = vadd.f32 %v910, %v1063
        %v1188 = vadd.f32 %v911, %v1065
        %v1189 = vadd.f32 %v912, %v1067
        %v1190 = vadd.f32 %v913, %v1068
        %v1191 = vadd.f32 %v914, %v1070
        %v1192 = vadd.f32 %v915, %v1072
        %v1193 = vadd.f32 %v916, %v1073
        %v1194 = vadd.f32 %v917, %v1075
        %v1195 = vadd.f32 %v918, %v1077
        %v1196 = vadd.f32 %v919, %v1078
        %v1197 = vadd.f32 %v920, %v1080
        %v1198 = vadd.f32 %v921, %v1082
        %v1199 = vadd.f32 %v922, %v1083
        %v1200 = vadd.f32 %v923, %v1085
        %v1201 = vadd.f32 %v924, %v1087
        %v1202 = vadd.f32 %v925, %v1088
        %v1203 = vadd.f32 %v926, %v1090
        %v1204 = vadd.f32 %v927, %v1092
        %v1205 = vadd.f32 %v928, %v1093
        %v1206 = vadd.f32 %v929, %v1095
        %v1207 = vadd.f32 %v930, %v1097
        %v1208 = vadd.f32 %v931, %v1098
        %v1209 = vadd.f32 %v932, %v1100
        %v1210 = vadd.f32 %v933, %v1102
        %v1211 = vadd.f32 %v934, %v1103
        %v1212 = vadd.f32 %v935, %v1105
        %v1213 = vadd.f32 %v936, %v1107
        %v1214 = vadd.f32 %v937, %v1108
        %v1215 = vadd.f32 %v938, %v1110
        %v1216 = vadd.f32 %v939, %v1112
        %v1217 = vadd.f32 %v940, %v1113
        %v1218 = vadd.f32 %v941, %v1115
        %v1219 = vadd.f32 %v942, %v1117
        %v1220 = vadd.f32 %v943, %v1118
        %v1221 = vadd.f32 %v944, %v1120
        %v1222 = vadd.f32 %v945, %v1122
        %v1223 = vadd.f32 %v946, %v1123
        %v1224 = vadd.f32 %v947, %v1125
        %v1225 = vadd.f32 %v948, %v1127
        %v1226 = vadd.f32 %v949, %v1128
        %v1227 = vadd.f32 %v950, %v1130
        %v1228 = vadd.f32 %v951, %v1132
        %v1229 = vlaneseq
        %v1230 = vshrl.u32 %v1229, 7
        %v1231 = vsub.s32 3, %v1230
        %v1232 = vrot.slane %v685, %v1231
        %v1233 = vmul.f32 %v617, %v1232
        %v1234 = vmul.f32 %v618, %v1232
        %v1235 = vmul.f32 %v619, %v1232
        %v1236 = vmul.f32 %v621, %v1232
        %v1237 = vmul.f32 %v622, %v1232
        %v1238 = vmul.f32 %v623, %v1232
        %v1239 = vmul.f32 %v625, %v1232
        %v1240 = vmul.f32 %v626, %v1232
        %v1241 = vmul.f32 %v627, %v1232
        %v1242 = vmul.f32 %v629, %v1232
        %v1243 = vmul.f32 %v630, %v1232
        %v1244 = vmul.f32 %v631, %v1232
        %v1245 = vmul.f32 %v633, %v1232
        %v1246 = vmul.f32 %v634, %v1232
        %v1247 = vmul.f32 %v635, %v1232
        %v1248 = vmul.f32 %v637, %v1232
        %v1249 = vmul.f32 %v638, %v1232
        %v1250 = vmul.f32 %v639, %v1232
        %v1251 = vmul.f32 %v641, %v1232
        %v1252 = vmul.f32 %v642, %v1232
        %v1253 = vmul.f32 %v643, %v1232
        %v1254 = vmul.f32 %v645, %v1232
        %v1255 = vmul.f32 %v646, %v1232
        %v1256 = vmul.f32 %v647, %v1232
        %v1257 = vmul.f32 %v649, %v1232
        %v1258 = vmul.f32 %v650, %v1232
        %v1259 = vmul.f32 %v651, %v1232
        %v1260 = vmul.f32 %v653, %v1232
        %v1261 = vmul.f32 %v654, %v1232
        %v1262 = vmul.f32 %v655, %v1232
        %v1263 = vmul.f32 %v657, %v1232
        %v1264 = vmul.f32 %v658, %v1232
        %v1265 = vmul.f32 %v659, %v1232
        %v1266 = vmul.f32 %v661, %v1232
        %v1267 = vmul.f32 %v662, %v1232
        %v1268 = vmul.f32 %v663, %v1232
        %v1269 = vmul.f32 %v665, %v1232
        %v1270 = vmul.f32 %v666, %v1232
        %v1271 = vmul.f32 %v667, %v1232
        %v1272 = vmul.f32 %v669, %v1232
        %v1273 = vmul.f32 %v670, %v1232
        %v1274 = vmul.f32 %v671, %v1232
        %v1275 = vmul.f32 %v673, %v1232
        %v1276 = vmul.f32 %v674, %v1232
        %v1277 = vmul.f32 %v675, %v1232
        %v1278 = vmul.f32 %v677, %v1232
        %v1279 = vmul.f32 %v678, %v1232
        %v1280 = vmul.f32 %v679, %v1232
        %v1281 = vadd.f32 %v1181, %v1233
        %v1282 = vadd.f32 %v1182, %v1234
        %v1283 = vadd.f32 %v1183, %v1235
        %v1284 = vadd.f32 %v1184, %v1236
        %v1285 = vadd.f32 %v1185, %v1237
        %v1286 = vadd.f32 %v1186, %v1238
        %v1287 = vadd.f32 %v1187, %v1239
        %v1288 = vadd.f32 %v1188, %v1240
        %v1289 = vadd.f32 %v1189, %v1241
        %v1290 = vadd.f32 %v1190, %v1242
        %v1291 = vadd.f32 %v1191, %v1243
        %v1292 = vadd.f32 %v1192, %v1244
        %v1293 = vadd.f32 %v1193, %v1245
        %v1294 = vadd.f32 %v1194, %v1246
        %v1295 = vadd.f32 %v1195, %v1247
        %v1296 = vadd.f32 %v1196, %v1248
        %v1297 = vadd.f32 %v1197, %v1249
        %v1298 = vadd.f32 %v1198, %v1250
        %v1299 = vadd.f32 %v1199, %v1251
        %v1300 = vadd.f32 %v1200, %v1252
        %v1301 = vadd.f32 %v1201, %v1253
        %v1302 = vadd.f32 %v1202, %v1254
        %v1303 = vadd.f32 %v1203, %v1255
        %v1304 = vadd.f32 %v1204, %v1256
        %v1305 = vadd.f32 %v1205, %v1257
        %v1306 = vadd.f32 %v1206, %v1258
        %v1307 = vadd.f32 %v1207, %v1259
        %v1308 = vadd.f32 %v1208, %v1260
        %v1309 = vadd.f32 %v1209, %v1261
        %v1310 = vadd.f32 %v1210, %v1262
        %v1311 = vadd.f32 %v1211, %v1263
        %v1312 = vadd.f32 %v1212, %v1264
        %v1313 = vadd.f32 %v1213, %v1265
        %v1314 = vadd.f32 %v1214, %v1266
        %v1315 = vadd.f32 %v1215, %v1267
        %v1316 = vadd.f32 %v1216, %v1268
        %v1317 = vadd.f32 %v1217, %v1269
        %v1318 = vadd.f32 %v1218, %v1270
        %v1319 = vadd.f32 %v1219, %v1271
        %v1320 = vadd.f32 %v1220, %v1272
        %v1321 = vadd.f32 %v1221, %v1273
        %v1322 = vadd.f32 %v1222, %v1274
        %v1323 = vadd.f32 %v1223, %v1275
        %v1324 = vadd.f32 %v1224, %v1276
        %v1325 = vadd.f32 %v1225, %v1277
        %v1326 = vadd.f32 %v1226, %v1278
        %v1327 = vadd.f32 %v1227, %v1279
        %v1328 = vadd.f32 %v1228, %v1280
        %v1329 = vlaneseq
        %v1330 = vshrl.u32 %v1329, 7
        %v1331 = vsub.s32 4, %v1330
        %v1332 = vrot.slane %v685, %v1331
        %v1333 = vmul.f32 %v618, %v1332
        %v1334 = vmul.f32 %v619, %v1332
        %v1335 = vmul.f32 %v622, %v1332
        %v1336 = vmul.f32 %v623, %v1332
        %v1337 = vmul.f32 %v626, %v1332
        %v1338 = vmul.f32 %v627, %v1332
        %v1339 = vmul.f32 %v630, %v1332
        %v1340 = vmul.f32 %v631, %v1332
        %v1341 = vmul.f32 %v634, %v1332
        %v1342 = vmul.f32 %v635, %v1332
        %v1343 = vmul.f32 %v638, %v1332
        %v1344 = vmul.f32 %v639, %v1332
        %v1345 = vmul.f32 %v642, %v1332
        %v1346 = vmul.f32 %v643, %v1332
        %v1347 = vmul.f32 %v646, %v1332
        %v1348 = vmul.f32 %v647, %v1332
        %v1349 = vmul.f32 %v650, %v1332
        %v1350 = vmul.f32 %v651, %v1332
        %v1351 = vmul.f32 %v654, %v1332
        %v1352 = vmul.f32 %v655, %v1332
        %v1353 = vmul.f32 %v658, %v1332
        %v1354 = vmul.f32 %v659, %v1332
        %v1355 = vmul.f32 %v662, %v1332
        %v1356 = vmul.f32 %v663, %v1332
        %v1357 = vmul.f32 %v666, %v1332
        %v1358 = vmul.f32 %v667, %v1332
        %v1359 = vmul.f32 %v670, %v1332
        %v1360 = vmul.f32 %v671, %v1332
        %v1361 = vmul.f32 %v674, %v1332
        %v1362 = vmul.f32 %v675, %v1332
        %v1363 = vmul.f32 %v678, %v1332
        %v1364 = vmul.f32 %v679, %v1332
        %v1397 = vrot.slane %v1333, 1
        %v1398 = vrot.slane %v1334, 1
        %v1399 = vsel %vm807, %v1397, %v1398
        %v1400 = vrot.slane %v1335, 1
        %v1401 = vrot.slane %v1336, 1
        %v1402 = vsel %vm807, %v1400, %v1401
        %v1403 = vrot.slane %v1337, 1
        %v1404 = vrot.slane %v1338, 1
        %v1405 = vsel %vm807, %v1403, %v1404
        %v1406 = vrot.slane %v1339, 1
        %v1407 = vrot.slane %v1340, 1
        %v1408 = vsel %vm807, %v1406, %v1407
        %v1409 = vrot.slane %v1341, 1
        %v1410 = vrot.slane %v1342, 1
        %v1411 = vsel %vm807, %v1409, %v1410
        %v1412 = vrot.slane %v1343, 1
        %v1413 = vrot.slane %v1344, 1
        %v1414 = vsel %vm807, %v1412, %v1413
        %v1415 = vrot.slane %v1345, 1
        %v1416 = vrot.slane %v1346, 1
        %v1417 = vsel %vm807, %v1415, %v1416
        %v1418 = vrot.slane %v1347, 1
        %v1419 = vrot.slane %v1348, 1
        %v1420 = vsel %vm807, %v1418, %v1419
        %v1421 = vrot.slane %v1349, 1
        %v1422 = vrot.slane %v1350, 1
        %v1423 = vsel %vm807, %v1421, %v1422
        %v1424 = vrot.slane %v1351, 1
        %v1425 = vrot.slane %v1352, 1
        %v1426 = vsel %vm807, %v1424, %v1425
        %v1427 = vrot.slane %v1353, 1
        %v1428 = vrot.slane %v1354, 1
        %v1429 = vsel %vm807, %v1427, %v1428
        %v1430 = vrot.slane %v1355, 1
        %v1431 = vrot.slane %v1356, 1
        %v1432 = vsel %vm807, %v1430, %v1431
        %v1433 = vrot.slane %v1357, 1
        %v1434 = vrot.slane %v1358, 1
        %v1435 = vsel %vm807, %v1433, %v1434
        %v1436 = vrot.slane %v1359, 1
        %v1437 = vrot.slane %v1360, 1
        %v1438 = vsel %vm807, %v1436, %v1437
        %v1439 = vrot.slane %v1361, 1
        %v1440 = vrot.slane %v1362, 1
        %v1441 = vsel %vm807, %v1439, %v1440
        %v1442 = vrot.slane %v1363, 1
        %v1443 = vrot.slane %v1364, 1
        %v1444 = vsel %vm807, %v1442, %v1443
        %v1493 = vadd.f32 %v1281, %v1397
        %v1494 = vadd.f32 %v1282, %v1399
        %v1495 = vadd.f32 %v1283, %v1398
        %v1496 = vadd.f32 %v1284, %v1400
        %v1497 = vadd.f32 %v1285, %v1402
        %v1498 = vadd.f32 %v1286, %v1401
        %v1499 = vadd.f32 %v1287, %v1403
        %v1500 = vadd.f32 %v1288, %v1405
        %v1501 = vadd.f32 %v1289, %v1404
        %v1502 = vadd.f32 %v1290, %v1406
        %v1503 = vadd.f32 %v1291, %v1408
        %v1504 = vadd.f32 %v1292, %v1407
        %v1505 = vadd.f32 %v1293, %v1409
        %v1506 = vadd.f32 %v1294, %v1411
        %v1507 = vadd.f32 %v1295, %v1410
        %v1508 = vadd.f32 %v1296, %v1412
        %v1509 = vadd.f32 %v1297, %v1414
        %v1510 = vadd.f32 %v1298, %v1413
        %v1511 = vadd.f32 %v1299, %v1415
        %v1512 = vadd.f32 %v1300, %v1417
        %v1513 = vadd.f32 %v1301, %v1416
        %v1514 = vadd.f32 %v1302, %v1418
        %v1515 = vadd.f32 %v1303, %v1420
        %v1516 = vadd.f32 %v1304, %v1419
        %v1517 = vadd.f32 %v1305, %v1421
        %v1518 = vadd.f32 %v1306, %v1423
        %v1519 = vadd.f32 %v1307, %v1422
        %v1520 = vadd.f32 %v1308, %v1424
        %v1521 = vadd.f32 %v1309, %v1426
        %v1522 = vadd.f32 %v1310, %v1425
        %v1523 = vadd.f32 %v1311, %v1427
        %v1524 = vadd.f32 %v1312, %v1429
        %v1525 = vadd.f32 %v1313, %v1428
        %v1526 = vadd.f32 %v1314, %v1430
        %v1527 = vadd.f32 %v1315, %v1432
        %v1528 = vadd.f32 %v1316, %v1431
        %v1529 = vadd.f32 %v1317, %v1433
        %v1530 = vadd.f32 %v1318, %v1435
        %v1531 = vadd.f32 %v1319, %v1434
        %v1532 = vadd.f32 %v1320, %v1436
        %v1533 = vadd.f32 %v1321, %v1438
        %v1534 = vadd.f32 %v1322, %v1437
        %v1535 = vadd.f32 %v1323, %v1439
        %v1536 = vadd.f32 %v1324, %v1441
        %v1537 = vadd.f32 %v1325, %v1440
        %v1538 = vadd.f32 %v1326, %v1442
        %v1539 = vadd.f32 %v1327, %v1444
        %v1540 = vadd.f32 %v1328, %v1443
        %v1541 = vlaneseq
        %v1542 = vshrl.u32 %v1541, 7
        %v1543 = vsub.s32 5, %v1542
        %v1544 = vrot.slane %v685, %v1543
        %v1545 = vmul.f32 %v618, %v1544
        %v1546 = vmul.f32 %v619, %v1544
        %v1547 = vmul.f32 %v620, %v1544
        %v1548 = vmul.f32 %v622, %v1544
        %v1549 = vmul.f32 %v623, %v1544
        %v1550 = vmul.f32 %v624, %v1544
        %v1551 = vmul.f32 %v626, %v1544
        %v1552 = vmul.f32 %v627, %v1544
        %v1553 = vmul.f32 %v628, %v1544
        %v1554 = vmul.f32 %v630, %v1544
        %v1555 = vmul.f32 %v631, %v1544
        %v1556 = vmul.f32 %v632, %v1544
        %v1557 = vmul.f32 %v634, %v1544
        %v1558 = vmul.f32 %v635, %v1544
        %v1559 = vmul.f32 %v636, %v1544
        %v1560 = vmul.f32 %v638, %v1544
        %v1561 = vmul.f32 %v639, %v1544
        %v1562 = vmul.f32 %v640, %v1544
        %v1563 = vmul.f32 %v642, %v1544
        %v1564 = vmul.f32 %v643, %v1544
        %v1565 = vmul.f32 %v644, %v1544
        %v1566 = vmul.f32 %v646, %v1544
        %v1567 = vmul.f32 %v647, %v1544
        %v1568 = vmul.f32 %v648, %v1544
        %v1569 = vmul.f32 %v650, %v1544
        %v1570 = vmul.f32 %v651, %v1544
        %v1571 = vmul.f32 %v652, %v1544
        %v1572 = vmul.f32 %v654, %v1544
        %v1573 = vmul.f32 %v655, %v1544
        %v1574 = vmul.f32 %v656, %v1544
        %v1575 = vmul.f32 %v658, %v1544
        %v1576 = vmul.f32 %v659, %v1544
        %v1577 = vmul.f32 %v660, %v1544
        %v1578 = vmul.f32 %v662, %v1544
        %v1579 = vmul.f32 %v663, %v1544
        %v1580 = vmul.f32 %v664, %v1544
        %v1581 = vmul.f32 %v666, %v1544
        %v1582 = vmul.f32 %v667, %v1544
        %v1583 = vmul.f32 %v668, %v1544
        %v1584 = vmul.f32 %v670, %v1544
        %v1585 = vmul.f32 %v671, %v1544
        %v1586 = vmul.f32 %v672, %v1544
        %v1587 = vmul.f32 %v674, %v1544
        %v1588 = vmul.f32 %v675, %v1544
        %v1589 = vmul.f32 %v676, %v1544
        %v1590 = vmul.f32 %v678, %v1544
        %v1591 = vmul.f32 %v679, %v1544
        %v1592 = vmul.f32 %v680, %v1544
        %v1641 = vrot.slane %v1545, 2
        %v1642 = vrot.slane %v1546, 2
        %v1643 = vsel %vm1052, %v1641, %v1642
        %v1644 = vrot.slane %v1547, 2
        %v1645 = vsel %vm1052, %v1642, %v1644
        %v1646 = vrot.slane %v1548, 2
        %v1647 = vrot.slane %v1549, 2
        %v1648 = vsel %vm1052, %v1646, %v1647
        %v1649 = vrot.slane %v1550, 2
        %v1650 = vsel %vm1052, %v1647, %v1649
        %v1651 = vrot.slane %v1551, 2
        %v1652 = vrot.slane %v1552, 2
        %v1653 = vsel %vm1052, %v1651, %v1652
        %v1654 = vrot.slane %v1553, 2
        %v1655 = vsel %vm1052, %v1652, %v1654
        %v1656 = vrot.slane %v1554, 2
        %v1657 = vrot.slane %v1555, 2
        %v1658 = vsel %vm1052, %v1656, %v1657
        %v1659 = vrot.slane %v1556, 2
        %v1660 = vsel %vm1052, %v1657, %v1659
        %v1661 = vrot.slane %v1557, 2
        %v1662 = vrot.slane %v1558, 2
        %v1663 = vsel %vm1052, %v1661, %v1662
        %v1664 = vrot.slane %v1559, 2
        %v1665 = vsel %vm1052, %v1662, %v1664
        %v1666 = vrot.slane %v1560, 2
        %v1667 = vrot.slane %v1561, 2
        %v1668 = vsel %vm1052, %v1666, %v1667
        %v1669 = vrot.slane %v1562, 2
        %v1670 = vsel %vm1052, %v1667, %v1669
        %v1671 = vrot.slane %v1563, 2
        %v1672 = vrot.slane %v1564, 2
        %v1673 = vsel %vm1052, %v1671, %v1672
        %v1674 = vrot.slane %v1565, 2
        %v1675 = vsel %vm1052, %v1672, %v1674
        %v1676 = vrot.slane %v1566, 2
        %v1677 = vrot.slane %v1567, 2
        %v1678 = vsel %vm1052, %v1676, %v1677
        %v1679 = vrot.slane %v1568, 2
        %v1680 = vsel %vm1052, %v1677, %v1679
        %v1681 = vrot.slane %v1569, 2
        %v1682 = vrot.slane %v1570, 2
        %v1683 = vsel %vm1052, %v1681, %v1682
        %v1684 = vrot.slane %v1571, 2
        %v1685 = vsel %vm1052, %v1682, %v1684
        %v1686 = vrot.slane %v1572, 2
        %v1687 = vrot.slane %v1573, 2
        %v1688 = vsel %vm1052, %v1686, %v1687
        %v1689 = vrot.slane %v1574, 2
        %v1690 = vsel %vm1052, %v1687, %v1689
        %v1691 = vrot.slane %v1575, 2
        %v1692 = vrot.slane %v1576, 2
        %v1693 = vsel %vm1052, %v1691, %v1692
        %v1694 = vrot.slane %v1577, 2
        %v1695 = vsel %vm1052, %v1692, %v1694
        %v1696 = vrot.slane %v1578, 2
        %v1697 = vrot.slane %v1579, 2
        %v1698 = vsel %vm1052, %v1696, %v1697
        %v1699 = vrot.slane %v1580, 2
        %v1700 = vsel %vm1052, %v1697, %v1699
        %v1701 = vrot.slane %v1581, 2
        %v1702 = vrot.slane %v1582, 2
        %v1703 = vsel %vm1052, %v1701, %v1702
        %v1704 = vrot.slane %v1583, 2
        %v1705 = vsel %vm1052, %v1702, %v1704
        %v1706 = vrot.slane %v1584, 2
        %v1707 = vrot.slane %v1585, 2
        %v1708 = vsel %vm1052, %v1706, %v1707
        %v1709 = vrot.slane %v1586, 2
        %v1710 = vsel %vm1052, %v1707, %v1709
        %v1711 = vrot.slane %v1587, 2
        %v1712 = vrot.slane %v1588, 2
        %v1713 = vsel %vm1052, %v1711, %v1712
        %v1714 = vrot.slane %v1589, 2
        %v1715 = vsel %vm1052, %v1712, %v1714
        %v1716 = vrot.slane %v1590, 2
        %v1717 = vrot.slane %v1591, 2
        %v1718 = vsel %vm1052, %v1716, %v1717
        %v1719 = vrot.slane %v1592, 2
        %v1720 = vsel %vm1052, %v1717, %v1719
        %v1769 = vadd.f32 %v1493, %v1641
        %v1770 = vadd.f32 %v1494, %v1643
        %v1771 = vadd.f32 %v1495, %v1645
        %v1772 = vadd.f32 %v1496, %v1646
        %v1773 = vadd.f32 %v1497, %v1648
        %v1774 = vadd.f32 %v1498, %v1650
        %v1775 = vadd.f32 %v1499, %v1651
        %v1776 = vadd.f32 %v1500, %v1653
        %v1777 = vadd.f32 %v1501, %v1655
        %v1778 = vadd.f32 %v1502, %v1656
        %v1779 = vadd.f32 %v1503, %v1658
        %v1780 = vadd.f32 %v1504, %v1660
        %v1781 = vadd.f32 %v1505, %v1661
        %v1782 = vadd.f32 %v1506, %v1663
        %v1783 = vadd.f32 %v1507, %v1665
        %v1784 = vadd.f32 %v1508, %v1666
        %v1785 = vadd.f32 %v1509, %v1668
        %v1786 = vadd.f32 %v1510, %v1670
        %v1787 = vadd.f32 %v1511, %v1671
        %v1788 = vadd.f32 %v1512, %v1673
        %v1789 = vadd.f32 %v1513, %v1675
        %v1790 = vadd.f32 %v1514, %v1676
        %v1791 = vadd.f32 %v1515, %v1678
        %v1792 = vadd.f32 %v1516, %v1680
        %v1793 = vadd.f32 %v1517, %v1681
        %v1794 = vadd.f32 %v1518, %v1683
        %v1795 = vadd.f32 %v1519, %v1685
        %v1796 = vadd.f32 %v1520, %v1686
        %v1797 = vadd.f32 %v1521, %v1688
        %v1798 = vadd.f32 %v1522, %v1690
        %v1799 = vadd.f32 %v1523, %v1691
        %v1800 = vadd.f32 %v1524, %v1693
        %v1801 = vadd.f32 %v1525, %v1695
        %v1802 = vadd.f32 %v1526, %v1696
        %v1803 = vadd.f32 %v1527, %v1698
        %v1804 = vadd.f32 %v1528, %v1700
        %v1805 = vadd.f32 %v1529, %v1701
        %v1806 = vadd.f32 %v1530, %v1703
        %v1807 = vadd.f32 %v1531, %v1705
        %v1808 = vadd.f32 %v1532, %v1706
        %v1809 = vadd.f32 %v1533, %v1708
        %v1810 = vadd.f32 %v1534, %v1710
        %v1811 = vadd.f32 %v1535, %v1711
        %v1812 = vadd.f32 %v1536, %v1713
        %v1813 = vadd.f32 %v1537, %v1715
        %v1814 = vadd.f32 %v1538, %v1716
        %v1815 = vadd.f32 %v1539, %v1718
        %v1816 = vadd.f32 %v1540, %v1720
        %v1817 = vlaneseq
        %v1818 = vshrl.u32 %v1817, 7
        %v1819 = vsub.s32 6, %v1818
        %v1820 = vrot.slane %v685, %v1819
        %v1821 = vmul.f32 %v621, %v1820
        %v1822 = vmul.f32 %v622, %v1820
        %v1823 = vmul.f32 %v623, %v1820
        %v1824 = vmul.f32 %v625, %v1820
        %v1825 = vmul.f32 %v626, %v1820
        %v1826 = vmul.f32 %v627, %v1820
        %v1827 = vmul.f32 %v629, %v1820
        %v1828 = vmul.f32 %v630, %v1820
        %v1829 = vmul.f32 %v631, %v1820
        %v1830 = vmul.f32 %v633, %v1820
        %v1831 = vmul.f32 %v634, %v1820
        %v1832 = vmul.f32 %v635, %v1820
        %v1833 = vmul.f32 %v637, %v1820
        %v1834 = vmul.f32 %v638, %v1820
        %v1835 = vmul.f32 %v639, %v1820
        %v1836 = vmul.f32 %v641, %v1820
        %v1837 = vmul.f32 %v642, %v1820
        %v1838 = vmul.f32 %v643, %v1820
        %v1839 = vmul.f32 %v645, %v1820
        %v1840 = vmul.f32 %v646, %v1820
        %v1841 = vmul.f32 %v647, %v1820
        %v1842 = vmul.f32 %v649, %v1820
        %v1843 = vmul.f32 %v650, %v1820
        %v1844 = vmul.f32 %v651, %v1820
        %v1845 = vmul.f32 %v653, %v1820
        %v1846 = vmul.f32 %v654, %v1820
        %v1847 = vmul.f32 %v655, %v1820
        %v1848 = vmul.f32 %v657, %v1820
        %v1849 = vmul.f32 %v658, %v1820
        %v1850 = vmul.f32 %v659, %v1820
        %v1851 = vmul.f32 %v661, %v1820
        %v1852 = vmul.f32 %v662, %v1820
        %v1853 = vmul.f32 %v663, %v1820
        %v1854 = vmul.f32 %v665, %v1820
        %v1855 = vmul.f32 %v666, %v1820
        %v1856 = vmul.f32 %v667, %v1820
        %v1857 = vmul.f32 %v669, %v1820
        %v1858 = vmul.f32 %v670, %v1820
        %v1859 = vmul.f32 %v671, %v1820
        %v1860 = vmul.f32 %v673, %v1820
        %v1861 = vmul.f32 %v674, %v1820
        %v1862 = vmul.f32 %v675, %v1820
        %v1863 = vmul.f32 %v677, %v1820
        %v1864 = vmul.f32 %v678, %v1820
        %v1865 = vmul.f32 %v679, %v1820
        %v1866 = vmul.f32 %v681, %v1820
        %v1867 = vmul.f32 %v682, %v1820
        %v1868 = vmul.f32 %v683, %v1820
        %v1869 = vadd.f32 %v1769, %v1821
        %v1870 = vadd.f32 %v1770, %v1822
        %v1871 = vadd.f32 %v1771, %v1823
        %v1872 = vadd.f32 %v1772, %v1824
        %v1873 = vadd.f32 %v1773, %v1825
        %v1874 = vadd.f32 %v1774, %v1826
        %v1875 = vadd.f32 %v1775, %v1827
        %v1876 = vadd.f32 %v1776, %v1828
        %v1877 = vadd.f32 %v1777, %v1829
        %v1878 = vadd.f32 %v1778, %v1830
        %v1879 = vadd.f32 %v1779, %v1831
        %v1880 = vadd.f32 %v1780, %v1832
        %v1881 = vadd.f32 %v1781, %v1833
        %v1882 = vadd.f32 %v1782, %v1834
        %v1883 = vadd.f32 %v1783, %v1835
        %v1884 = vadd.f32 %v1784, %v1836
        %v1885 = vadd.f32 %v1785, %v1837
        %v1886 = vadd.f32 %v1786, %v1838
        %v1887 = vadd.f32 %v1787, %v1839
        %v1888 = vadd.f32 %v1788, %v1840
        %v1889 = vadd.f32 %v1789, %v1841
        %v1890 = vadd.f32 %v1790, %v1842
        %v1891 = vadd.f32 %v1791, %v1843
        %v1892 = vadd.f32 %v1792, %v1844
        %v1893 = vadd.f32 %v1793, %v1845
        %v1894 = vadd.f32 %v1794, %v1846
        %v1895 = vadd.f32 %v1795, %v1847
        %v1896 = vadd.f32 %v1796, %v1848
        %v1897 = vadd.f32 %v1797, %v1849
        %v1898 = vadd.f32 %v1798, %v1850
        %v1899 = vadd.f32 %v1799, %v1851
        %v1900 = vadd.f32 %v1800, %v1852
        %v1901 = vadd.f32 %v1801, %v1853
        %v1902 = vadd.f32 %v1802, %v1854
        %v1903 = vadd.f32 %v1803, %v1855
        %v1904 = vadd.f32 %v1804, %v1856
        %v1905 = vadd.f32 %v1805, %v1857
        %v1906 = vadd.f32 %v1806, %v1858
        %v1907 = vadd.f32 %v1807, %v1859
        %v1908 = vadd.f32 %v1808, %v1860
        %v1909 = vadd.f32 %v1809, %v1861
        %v1910 = vadd.f32 %v1810, %v1862
        %v1911 = vadd.f32 %v1811, %v1863
        %v1912 = vadd.f32 %v1812, %v1864
        %v1913 = vadd.f32 %v1813, %v1865
        %v1914 = vadd.f32 %v1814, %v1866
        %v1915 = vadd.f32 %v1815, %v1867
        %v1916 = vadd.f32 %v1816, %v1868
        %v1917 = vlaneseq
        %v1918 = vshrl.u32 %v1917, 7
        %v1919 = vsub.s32 7, %v1918
        %v1920 = vrot.slane %v685, %v1919
        %v1921 = vmul.f32 %v622, %v1920
        %v1922 = vmul.f32 %v623, %v1920
        %v1923 = vmul.f32 %v626, %v1920
        %v1924 = vmul.f32 %v627, %v1920
        %v1925 = vmul.f32 %v630, %v1920
        %v1926 = vmul.f32 %v631, %v1920
        %v1927 = vmul.f32 %v634, %v1920
        %v1928 = vmul.f32 %v635, %v1920
        %v1929 = vmul.f32 %v638, %v1920
        %v1930 = vmul.f32 %v639, %v1920
        %v1931 = vmul.f32 %v642, %v1920
        %v1932 = vmul.f32 %v643, %v1920
        %v1933 = vmul.f32 %v646, %v1920
        %v1934 = vmul.f32 %v647, %v1920
        %v1935 = vmul.f32 %v650, %v1920
        %v1936 = vmul.f32 %v651, %v1920
        %v1937 = vmul.f32 %v654, %v1920
        %v1938 = vmul.f32 %v655, %v1920
        %v1939 = vmul.f32 %v658, %v1920
        %v1940 = vmul.f32 %v659, %v1920
        %v1941 = vmul.f32 %v662, %v1920
        %v1942 = vmul.f32 %v663, %v1920
        %v1943 = vmul.f32 %v666, %v1920
        %v1944 = vmul.f32 %v667, %v1920
        %v1945 = vmul.f32 %v670, %v1920
        %v1946 = vmul.f32 %v671, %v1920
        %v1947 = vmul.f32 %v674, %v1920
        %v1948 = vmul.f32 %v675, %v1920
        %v1949 = vmul.f32 %v678, %v1920
        %v1950 = vmul.f32 %v679, %v1920
        %v1951 = vmul.f32 %v682, %v1920
        %v1952 = vmul.f32 %v683, %v1920
        %v1985 = vrot.slane %v1921, 1
        %v1986 = vrot.slane %v1922, 1
        %v1987 = vsel %vm807, %v1985, %v1986
        %v1988 = vrot.slane %v1923, 1
        %v1989 = vrot.slane %v1924, 1
        %v1990 = vsel %vm807, %v1988, %v1989
        %v1991 = vrot.slane %v1925, 1
        %v1992 = vrot.slane %v1926, 1
        %v1993 = vsel %vm807, %v1991, %v1992
        %v1994 = vrot.slane %v1927, 1
        %v1995 = vrot.slane %v1928, 1
        %v1996 = vsel %vm807, %v1994, %v1995
        %v1997 = vrot.slane %v1929, 1
        %v1998 = vrot.slane %v1930, 1
        %v1999 = vsel %vm807, %v1997, %v1998
        %v2000 = vrot.slane %v1931, 1
        %v2001 = vrot.slane %v1932, 1
        %v2002 = vsel %vm807, %v2000, %v2001
        %v2003 = vrot.slane %v1933, 1
        %v2004 = vrot.slane %v1934, 1
        %v2005 = vsel %vm807, %v2003, %v2004
        %v2006 = vrot.slane %v1935, 1
        %v2007 = vrot.slane %v1936, 1
        %v2008 = vsel %vm807, %v2006, %v2007
        %v2009 = vrot.slane %v1937, 1
        %v2010 = vrot.slane %v1938, 1
        %v2011 = vsel %vm807, %v2009, %v2010
        %v2012 = vrot.slane %v1939, 1
        %v2013 = vrot.slane %v1940, 1
        %v2014 = vsel %vm807, %v2012, %v2013
        %v2015 = vrot.slane %v1941, 1
        %v2016 = vrot.slane %v1942, 1
        %v2017 = vsel %vm807, %v2015, %v2016
        %v2018 = vrot.slane %v1943, 1
        %v2019 = vrot.slane %v1944, 1
        %v2020 = vsel %vm807, %v2018, %v2019
        %v2021 = vrot.slane %v1945, 1
        %v2022 = vrot.slane %v1946, 1
        %v2023 = vsel %vm807, %v2021, %v2022
        %v2024 = vrot.slane %v1947, 1
        %v2025 = vrot.slane %v1948, 1
        %v2026 = vsel %vm807, %v2024, %v2025
        %v2027 = vrot.slane %v1949, 1
        %v2028 = vrot.slane %v1950, 1
        %v2029 = vsel %vm807, %v2027, %v2028
        %v2030 = vrot.slane %v1951, 1
        %v2031 = vrot.slane %v1952, 1
        %v2032 = vsel %vm807, %v2030, %v2031
        %v2081 = vadd.f32 %v1869, %v1985
        %v2082 = vadd.f32 %v1870, %v1987
        %v2083 = vadd.f32 %v1871, %v1986
        %v2084 = vadd.f32 %v1872, %v1988
        %v2085 = vadd.f32 %v1873, %v1990
        %v2086 = vadd.f32 %v1874, %v1989
        %v2087 = vadd.f32 %v1875, %v1991
        %v2088 = vadd.f32 %v1876, %v1993
        %v2089 = vadd.f32 %v1877, %v1992
        %v2090 = vadd.f32 %v1878, %v1994
        %v2091 = vadd.f32 %v1879, %v1996
        %v2092 = vadd.f32 %v1880, %v1995
        %v2093 = vadd.f32 %v1881, %v1997
        %v2094 = vadd.f32 %v1882, %v1999
        %v2095 = vadd.f32 %v1883, %v1998
        %v2096 = vadd.f32 %v1884, %v2000
        %v2097 = vadd.f32 %v1885, %v2002
        %v2098 = vadd.f32 %v1886, %v2001
        %v2099 = vadd.f32 %v1887, %v2003
        %v2100 = vadd.f32 %v1888, %v2005
        %v2101 = vadd.f32 %v1889, %v2004
        %v2102 = vadd.f32 %v1890, %v2006
        %v2103 = vadd.f32 %v1891, %v2008
        %v2104 = vadd.f32 %v1892, %v2007
        %v2105 = vadd.f32 %v1893, %v2009
        %v2106 = vadd.f32 %v1894, %v2011
        %v2107 = vadd.f32 %v1895, %v2010
        %v2108 = vadd.f32 %v1896, %v2012
        %v2109 = vadd.f32 %v1897, %v2014
        %v2110 = vadd.f32 %v1898, %v2013
        %v2111 = vadd.f32 %v1899, %v2015
        %v2112 = vadd.f32 %v1900, %v2017
        %v2113 = vadd.f32 %v1901, %v2016
        %v2114 = vadd.f32 %v1902, %v2018
        %v2115 = vadd.f32 %v1903, %v2020
        %v2116 = vadd.f32 %v1904, %v2019
        %v2117 = vadd.f32 %v1905, %v2021
        %v2118 = vadd.f32 %v1906, %v2023
        %v2119 = vadd.f32 %v1907, %v2022
        %v2120 = vadd.f32 %v1908, %v2024
        %v2121 = vadd.f32 %v1909, %v2026
        %v2122 = vadd.f32 %v1910, %v2025
        %v2123 = vadd.f32 %v1911, %v2027
        %v2124 = vadd.f32 %v1912, %v2029
        %v2125 = vadd.f32 %v1913, %v2028
        %v2126 = vadd.f32 %v1914, %v2030
        %v2127 = vadd.f32 %v1915, %v2032
        %v2128 = vadd.f32 %v1916, %v2031
        %v2129 = vlaneseq
        %v2130 = vshrl.u32 %v2129, 7
        %v2131 = vsub.s32 0, %v2130
        %v2132 = vrot.slane %v686, %v2131
        %v2133 = vmul.f32 %v622, %v2132
        %v2134 = vmul.f32 %v623, %v2132
        %v2135 = vmul.f32 %v624, %v2132
        %v2136 = vmul.f32 %v626, %v2132
        %v2137 = vmul.f32 %v627, %v2132
        %v2138 = vmul.f32 %v628, %v2132
        %v2139 = vmul.f32 %v630, %v2132
        %v2140 = vmul.f32 %v631, %v2132
        %v2141 = vmul.f32 %v632, %v2132
        %v2142 = vmul.f32 %v634, %v2132
        %v2143 = vmul.f32 %v635, %v2132
        %v2144 = vmul.f32 %v636, %v2132
        %v2145 = vmul.f32 %v638, %v2132
        %v2146 = vmul.f32 %v639, %v2132
        %v2147 = vmul.f32 %v640, %v2132
        %v2148 = vmul.f32 %v642, %v2132
        %v2149 = vmul.f32 %v643, %v2132
        %v2150 = vmul.f32 %v644, %v2132
        %v2151 = vmul.f32 %v646, %v2132
        %v2152 = vmul.f32 %v647, %v2132
        %v2153 = vmul.f32 %v648, %v2132
        %v2154 = vmul.f32 %v650, %v2132
        %v2155 = vmul.f32 %v651, %v2132
        %v2156 = vmul.f32 %v652, %v2132
        %v2157 = vmul.f32 %v654, %v2132
        %v2158 = vmul.f32 %v655, %v2132
        %v2159 = vmul.f32 %v656, %v2132
        %v2160 = vmul.f32 %v658, %v2132
        %v2161 = vmul.f32 %v659, %v2132
        %v2162 = vmul.f32 %v660, %v2132
        %v2163 = vmul.f32 %v662, %v2132
        %v2164 = vmul.f32 %v663, %v2132
        %v2165 = vmul.f32 %v664, %v2132
        %v2166 = vmul.f32 %v666, %v2132
        %v2167 = vmul.f32 %v667, %v2132
        %v2168 = vmul.f32 %v668, %v2132
        %v2169 = vmul.f32 %v670, %v2132
        %v2170 = vmul.f32 %v671, %v2132
        %v2171 = vmul.f32 %v672, %v2132
        %v2172 = vmul.f32 %v674, %v2132
        %v2173 = vmul.f32 %v675, %v2132
        %v2174 = vmul.f32 %v676, %v2132
        %v2175 = vmul.f32 %v678, %v2132
        %v2176 = vmul.f32 %v679, %v2132
        %v2177 = vmul.f32 %v680, %v2132
        %v2178 = vmul.f32 %v682, %v2132
        %v2179 = vmul.f32 %v683, %v2132
        %v2180 = vmul.f32 %v684, %v2132
        %v2229 = vrot.slane %v2133, 2
        %v2230 = vrot.slane %v2134, 2
        %v2231 = vsel %vm1052, %v2229, %v2230
        %v2232 = vrot.slane %v2135, 2
        %v2233 = vsel %vm1052, %v2230, %v2232
        %v2234 = vrot.slane %v2136, 2
        %v2235 = vrot.slane %v2137, 2
        %v2236 = vsel %vm1052, %v2234, %v2235
        %v2237 = vrot.slane %v2138, 2
        %v2238 = vsel %vm1052, %v2235, %v2237
        %v2239 = vrot.slane %v2139, 2
        %v2240 = vrot.slane %v2140, 2
        %v2241 = vsel %vm1052, %v2239, %v2240
        %v2242 = vrot.slane %v2141, 2
        %v2243 = vsel %vm1052, %v2240, %v2242
        %v2244 = vrot.slane %v2142, 2
        %v2245 = vrot.slane %v2143, 2
        %v2246 = vsel %vm1052, %v2244, %v2245
        %v2247 = vrot.slane %v2144, 2
        %v2248 = vsel %vm1052, %v2245, %v2247
        %v2249 = vrot.slane %v2145, 2
        %v2250 = vrot.slane %v2146, 2
        %v2251 = vsel %vm1052, %v2249, %v2250
        %v2252 = vrot.slane %v2147, 2
        %v2253 = vsel %vm1052, %v2250, %v2252
        %v2254 = vrot.slane %v2148, 2
        %v2255 = vrot.slane %v2149, 2
        %v2256 = vsel %vm1052, %v2254, %v2255
        %v2257 = vrot.slane %v2150, 2
        %v2258 = vsel %vm1052, %v2255, %v2257
        %v2259 = vrot.slane %v2151, 2
        %v2260 = vrot.slane %v2152, 2
        %v2261 = vsel %vm1052, %v2259, %v2260
        %v2262 = vrot.slane %v2153, 2
        %v2263 = vsel %vm1052, %v2260, %v2262
        %v2264 = vrot.slane %v2154, 2
        %v2265 = vrot.slane %v2155, 2
        %v2266 = vsel %vm1052, %v2264, %v2265
        %v2267 = vrot.slane %v2156, 2
        %v2268 = vsel %vm1052, %v2265, %v2267
        %v2269 = vrot.slane %v2157, 2
        %v2270 = vrot.slane %v2158, 2
        %v2271 = vsel %vm1052, %v2269, %v2270
        %v2272 = vrot.slane %v2159, 2
        %v2273 = vsel %vm1052, %v2270, %v2272
        %v2274 = vrot.slane %v2160, 2
        %v2275 = vrot.slane %v2161, 2
        %v2276 = vsel %vm1052, %v2274, %v2275
        %v2277 = vrot.slane %v2162, 2
        %v2278 = vsel %vm1052, %v2275, %v2277
        %v2279 = vrot.slane %v2163, 2
        %v2280 = vrot.slane %v2164, 2
        %v2281 = vsel %vm1052, %v2279, %v2280
        %v2282 = vrot.slane %v2165, 2
        %v2283 = vsel %vm1052, %v2280, %v2282
        %v2284 = vrot.slane %v2166, 2
        %v2285 = vrot.slane %v2167, 2
        %v2286 = vsel %vm1052, %v2284, %v2285
        %v2287 = vrot.slane %v2168, 2
        %v2288 = vsel %vm1052, %v2285, %v2287
        %v2289 = vrot.slane %v2169, 2
        %v2290 = vrot.slane %v2170, 2
        %v2291 = vsel %vm1052, %v2289, %v2290
        %v2292 = vrot.slane %v2171, 2
        %v2293 = vsel %vm1052, %v2290, %v2292
        %v2294 = vrot.slane %v2172, 2
        %v2295 = vrot.slane %v2173, 2
        %v2296 = vsel %vm1052, %v2294, %v2295
        %v2297 = vrot.slane %v2174, 2
        %v2298 = vsel %vm1052, %v2295, %v2297
        %v2299 = vrot.slane %v2175, 2
        %v2300 = vrot.slane %v2176, 2
        %v2301 = vsel %vm1052, %v2299, %v2300
        %v2302 = vrot.slane %v2177, 2
        %v2303 = vsel %vm1052, %v2300, %v2302
        %v2304 = vrot.slane %v2178, 2
        %v2305 = vrot.slane %v2179, 2
        %v2306 = vsel %vm1052, %v2304, %v2305
        %v2307 = vrot.slane %v2180, 2
        %v2308 = vsel %vm1052, %v2305, %v2307
        %v2357 = vadd.f32 %v2081, %v2229
        %v2358 = vadd.f32 %v2082, %v2231
        %v2359 = vadd.f32 %v2083, %v2233
        %v2360 = vadd.f32 %v2084, %v2234
        %v2361 = vadd.f32 %v2085, %v2236
        %v2362 = vadd.f32 %v2086, %v2238
        %v2363 = vadd.f32 %v2087, %v2239
        %v2364 = vadd.f32 %v2088, %v2241
        %v2365 = vadd.f32 %v2089, %v2243
        %v2366 = vadd.f32 %v2090, %v2244
        %v2367 = vadd.f32 %v2091, %v2246
        %v2368 = vadd.f32 %v2092, %v2248
        %v2369 = vadd.f32 %v2093, %v2249
        %v2370 = vadd.f32 %v2094, %v2251
        %v2371 = vadd.f32 %v2095, %v2253
        %v2372 = vadd.f32 %v2096, %v2254
        %v2373 = vadd.f32 %v2097, %v2256
        %v2374 = vadd.f32 %v2098, %v2258
        %v2375 = vadd.f32 %v2099, %v2259
        %v2376 = vadd.f32 %v2100, %v2261
        %v2377 = vadd.f32 %v2101, %v2263
        %v2378 = vadd.f32 %v2102, %v2264
        %v2379 = vadd.f32 %v2103, %v2266
        %v2380 = vadd.f32 %v2104, %v2268
        %v2381 = vadd.f32 %v2105, %v2269
        %v2382 = vadd.f32 %v2106, %v2271
        %v2383 = vadd.f32 %v2107, %v2273
        %v2384 = vadd.f32 %v2108, %v2274
        %v2385 = vadd.f32 %v2109, %v2276
        %v2386 = vadd.f32 %v2110, %v2278
        %v2387 = vadd.f32 %v2111, %v2279
        %v2388 = vadd.f32 %v2112, %v2281
        %v2389 = vadd.f32 %v2113, %v2283
        %v2390 = vadd.f32 %v2114, %v2284
        %v2391 = vadd.f32 %v2115, %v2286
        %v2392 = vadd.f32 %v2116, %v2288
        %v2393 = vadd.f32 %v2117, %v2289
        %v2394 = vadd.f32 %v2118, %v2291
        %v2395 = vadd.f32 %v2119, %v2293
        %v2396 = vadd.f32 %v2120, %v2294
        %v2397 = vadd.f32 %v2121, %v2296
        %v2398 = vadd.f32 %v2122, %v2298
        %v2399 = vadd.f32 %v2123, %v2299
        %v2400 = vadd.f32 %v2124, %v2301
        %v2401 = vadd.f32 %v2125, %v2303
        %v2402 = vadd.f32 %v2126, %v2304
        %v2403 = vadd.f32 %v2127, %v2306
        %v2404 = vadd.f32 %v2128, %v2308
        %v2405 = vld [vmem:[%s2] sm:$0x1]
        %v2407 = vlaneseq
        %v2408 = vshrl.u32 %v2407, 7
        %v2409 = vsub.s32 0, %v2408
        %v2410 = vrot.slane %v2405, %v2409
        %v2412 = vadd.f32 %v2357, %v2410
        %v2413 = vadd.f32 %v2358, %v2410
        %v2414 = vadd.f32 %v2359, %v2410
        %v2415 = vadd.f32 %v2360, %v2410
        %v2416 = vadd.f32 %v2361, %v2410
        %v2417 = vadd.f32 %v2362, %v2410
        %v2418 = vadd.f32 %v2363, %v2410
        %v2419 = vadd.f32 %v2364, %v2410
        %v2420 = vadd.f32 %v2365, %v2410
        %v2421 = vadd.f32 %v2366, %v2410
        %v2422 = vadd.f32 %v2367, %v2410
        %v2423 = vadd.f32 %v2368, %v2410
        %v2424 = vadd.f32 %v2369, %v2410
        %v2425 = vadd.f32 %v2370, %v2410
        %v2426 = vadd.f32 %v2371, %v2410
        %v2427 = vadd.f32 %v2372, %v2410
        %v2428 = vadd.f32 %v2373, %v2410
        %v2429 = vadd.f32 %v2374, %v2410
        %v2430 = vadd.f32 %v2375, %v2410
        %v2431 = vadd.f32 %v2376, %v2410
        %v2432 = vadd.f32 %v2377, %v2410
        %v2433 = vadd.f32 %v2378, %v2410
        %v2434 = vadd.f32 %v2379, %v2410
        %v2435 = vadd.f32 %v2380, %v2410
        %v2436 = vadd.f32 %v2381, %v2410
        %v2437 = vadd.f32 %v2382, %v2410
        %v2438 = vadd.f32 %v2383, %v2410
        %v2439 = vadd.f32 %v2384, %v2410
        %v2440 = vadd.f32 %v2385, %v2410
        %v2441 = vadd.f32 %v2386, %v2410
        %v2442 = vadd.f32 %v2387, %v2410
        %v2443 = vadd.f32 %v2388, %v2410
        %v2444 = vadd.f32 %v2389, %v2410
        %v2445 = vadd.f32 %v2390, %v2410
        %v2446 = vadd.f32 %v2391, %v2410
        %v2447 = vadd.f32 %v2392, %v2410
        %v2448 = vadd.f32 %v2393, %v2410
        %v2449 = vadd.f32 %v2394, %v2410
        %v2450 = vadd.f32 %v2395, %v2410
        %v2451 = vadd.f32 %v2396, %v2410
        %v2452 = vadd.f32 %v2397, %v2410
        %v2453 = vadd.f32 %v2398, %v2410
        %v2454 = vadd.f32 %v2399, %v2410
        %v2455 = vadd.f32 %v2400, %v2410
        %v2456 = vadd.f32 %v2401, %v2410
        %v2457 = vadd.f32 %v2402, %v2410
        %v2458 = vadd.f32 %v2403, %v2410
        %v2459 = vadd.f32 %v2404, %v2410
        %vm2508 = vcmask 1040384
        %v2509 = vrot.slane %v2412, 7
        %v2510 = vrot.slane %v2413, 7
        %v2511 = vsel %vm2508, %v2509, %v2510
        %v2512 = vrot.slane %v2414, 7
        %v2513 = vsel %vm2508, %v2510, %v2512
        %v2514 = vrot.slane %v2415, 7
        %v2515 = vrot.slane %v2416, 7
        %v2516 = vsel %vm2508, %v2514, %v2515
        %v2517 = vrot.slane %v2417, 7
        %v2518 = vsel %vm2508, %v2515, %v2517
        %v2519 = vrot.slane %v2418, 7
        %v2520 = vrot.slane %v2419, 7
        %v2521 = vsel %vm2508, %v2519, %v2520
        %v2522 = vrot.slane %v2420, 7
        %v2523 = vsel %vm2508, %v2520, %v2522
        %v2524 = vrot.slane %v2421, 7
        %v2525 = vrot.slane %v2422, 7
        %v2526 = vsel %vm2508, %v2524, %v2525
        %v2527 = vrot.slane %v2423, 7
        %v2528 = vsel %vm2508, %v2525, %v2527
        %v2529 = vrot.slane %v2424, 7
        %v2530 = vrot.slane %v2425, 7
        %v2531 = vsel %vm2508, %v2529, %v2530
        %v2532 = vrot.slane %v2426, 7
        %v2533 = vsel %vm2508, %v2530, %v2532
        %v2534 = vrot.slane %v2427, 7
        %v2535 = vrot.slane %v2428, 7
        %v2536 = vsel %vm2508, %v2534, %v2535
        %v2537 = vrot.slane %v2429, 7
        %v2538 = vsel %vm2508, %v2535, %v2537
        %v2539 = vrot.slane %v2430, 7
        %v2540 = vrot.slane %v2431, 7
        %v2541 = vsel %vm2508, %v2539, %v2540
        %v2542 = vrot.slane %v2432, 7
        %v2543 = vsel %vm2508, %v2540, %v2542
        %v2544 = vrot.slane %v2433, 7
        %v2545 = vrot.slane %v2434, 7
        %v2546 = vsel %vm2508, %v2544, %v2545
        %v2547 = vrot.slane %v2435, 7
        %v2548 = vsel %vm2508, %v2545, %v2547
        %v2549 = vrot.slane %v2436, 7
        %v2550 = vrot.slane %v2437, 7
        %v2551 = vsel %vm2508, %v2549, %v2550
        %v2552 = vrot.slane %v2438, 7
        %v2553 = vsel %vm2508, %v2550, %v2552
        %v2554 = vrot.slane %v2439, 7
        %v2555 = vrot.slane %v2440, 7
        %v2556 = vsel %vm2508, %v2554, %v2555
        %v2557 = vrot.slane %v2441, 7
        %v2558 = vsel %vm2508, %v2555, %v2557
        %v2559 = vrot.slane %v2442, 7
        %v2560 = vrot.slane %v2443, 7
        %v2561 = vsel %vm2508, %v2559, %v2560
        %v2562 = vrot.slane %v2444, 7
        %v2563 = vsel %vm2508, %v2560, %v2562
        %v2564 = vrot.slane %v2445, 7
        %v2565 = vrot.slane %v2446, 7
        %v2566 = vsel %vm2508, %v2564, %v2565
        %v2567 = vrot.slane %v2447, 7
        %v2568 = vsel %vm2508, %v2565, %v2567
        %v2569 = vrot.slane %v2448, 7
        %v2570 = vrot.slane %v2449, 7
        %v2571 = vsel %vm2508, %v2569, %v2570
        %v2572 = vrot.slane %v2450, 7
        %v2573 = vsel %vm2508, %v2570, %v2572
        %v2574 = vrot.slane %v2451, 7
        %v2575 = vrot.slane %v2452, 7
        %v2576 = vsel %vm2508, %v2574, %v2575
        %v2577 = vrot.slane %v2453, 7
        %v2578 = vsel %vm2508, %v2575, %v2577
        %v2579 = vrot.slane %v2454, 7
        %v2580 = vrot.slane %v2455, 7
        %v2581 = vsel %vm2508, %v2579, %v2580
        %v2582 = vrot.slane %v2456, 7
        %v2583 = vsel %vm2508, %v2580, %v2582
        %v2584 = vrot.slane %v2457, 7
        %v2585 = vrot.slane %v2458, 7
        %v2586 = vsel %vm2508, %v2584, %v2585
        %v2587 = vrot.slane %v2459, 7
        %v2588 = vsel %vm2508, %v2585, %v2587
        %v2621 = vadd.f32 %v548, %v2511
        %v2622 = vadd.f32 %v549, %v2513
        %v2623 = vadd.f32 %v550, %v2516
        %v2624 = vadd.f32 %v551, %v2518
        %v2625 = vadd.f32 %v552, %v2521
        %v2626 = vadd.f32 %v553, %v2523
        %v2627 = vadd.f32 %v554, %v2526
        %v2628 = vadd.f32 %v555, %v2528
        %v2629 = vadd.f32 %v556, %v2531
        %v2630 = vadd.f32 %v557, %v2533
        %v2631 = vadd.f32 %v558, %v2536
        %v2632 = vadd.f32 %v559, %v2538
        %v2633 = vadd.f32 %v560, %v2541
        %v2634 = vadd.f32 %v561, %v2543
        %v2635 = vadd.f32 %v562, %v2546
        %v2636 = vadd.f32 %v563, %v2548
        %v2637 = vadd.f32 %v564, %v2551
        %v2638 = vadd.f32 %v565, %v2553
        %v2639 = vadd.f32 %v566, %v2556
        %v2640 = vadd.f32 %v567, %v2558
        %v2641 = vadd.f32 %v568, %v2561
        %v2642 = vadd.f32 %v569, %v2563
        %v2643 = vadd.f32 %v570, %v2566
        %v2644 = vadd.f32 %v571, %v2568
        %v2645 = vadd.f32 %v572, %v2571
        %v2646 = vadd.f32 %v573, %v2573
        %v2647 = vadd.f32 %v574, %v2576
        %v2648 = vadd.f32 %v575, %v2578
        %v2649 = vadd.f32 %v576, %v2581
        %v2650 = vadd.f32 %v577, %v2583
        %v2651 = vadd.f32 %v578, %v2586
        %v2652 = vadd.f32 %v579, %v2588
        %v2653 = vpack.c.bf16 %v2622, %v2621
        %v2654 = vpack.c.bf16 %v2624, %v2623
        %v2655 = vpack.c.bf16 %v2626, %v2625
        %v2656 = vpack.c.bf16 %v2628, %v2627
        %v2657 = vpack.c.bf16 %v2630, %v2629
        %v2658 = vpack.c.bf16 %v2632, %v2631
        %v2659 = vpack.c.bf16 %v2634, %v2633
        %v2660 = vpack.c.bf16 %v2636, %v2635
        %v2661 = vpack.c.bf16 %v2638, %v2637
        %v2662 = vpack.c.bf16 %v2640, %v2639
        %v2663 = vpack.c.bf16 %v2642, %v2641
        %v2664 = vpack.c.bf16 %v2644, %v2643
        %v2665 = vpack.c.bf16 %v2646, %v2645
        %v2666 = vpack.c.bf16 %v2648, %v2647
        %v2667 = vpack.c.bf16 %v2650, %v2649
        %v2668 = vpack.c.bf16 %v2652, %v2651
        %v2669 = vld [vmem:[#allocation8] sm:$0xf]
        %v2670 = vld [vmem:[#allocation8 + $0x4] sm:$0xf]
        %v2671 = vld [vmem:[#allocation8 + $0x8] sm:$0xf]
        %v2672 = vld [vmem:[#allocation8 + $0xc] sm:$0xf]
        %v2673 = vld [vmem:[%s4] sm:$0x1]
        %v2675 = vlaneseq
        %v2676 = vshrl.u32 %v2675, 7
        %v2677 = vsub.s32 0, %v2676
        %v2678 = vrot.slane %v2673, %v2677
        %v2684 = vunpack.c.l.b16 %v2669
        %v2685 = vunpack.c.l.b16 %v2670
        %v2686 = vunpack.c.l.b16 %v2671
        %v2687 = vunpack.c.l.b16 %v2672
        %v2688 = vpack.c.b16 %v2685, %v2684
        %v2689 = vpack.c.b16 %v2687, %v2686
        %v2693 = vsel %vm475, %v2653, 0
        %v2696 = vsel %vm475, %v2654, 0
        %v2699 = vsel %vm475, %v2655, 0
        %v2702 = vsel %vm475, %v2656, 0
        %v2705 = vsel %vm475, %v2657, 0
        %v2708 = vsel %vm475, %v2658, 0
        %v2711 = vsel %vm475, %v2659, 0
        %v2714 = vsel %vm475, %v2660, 0
        %v2717 = vsel %vm475, %v2661, 0
        %v2720 = vsel %vm475, %v2662, 0
        %v2723 = vsel %vm475, %v2663, 0
        %v2726 = vsel %vm475, %v2664, 0
        %v2729 = vsel %vm475, %v2665, 0
        %v2732 = vsel %vm475, %v2666, 0
        %v2735 = vsel %vm475, %v2667, 0
        %v2738 = vsel %vm475, %v2668, 0
        %2740 = vmatprep.subr.bf16.mxu0 0
        %2741 = vmatpush1.bf16.msra.mxu0 %v2688
        %2742 = vmatprep.subr.bf16.mxu0 0
        %2743 = vmatpush1.bf16.msra.mxu0 %v2689
        %2744 = vmatprep.subr.bf16.mxu0 0
        %2745 = vmatpush1.bf16.msra.mxu0 0
        %2746 = vmatprep.subr.bf16.mxu0 0
        %2747 = vmatpush1.bf16.msra.mxu0 0
        %2748 = vmatprep.subr.bf16.mxu0 0
        %2749 = vmatpush1.bf16.msra.mxu0 0
        %2750 = vmatprep.subr.bf16.mxu0 0
        %2751 = vmatpush1.bf16.msra.mxu0 0
        %2752 = vmatprep.subr.bf16.mxu0 0
        %2753 = vmatpush1.bf16.msra.mxu0 0
        %2754 = vmatprep.subr.bf16.mxu0 0
        %2755 = vmatpush1.bf16.msra.mxu0 0
        %2756 = vmatprep.subr.bf16.mxu0 0
        %2757 = vmatpush1.bf16.msra.mxu0 0
        %2758 = vmatprep.subr.bf16.mxu0 0
        %2759 = vmatpush1.bf16.msra.mxu0 0
        %2760 = vmatprep.subr.bf16.mxu0 0
        %2761 = vmatpush1.bf16.msra.mxu0 0
        %2762 = vmatprep.subr.bf16.mxu0 0
        %2763 = vmatpush1.bf16.msra.mxu0 0
        %2764 = vmatprep.subr.bf16.mxu0 0
        %2765 = vmatpush1.bf16.msra.mxu0 0
        %2766 = vmatprep.subr.bf16.mxu0 0
        %2767 = vmatpush1.bf16.msra.mxu0 0
        %2768 = vmatprep.subr.bf16.mxu0 0
        %2769 = vmatpush1.bf16.msra.mxu0 0
        %2770 = vmatprep.subr.bf16.mxu0 0
        %2771 = vmatpush1.bf16.msra.mxu0 0
        %2772 = vmatprep.mubr.bf16.mxu0 0
        %2773 = vmatmul.mubr.bf16.gmra.mrb[0].mxu0 %v2693
        %v2774 = vpop.f32.mrb[0].mxu0
        %v2775 = vadd.f32 %v2678, %v2774
        %v2776 = vpop.f32.mrb[0].mxu0
        %v2777 = vpop.f32.mrb[0].mxu0
        %v2778 = vadd.f32 %v2678, %v2777
        %v2779 = vpop.f32.mrb[0].mxu0
        %2780 = vmatprep.mubr.bf16.mxu0 0
        %2781 = vmatmul.mubr.bf16.gmra.mrb[0].mxu0 %v2696
        %v2782 = vpop.f32.mrb[0].mxu0
        %v2783 = vadd.f32 %v2678, %v2782
        %v2784 = vpop.f32.mrb[0].mxu0
        %v2785 = vpop.f32.mrb[0].mxu0
        %v2786 = vadd.f32 %v2678, %v2785
        %v2787 = vpop.f32.mrb[0].mxu0
        %2788 = vmatprep.mubr.bf16.mxu0 0
        %2789 = vmatmul.mubr.bf16.gmra.mrb[0].mxu0 %v2699
        %v2790 = vpop.f32.mrb[0].mxu0
        %v2791 = vadd.f32 %v2678, %v2790
        %v2792 = vpop.f32.mrb[0].mxu0
        %v2793 = vpop.f32.mrb[0].mxu0
        %v2794 = vadd.f32 %v2678, %v2793
        %v2795 = vpop.f32.mrb[0].mxu0
        %2796 = vmatprep.mubr.bf16.mxu0 0
        %2797 = vmatmul.mubr.bf16.gmra.mrb[0].mxu0 %v2702
        %v2798 = vpop.f32.mrb[0].mxu0
        %v2799 = vadd.f32 %v2678, %v2798
        %v2800 = vpop.f32.mrb[0].mxu0
        %v2801 = vpop.f32.mrb[0].mxu0
        %v2802 = vadd.f32 %v2678, %v2801
        %v2803 = vpop.f32.mrb[0].mxu0
        %2804 = vmatprep.mubr.bf16.mxu0 0
        %2805 = vmatmul.mubr.bf16.gmra.mrb[0].mxu0 %v2705
        %v2806 = vpop.f32.mrb[0].mxu0
        %v2807 = vadd.f32 %v2678, %v2806
        %v2808 = vpop.f32.mrb[0].mxu0
        %v2809 = vpop.f32.mrb[0].mxu0
        %v2810 = vadd.f32 %v2678, %v2809
        %v2811 = vpop.f32.mrb[0].mxu0
        %2812 = vmatprep.mubr.bf16.mxu0 0
        %2813 = vmatmul.mubr.bf16.gmra.mrb[0].mxu0 %v2708
        %v2814 = vpop.f32.mrb[0].mxu0
        %v2815 = vadd.f32 %v2678, %v2814
        %v2816 = vpop.f32.mrb[0].mxu0
        %v2817 = vpop.f32.mrb[0].mxu0
        %v2818 = vadd.f32 %v2678, %v2817
        %v2819 = vpop.f32.mrb[0].mxu0
        %2820 = vmatprep.mubr.bf16.mxu0 0
        %2821 = vmatmul.mubr.bf16.gmra.mrb[0].mxu0 %v2711
        %v2822 = vpop.f32.mrb[0].mxu0
        %v2823 = vadd.f32 %v2678, %v2822
        %v2824 = vpop.f32.mrb[0].mxu0
        %v2825 = vpop.f32.mrb[0].mxu0
        %v2826 = vadd.f32 %v2678, %v2825
        %v2827 = vpop.f32.mrb[0].mxu0
        %2828 = vmatprep.mubr.bf16.mxu0 0
        %2829 = vmatmul.mubr.bf16.gmra.mrb[0].mxu0 %v2714
        %v2830 = vpop.f32.mrb[0].mxu0
        %v2831 = vadd.f32 %v2678, %v2830
        %v2832 = vpop.f32.mrb[0].mxu0
        %v2833 = vpop.f32.mrb[0].mxu0
        %v2834 = vadd.f32 %v2678, %v2833
        %v2835 = vpop.f32.mrb[0].mxu0
        %2836 = vmatprep.mubr.bf16.mxu0 0
        %2837 = vmatmul.mubr.bf16.gmra.mrb[0].mxu0 %v2717
        %v2838 = vpop.f32.mrb[0].mxu0
        %v2839 = vadd.f32 %v2678, %v2838
        %v2840 = vpop.f32.mrb[0].mxu0
        %v2841 = vpop.f32.mrb[0].mxu0
        %v2842 = vadd.f32 %v2678, %v2841
        %v2843 = vpop.f32.mrb[0].mxu0
        %2844 = vmatprep.mubr.bf16.mxu0 0
        %2845 = vmatmul.mubr.bf16.gmra.mrb[0].mxu0 %v2720
        %v2846 = vpop.f32.mrb[0].mxu0
        %v2847 = vadd.f32 %v2678, %v2846
        %v2848 = vpop.f32.mrb[0].mxu0
        %v2849 = vpop.f32.mrb[0].mxu0
        %v2850 = vadd.f32 %v2678, %v2849
        %v2851 = vpop.f32.mrb[0].mxu0
        %2852 = vmatprep.mubr.bf16.mxu0 0
        %2853 = vmatmul.mubr.bf16.gmra.mrb[0].mxu0 %v2723
        %v2854 = vpop.f32.mrb[0].mxu0
        %v2855 = vadd.f32 %v2678, %v2854
        %v2856 = vpop.f32.mrb[0].mxu0
        %v2857 = vpop.f32.mrb[0].mxu0
        %v2858 = vadd.f32 %v2678, %v2857
        %v2859 = vpop.f32.mrb[0].mxu0
        %2860 = vmatprep.mubr.bf16.mxu0 0
        %2861 = vmatmul.mubr.bf16.gmra.mrb[0].mxu0 %v2726
        %v2862 = vpop.f32.mrb[0].mxu0
        %v2863 = vadd.f32 %v2678, %v2862
        %v2864 = vpop.f32.mrb[0].mxu0
        %v2865 = vpop.f32.mrb[0].mxu0
        %v2866 = vadd.f32 %v2678, %v2865
        %v2867 = vpop.f32.mrb[0].mxu0
        %2868 = vmatprep.mubr.bf16.mxu0 0
        %2869 = vmatmul.mubr.bf16.gmra.mrb[0].mxu0 %v2729
        %v2870 = vpop.f32.mrb[0].mxu0
        %v2871 = vadd.f32 %v2678, %v2870
        %v2872 = vpop.f32.mrb[0].mxu0
        %v2873 = vpop.f32.mrb[0].mxu0
        %v2874 = vadd.f32 %v2678, %v2873
        %v2875 = vpop.f32.mrb[0].mxu0
        %2876 = vmatprep.mubr.bf16.mxu0 0
        %2877 = vmatmul.mubr.bf16.gmra.mrb[0].mxu0 %v2732
        %v2878 = vpop.f32.mrb[0].mxu0
        %v2879 = vadd.f32 %v2678, %v2878
        %v2880 = vpop.f32.mrb[0].mxu0
        %v2881 = vpop.f32.mrb[0].mxu0
        %v2882 = vadd.f32 %v2678, %v2881
        %v2883 = vpop.f32.mrb[0].mxu0
        %2884 = vmatprep.mubr.bf16.mxu0 0
        %2885 = vmatmul.mubr.bf16.gmra.mrb[0].mxu0 %v2735
        %v2886 = vpop.f32.mrb[0].mxu0
        %v2887 = vadd.f32 %v2678, %v2886
        %v2888 = vpop.f32.mrb[0].mxu0
        %v2889 = vpop.f32.mrb[0].mxu0
        %v2890 = vadd.f32 %v2678, %v2889
        %v2891 = vpop.f32.mrb[0].mxu0
        %2892 = vmatprep.mubr.bf16.mxu0 0
        %2893 = vmatmul.mubr.bf16.gmra.mrb[0].mxu0 %v2738
        %v2894 = vpop.f32.mrb[0].mxu0
        %v2895 = vadd.f32 %v2678, %v2894
        %v2896 = vpop.f32.mrb[0].mxu0
        %v2897 = vpop.f32.mrb[0].mxu0
        %v2898 = vadd.f32 %v2678, %v2897
        %v2899 = vpop.f32.mrb[0].mxu0
        %2900 = vdwg.mxu0
        %2901 = vst.msk [vmem:[%s580 + $0x8] sm:$0xff] %vm475, %v2775
        %2902 = vst.msk [vmem:[%s580 + $0x10] sm:$0xff] %vm475, %v2778
        %2903 = vst.msk [vmem:[%s580 + $0x28] sm:$0xff] %vm475, %v2783
        %2904 = vst.msk [vmem:[%s580 + $0x30] sm:$0xff] %vm475, %v2786
        %2905 = vst.msk [vmem:[%s580 + $0x48] sm:$0xff] %vm475, %v2791
        %2906 = vst.msk [vmem:[%s580 + $0x50] sm:$0xff] %vm475, %v2794
        %2907 = vst.msk [vmem:[%s580 + $0x68] sm:$0xff] %vm475, %v2799
        %2908 = vst.msk [vmem:[%s580 + $0x70] sm:$0xff] %vm475, %v2802
        %2909 = vst.msk [vmem:[%s580 + $0x88] sm:$0xff] %vm475, %v2807
        %2910 = vst.msk [vmem:[%s580 + $0x90] sm:$0xff] %vm475, %v2810
        %2911 = vst.msk [vmem:[%s580 + $0xa8] sm:$0xff] %vm475, %v2815
        %2912 = vst.msk [vmem:[%s580 + $0xb0] sm:$0xff] %vm475, %v2818
        %2913 = vst.msk [vmem:[%s580 + $0xc8] sm:$0xff] %vm475, %v2823
        %2914 = vst.msk [vmem:[%s580 + $0xd0] sm:$0xff] %vm475, %v2826
        %2915 = vst.msk [vmem:[%s580 + $0xe8] sm:$0xff] %vm475, %v2831
        %2916 = vst.msk [vmem:[%s580 + $0xf0] sm:$0xff] %vm475, %v2834
        %2917 = vst.msk [vmem:[%s580 + $0x108] sm:$0xff] %vm475, %v2839
        %2918 = vst.msk [vmem:[%s580 + $0x110] sm:$0xff] %vm475, %v2842
        %2919 = vst.msk [vmem:[%s580 + $0x128] sm:$0xff] %vm475, %v2847
        %2920 = vst.msk [vmem:[%s580 + $0x130] sm:$0xff] %vm475, %v2850
        %2921 = vst.msk [vmem:[%s580 + $0x148] sm:$0xff] %vm475, %v2855
        %2922 = vst.msk [vmem:[%s580 + $0x150] sm:$0xff] %vm475, %v2858
        %2923 = vst.msk [vmem:[%s580 + $0x168] sm:$0xff] %vm475, %v2863
        %2924 = vst.msk [vmem:[%s580 + $0x170] sm:$0xff] %vm475, %v2866
        %2925 = vst.msk [vmem:[%s580 + $0x188] sm:$0xff] %vm475, %v2871
        %2926 = vst.msk [vmem:[%s580 + $0x190] sm:$0xff] %vm475, %v2874
        %2927 = vst.msk [vmem:[%s580 + $0x1a8] sm:$0xff] %vm475, %v2879
        %2928 = vst.msk [vmem:[%s580 + $0x1b0] sm:$0xff] %vm475, %v2882
        %2929 = vst.msk [vmem:[%s580 + $0x1c8] sm:$0xff] %vm475, %v2887
        %2930 = vst.msk [vmem:[%s580 + $0x1d0] sm:$0xff] %vm475, %v2890
        %2931 = vst.msk [vmem:[%s580 + $0x1e8] sm:$0xff] %vm475, %v2895
        %2932 = vst.msk [vmem:[%s580 + $0x1f0] sm:$0xff] %vm475, %v2898
        %v2933 = vld [vmem:[#allocation2] sm:$0xff]
        %v2934 = vld [vmem:[#allocation2 + $0x8] sm:$0xff]
        %v2935 = vld [vmem:[#allocation2 + $0x10] sm:$0xff]
        %v2936 = vld [vmem:[#allocation2 + $0x18] sm:$0xff]
        %v2937 = vld [vmem:[#allocation2 + $0x20] sm:$0xff]
        %v2938 = vld [vmem:[#allocation2 + $0x28] sm:$0xff]
        %v2939 = vld [vmem:[#allocation2 + $0x30] sm:$0xff]
        %v2940 = vld [vmem:[#allocation2 + $0x38] sm:$0xff]
        %v2941 = vld [vmem:[#allocation2 + $0x40] sm:$0xff]
        %v2942 = vld [vmem:[#allocation2 + $0x48] sm:$0xff]
        %v2943 = vld [vmem:[#allocation2 + $0x50] sm:$0xff]
        %v2944 = vld [vmem:[#allocation2 + $0x58] sm:$0xff]
        %v2945 = vld [vmem:[#allocation2 + $0x60] sm:$0xff]
        %v2946 = vld [vmem:[#allocation2 + $0x68] sm:$0xff]
        %v2947 = vld [vmem:[#allocation2 + $0x70] sm:$0xff]
        %v2948 = vld [vmem:[#allocation2 + $0x78] sm:$0xff]
        %v2949 = vld [vmem:[#allocation2 + $0x80] sm:$0xff]
        %v2950 = vld [vmem:[#allocation2 + $0x88] sm:$0xff]
        %v2951 = vld [vmem:[#allocation2 + $0x90] sm:$0xff]
        %v2952 = vld [vmem:[#allocation2 + $0x98] sm:$0xff]
        %v2953 = vld [vmem:[#allocation2 + $0xa0] sm:$0xff]
        %v2954 = vld [vmem:[#allocation2 + $0xa8] sm:$0xff]
        %v2955 = vld [vmem:[#allocation2 + $0xb0] sm:$0xff]
        %v2956 = vld [vmem:[#allocation2 + $0xb8] sm:$0xff]
        %v2957 = vld [vmem:[#allocation2 + $0xc0] sm:$0xff]
        %v2958 = vld [vmem:[#allocation2 + $0xc8] sm:$0xff]
        %v2959 = vld [vmem:[#allocation2 + $0xd0] sm:$0xff]
        %v2960 = vld [vmem:[#allocation2 + $0xd8] sm:$0xff]
        %v2961 = vld [vmem:[#allocation2 + $0xe0] sm:$0xff]
        %v2962 = vld [vmem:[#allocation2 + $0xe8] sm:$0xff]
        %v2963 = vld [vmem:[#allocation2 + $0xf0] sm:$0xff]
        %v2964 = vld [vmem:[#allocation2 + $0xf8] sm:$0xff]
        %v2965 = vld [vmem:[#allocation2 + $0x100] sm:$0xff]
        %v2966 = vld [vmem:[#allocation2 + $0x108] sm:$0xff]
        %v2967 = vld [vmem:[#allocation2 + $0x110] sm:$0xff]
        %v2968 = vld [vmem:[#allocation2 + $0x118] sm:$0xff]
        %v2969 = vld [vmem:[#allocation2 + $0x120] sm:$0xff]
        %v2970 = vld [vmem:[#allocation2 + $0x128] sm:$0xff]
        %v2971 = vld [vmem:[#allocation2 + $0x130] sm:$0xff]
        %v2972 = vld [vmem:[#allocation2 + $0x138] sm:$0xff]
        %v2973 = vld [vmem:[#allocation2 + $0x140] sm:$0xff]
        %v2974 = vld [vmem:[#allocation2 + $0x148] sm:$0xff]
        %v2975 = vld [vmem:[#allocation2 + $0x150] sm:$0xff]
        %v2976 = vld [vmem:[#allocation2 + $0x158] sm:$0xff]
        %v2977 = vld [vmem:[#allocation2 + $0x160] sm:$0xff]
        %v2978 = vld [vmem:[#allocation2 + $0x168] sm:$0xff]
        %v2979 = vld [vmem:[#allocation2 + $0x170] sm:$0xff]
        %v2980 = vld [vmem:[#allocation2 + $0x178] sm:$0xff]
        %v2981 = vld [vmem:[#allocation2 + $0x180] sm:$0xff]
        %v2982 = vld [vmem:[#allocation2 + $0x188] sm:$0xff]
        %v2983 = vld [vmem:[#allocation2 + $0x190] sm:$0xff]
        %v2984 = vld [vmem:[#allocation2 + $0x198] sm:$0xff]
        %v2985 = vld [vmem:[#allocation2 + $0x1a0] sm:$0xff]
        %v2986 = vld [vmem:[#allocation2 + $0x1a8] sm:$0xff]
        %v2987 = vld [vmem:[#allocation2 + $0x1b0] sm:$0xff]
        %v2988 = vld [vmem:[#allocation2 + $0x1b8] sm:$0xff]
        %v2989 = vld [vmem:[#allocation2 + $0x1c0] sm:$0xff]
        %v2990 = vld [vmem:[#allocation2 + $0x1c8] sm:$0xff]
        %v2991 = vld [vmem:[#allocation2 + $0x1d0] sm:$0xff]
        %v2992 = vld [vmem:[#allocation2 + $0x1d8] sm:$0xff]
        %v2993 = vld [vmem:[#allocation2 + $0x1e0] sm:$0xff]
        %v2994 = vld [vmem:[#allocation2 + $0x1e8] sm:$0xff]
        %v2995 = vld [vmem:[#allocation2 + $0x1f0] sm:$0xff]
        %v2996 = vld [vmem:[#allocation2 + $0x1f8] sm:$0xff]
        %v2997 = vld [vmem:[#allocation2 + $0x200] sm:$0xff]
        %v2998 = vld [vmem:[#allocation2 + $0x208] sm:$0xff]
        %v2999 = vld [vmem:[#allocation2 + $0x210] sm:$0xff]
        %v3000 = vld [vmem:[#allocation2 + $0x218] sm:$0xff]
        %v3001 = vld [vmem:[#allocation2 + $0x220] sm:$0xff]
        %v3002 = vld [vmem:[#allocation2 + $0x228] sm:$0xff]
        %v3003 = vld [vmem:[#allocation2 + $0x230] sm:$0xff]
        %v3004 = vld [vmem:[#allocation2 + $0x238] sm:$0xff]
        %v3005 = vld [vmem:[%s5] sm:$0xff]
        %v3006 = vld [vmem:[%s5 + $0x8] sm:$0x1]
        %v3007 = vlaneseq
        %v3008 = vshrl.u32 %v3007, 7
        %v3009 = vsub.s32 0, %v3008
        %v3010 = vrot.slane %v3005, %v3009
        %v3011 = vmul.f32 %v2933, %v3010
        %v3012 = vmul.f32 %v2934, %v3010
        %v3013 = vmul.f32 %v2935, %v3010
        %v3014 = vmul.f32 %v2937, %v3010
        %v3015 = vmul.f32 %v2938, %v3010
        %v3016 = vmul.f32 %v2939, %v3010
        %v3017 = vmul.f32 %v2941, %v3010
        %v3018 = vmul.f32 %v2942, %v3010
        %v3019 = vmul.f32 %v2943, %v3010
        %v3020 = vmul.f32 %v2945, %v3010
        %v3021 = vmul.f32 %v2946, %v3010
        %v3022 = vmul.f32 %v2947, %v3010
        %v3023 = vmul.f32 %v2949, %v3010
        %v3024 = vmul.f32 %v2950, %v3010
        %v3025 = vmul.f32 %v2951, %v3010
        %v3026 = vmul.f32 %v2953, %v3010
        %v3027 = vmul.f32 %v2954, %v3010
        %v3028 = vmul.f32 %v2955, %v3010
        %v3029 = vmul.f32 %v2957, %v3010
        %v3030 = vmul.f32 %v2958, %v3010
        %v3031 = vmul.f32 %v2959, %v3010
        %v3032 = vmul.f32 %v2961, %v3010
        %v3033 = vmul.f32 %v2962, %v3010
        %v3034 = vmul.f32 %v2963, %v3010
        %v3035 = vmul.f32 %v2965, %v3010
        %v3036 = vmul.f32 %v2966, %v3010
        %v3037 = vmul.f32 %v2967, %v3010
        %v3038 = vmul.f32 %v2969, %v3010
        %v3039 = vmul.f32 %v2970, %v3010
        %v3040 = vmul.f32 %v2971, %v3010
        %v3041 = vmul.f32 %v2973, %v3010
        %v3042 = vmul.f32 %v2974, %v3010
        %v3043 = vmul.f32 %v2975, %v3010
        %v3044 = vmul.f32 %v2977, %v3010
        %v3045 = vmul.f32 %v2978, %v3010
        %v3046 = vmul.f32 %v2979, %v3010
        %v3047 = vmul.f32 %v2981, %v3010
        %v3048 = vmul.f32 %v2982, %v3010
        %v3049 = vmul.f32 %v2983, %v3010
        %v3050 = vmul.f32 %v2985, %v3010
        %v3051 = vmul.f32 %v2986, %v3010
        %v3052 = vmul.f32 %v2987, %v3010
        %v3053 = vmul.f32 %v2989, %v3010
        %v3054 = vmul.f32 %v2990, %v3010
        %v3055 = vmul.f32 %v2991, %v3010
        %v3056 = vmul.f32 %v2993, %v3010
        %v3057 = vmul.f32 %v2994, %v3010
        %v3058 = vmul.f32 %v2995, %v3010
        %v3059 = vlaneseq
        %v3060 = vshrl.u32 %v3059, 7
        %v3061 = vsub.s32 1, %v3060
        %v3062 = vrot.slane %v3005, %v3061
        %v3063 = vmul.f32 %v2934, %v3062
        %v3064 = vmul.f32 %v2935, %v3062
        %v3065 = vmul.f32 %v2938, %v3062
        %v3066 = vmul.f32 %v2939, %v3062
        %v3067 = vmul.f32 %v2942, %v3062
        %v3068 = vmul.f32 %v2943, %v3062
        %v3069 = vmul.f32 %v2946, %v3062
        %v3070 = vmul.f32 %v2947, %v3062
        %v3071 = vmul.f32 %v2950, %v3062
        %v3072 = vmul.f32 %v2951, %v3062
        %v3073 = vmul.f32 %v2954, %v3062
        %v3074 = vmul.f32 %v2955, %v3062
        %v3075 = vmul.f32 %v2958, %v3062
        %v3076 = vmul.f32 %v2959, %v3062
        %v3077 = vmul.f32 %v2962, %v3062
        %v3078 = vmul.f32 %v2963, %v3062
        %v3079 = vmul.f32 %v2966, %v3062
        %v3080 = vmul.f32 %v2967, %v3062
        %v3081 = vmul.f32 %v2970, %v3062
        %v3082 = vmul.f32 %v2971, %v3062
        %v3083 = vmul.f32 %v2974, %v3062
        %v3084 = vmul.f32 %v2975, %v3062
        %v3085 = vmul.f32 %v2978, %v3062
        %v3086 = vmul.f32 %v2979, %v3062
        %v3087 = vmul.f32 %v2982, %v3062
        %v3088 = vmul.f32 %v2983, %v3062
        %v3089 = vmul.f32 %v2986, %v3062
        %v3090 = vmul.f32 %v2987, %v3062
        %v3091 = vmul.f32 %v2990, %v3062
        %v3092 = vmul.f32 %v2991, %v3062
        %v3093 = vmul.f32 %v2994, %v3062
        %v3094 = vmul.f32 %v2995, %v3062
        %v3127 = vrot.slane %v3063, 1
        %v3128 = vrot.slane %v3064, 1
        %v3129 = vsel %vm807, %v3127, %v3128
        %v3130 = vrot.slane %v3065, 1
        %v3131 = vrot.slane %v3066, 1
        %v3132 = vsel %vm807, %v3130, %v3131
        %v3133 = vrot.slane %v3067, 1
        %v3134 = vrot.slane %v3068, 1
        %v3135 = vsel %vm807, %v3133, %v3134
        %v3136 = vrot.slane %v3069, 1
        %v3137 = vrot.slane %v3070, 1
        %v3138 = vsel %vm807, %v3136, %v3137
        %v3139 = vrot.slane %v3071, 1
        %v3140 = vrot.slane %v3072, 1
        %v3141 = vsel %vm807, %v3139, %v3140
        %v3142 = vrot.slane %v3073, 1
        %v3143 = vrot.slane %v3074, 1
        %v3144 = vsel %vm807, %v3142, %v3143
        %v3145 = vrot.slane %v3075, 1
        %v3146 = vrot.slane %v3076, 1
        %v3147 = vsel %vm807, %v3145, %v3146
        %v3148 = vrot.slane %v3077, 1
        %v3149 = vrot.slane %v3078, 1
        %v3150 = vsel %vm807, %v3148, %v3149
        %v3151 = vrot.slane %v3079, 1
        %v3152 = vrot.slane %v3080, 1
        %v3153 = vsel %vm807, %v3151, %v3152
        %v3154 = vrot.slane %v3081, 1
        %v3155 = vrot.slane %v3082, 1
        %v3156 = vsel %vm807, %v3154, %v3155
        %v3157 = vrot.slane %v3083, 1
        %v3158 = vrot.slane %v3084, 1
        %v3159 = vsel %vm807, %v3157, %v3158
        %v3160 = vrot.slane %v3085, 1
        %v3161 = vrot.slane %v3086, 1
        %v3162 = vsel %vm807, %v3160, %v3161
        %v3163 = vrot.slane %v3087, 1
        %v3164 = vrot.slane %v3088, 1
        %v3165 = vsel %vm807, %v3163, %v3164
        %v3166 = vrot.slane %v3089, 1
        %v3167 = vrot.slane %v3090, 1
        %v3168 = vsel %vm807, %v3166, %v3167
        %v3169 = vrot.slane %v3091, 1
        %v3170 = vrot.slane %v3092, 1
        %v3171 = vsel %vm807, %v3169, %v3170
        %v3172 = vrot.slane %v3093, 1
        %v3173 = vrot.slane %v3094, 1
        %v3174 = vsel %vm807, %v3172, %v3173
        %v3223 = vadd.f32 %v3011, %v3127
        %v3224 = vadd.f32 %v3012, %v3129
        %v3225 = vadd.f32 %v3013, %v3128
        %v3226 = vadd.f32 %v3014, %v3130
        %v3227 = vadd.f32 %v3015, %v3132
        %v3228 = vadd.f32 %v3016, %v3131
        %v3229 = vadd.f32 %v3017, %v3133
        %v3230 = vadd.f32 %v3018, %v3135
        %v3231 = vadd.f32 %v3019, %v3134
        %v3232 = vadd.f32 %v3020, %v3136
        %v3233 = vadd.f32 %v3021, %v3138
        %v3234 = vadd.f32 %v3022, %v3137
        %v3235 = vadd.f32 %v3023, %v3139
        %v3236 = vadd.f32 %v3024, %v3141
        %v3237 = vadd.f32 %v3025, %v3140
        %v3238 = vadd.f32 %v3026, %v3142
        %v3239 = vadd.f32 %v3027, %v3144
        %v3240 = vadd.f32 %v3028, %v3143
        %v3241 = vadd.f32 %v3029, %v3145
        %v3242 = vadd.f32 %v3030, %v3147
        %v3243 = vadd.f32 %v3031, %v3146
        %v3244 = vadd.f32 %v3032, %v3148
        %v3245 = vadd.f32 %v3033, %v3150
        %v3246 = vadd.f32 %v3034, %v3149
        %v3247 = vadd.f32 %v3035, %v3151
        %v3248 = vadd.f32 %v3036, %v3153
        %v3249 = vadd.f32 %v3037, %v3152
        %v3250 = vadd.f32 %v3038, %v3154
        %v3251 = vadd.f32 %v3039, %v3156
        %v3252 = vadd.f32 %v3040, %v3155
        %v3253 = vadd.f32 %v3041, %v3157
        %v3254 = vadd.f32 %v3042, %v3159
        %v3255 = vadd.f32 %v3043, %v3158
        %v3256 = vadd.f32 %v3044, %v3160
        %v3257 = vadd.f32 %v3045, %v3162
        %v3258 = vadd.f32 %v3046, %v3161
        %v3259 = vadd.f32 %v3047, %v3163
        %v3260 = vadd.f32 %v3048, %v3165
        %v3261 = vadd.f32 %v3049, %v3164
        %v3262 = vadd.f32 %v3050, %v3166
        %v3263 = vadd.f32 %v3051, %v3168
        %v3264 = vadd.f32 %v3052, %v3167
        %v3265 = vadd.f32 %v3053, %v3169
        %v3266 = vadd.f32 %v3054, %v3171
        %v3267 = vadd.f32 %v3055, %v3170
        %v3268 = vadd.f32 %v3056, %v3172
        %v3269 = vadd.f32 %v3057, %v3174
        %v3270 = vadd.f32 %v3058, %v3173
        %v3271 = vlaneseq
        %v3272 = vshrl.u32 %v3271, 7
        %v3273 = vsub.s32 2, %v3272
        %v3274 = vrot.slane %v3005, %v3273
        %v3275 = vmul.f32 %v2934, %v3274
        %v3276 = vmul.f32 %v2935, %v3274
        %v3277 = vmul.f32 %v2936, %v3274
        %v3278 = vmul.f32 %v2938, %v3274
        %v3279 = vmul.f32 %v2939, %v3274
        %v3280 = vmul.f32 %v2940, %v3274
        %v3281 = vmul.f32 %v2942, %v3274
        %v3282 = vmul.f32 %v2943, %v3274
        %v3283 = vmul.f32 %v2944, %v3274
        %v3284 = vmul.f32 %v2946, %v3274
        %v3285 = vmul.f32 %v2947, %v3274
        %v3286 = vmul.f32 %v2948, %v3274
        %v3287 = vmul.f32 %v2950, %v3274
        %v3288 = vmul.f32 %v2951, %v3274
        %v3289 = vmul.f32 %v2952, %v3274
        %v3290 = vmul.f32 %v2954, %v3274
        %v3291 = vmul.f32 %v2955, %v3274
        %v3292 = vmul.f32 %v2956, %v3274
        %v3293 = vmul.f32 %v2958, %v3274
        %v3294 = vmul.f32 %v2959, %v3274
        %v3295 = vmul.f32 %v2960, %v3274
        %v3296 = vmul.f32 %v2962, %v3274
        %v3297 = vmul.f32 %v2963, %v3274
        %v3298 = vmul.f32 %v2964, %v3274
        %v3299 = vmul.f32 %v2966, %v3274
        %v3300 = vmul.f32 %v2967, %v3274
        %v3301 = vmul.f32 %v2968, %v3274
        %v3302 = vmul.f32 %v2970, %v3274
        %v3303 = vmul.f32 %v2971, %v3274
        %v3304 = vmul.f32 %v2972, %v3274
        %v3305 = vmul.f32 %v2974, %v3274
        %v3306 = vmul.f32 %v2975, %v3274
        %v3307 = vmul.f32 %v2976, %v3274
        %v3308 = vmul.f32 %v2978, %v3274
        %v3309 = vmul.f32 %v2979, %v3274
        %v3310 = vmul.f32 %v2980, %v3274
        %v3311 = vmul.f32 %v2982, %v3274
        %v3312 = vmul.f32 %v2983, %v3274
        %v3313 = vmul.f32 %v2984, %v3274
        %v3314 = vmul.f32 %v2986, %v3274
        %v3315 = vmul.f32 %v2987, %v3274
        %v3316 = vmul.f32 %v2988, %v3274
        %v3317 = vmul.f32 %v2990, %v3274
        %v3318 = vmul.f32 %v2991, %v3274
        %v3319 = vmul.f32 %v2992, %v3274
        %v3320 = vmul.f32 %v2994, %v3274
        %v3321 = vmul.f32 %v2995, %v3274
        %v3322 = vmul.f32 %v2996, %v3274
        %v3371 = vrot.slane %v3275, 2
        %v3372 = vrot.slane %v3276, 2
        %v3373 = vsel %vm1052, %v3371, %v3372
        %v3374 = vrot.slane %v3277, 2
        %v3375 = vsel %vm1052, %v3372, %v3374
        %v3376 = vrot.slane %v3278, 2
        %v3377 = vrot.slane %v3279, 2
        %v3378 = vsel %vm1052, %v3376, %v3377
        %v3379 = vrot.slane %v3280, 2
        %v3380 = vsel %vm1052, %v3377, %v3379
        %v3381 = vrot.slane %v3281, 2
        %v3382 = vrot.slane %v3282, 2
        %v3383 = vsel %vm1052, %v3381, %v3382
        %v3384 = vrot.slane %v3283, 2
        %v3385 = vsel %vm1052, %v3382, %v3384
        %v3386 = vrot.slane %v3284, 2
        %v3387 = vrot.slane %v3285, 2
        %v3388 = vsel %vm1052, %v3386, %v3387
        %v3389 = vrot.slane %v3286, 2
        %v3390 = vsel %vm1052, %v3387, %v3389
        %v3391 = vrot.slane %v3287, 2
        %v3392 = vrot.slane %v3288, 2
        %v3393 = vsel %vm1052, %v3391, %v3392
        %v3394 = vrot.slane %v3289, 2
        %v3395 = vsel %vm1052, %v3392, %v3394
        %v3396 = vrot.slane %v3290, 2
        %v3397 = vrot.slane %v3291, 2
        %v3398 = vsel %vm1052, %v3396, %v3397
        %v3399 = vrot.slane %v3292, 2
        %v3400 = vsel %vm1052, %v3397, %v3399
        %v3401 = vrot.slane %v3293, 2
        %v3402 = vrot.slane %v3294, 2
        %v3403 = vsel %vm1052, %v3401, %v3402
        %v3404 = vrot.slane %v3295, 2
        %v3405 = vsel %vm1052, %v3402, %v3404
        %v3406 = vrot.slane %v3296, 2
        %v3407 = vrot.slane %v3297, 2
        %v3408 = vsel %vm1052, %v3406, %v3407
        %v3409 = vrot.slane %v3298, 2
        %v3410 = vsel %vm1052, %v3407, %v3409
        %v3411 = vrot.slane %v3299, 2
        %v3412 = vrot.slane %v3300, 2
        %v3413 = vsel %vm1052, %v3411, %v3412
        %v3414 = vrot.slane %v3301, 2
        %v3415 = vsel %vm1052, %v3412, %v3414
        %v3416 = vrot.slane %v3302, 2
        %v3417 = vrot.slane %v3303, 2
        %v3418 = vsel %vm1052, %v3416, %v3417
        %v3419 = vrot.slane %v3304, 2
        %v3420 = vsel %vm1052, %v3417, %v3419
        %v3421 = vrot.slane %v3305, 2
        %v3422 = vrot.slane %v3306, 2
        %v3423 = vsel %vm1052, %v3421, %v3422
        %v3424 = vrot.slane %v3307, 2
        %v3425 = vsel %vm1052, %v3422, %v3424
        %v3426 = vrot.slane %v3308, 2
        %v3427 = vrot.slane %v3309, 2
        %v3428 = vsel %vm1052, %v3426, %v3427
        %v3429 = vrot.slane %v3310, 2
        %v3430 = vsel %vm1052, %v3427, %v3429
        %v3431 = vrot.slane %v3311, 2
        %v3432 = vrot.slane %v3312, 2
        %v3433 = vsel %vm1052, %v3431, %v3432
        %v3434 = vrot.slane %v3313, 2
        %v3435 = vsel %vm1052, %v3432, %v3434
        %v3436 = vrot.slane %v3314, 2
        %v3437 = vrot.slane %v3315, 2
        %v3438 = vsel %vm1052, %v3436, %v3437
        %v3439 = vrot.slane %v3316, 2
        %v3440 = vsel %vm1052, %v3437, %v3439
        %v3441 = vrot.slane %v3317, 2
        %v3442 = vrot.slane %v3318, 2
        %v3443 = vsel %vm1052, %v3441, %v3442
        %v3444 = vrot.slane %v3319, 2
        %v3445 = vsel %vm1052, %v3442, %v3444
        %v3446 = vrot.slane %v3320, 2
        %v3447 = vrot.slane %v3321, 2
        %v3448 = vsel %vm1052, %v3446, %v3447
        %v3449 = vrot.slane %v3322, 2
        %v3450 = vsel %vm1052, %v3447, %v3449
        %v3499 = vadd.f32 %v3223, %v3371
        %v3500 = vadd.f32 %v3224, %v3373
        %v3501 = vadd.f32 %v3225, %v3375
        %v3502 = vadd.f32 %v3226, %v3376
        %v3503 = vadd.f32 %v3227, %v3378
        %v3504 = vadd.f32 %v3228, %v3380
        %v3505 = vadd.f32 %v3229, %v3381
        %v3506 = vadd.f32 %v3230, %v3383
        %v3507 = vadd.f32 %v3231, %v3385
        %v3508 = vadd.f32 %v3232, %v3386
        %v3509 = vadd.f32 %v3233, %v3388
        %v3510 = vadd.f32 %v3234, %v3390
        %v3511 = vadd.f32 %v3235, %v3391
        %v3512 = vadd.f32 %v3236, %v3393
        %v3513 = vadd.f32 %v3237, %v3395
        %v3514 = vadd.f32 %v3238, %v3396
        %v3515 = vadd.f32 %v3239, %v3398
        %v3516 = vadd.f32 %v3240, %v3400
        %v3517 = vadd.f32 %v3241, %v3401
        %v3518 = vadd.f32 %v3242, %v3403
        %v3519 = vadd.f32 %v3243, %v3405
        %v3520 = vadd.f32 %v3244, %v3406
        %v3521 = vadd.f32 %v3245, %v3408
        %v3522 = vadd.f32 %v3246, %v3410
        %v3523 = vadd.f32 %v3247, %v3411
        %v3524 = vadd.f32 %v3248, %v3413
        %v3525 = vadd.f32 %v3249, %v3415
        %v3526 = vadd.f32 %v3250, %v3416
        %v3527 = vadd.f32 %v3251, %v3418
        %v3528 = vadd.f32 %v3252, %v3420
        %v3529 = vadd.f32 %v3253, %v3421
        %v3530 = vadd.f32 %v3254, %v3423
        %v3531 = vadd.f32 %v3255, %v3425
        %v3532 = vadd.f32 %v3256, %v3426
        %v3533 = vadd.f32 %v3257, %v3428
        %v3534 = vadd.f32 %v3258, %v3430
        %v3535 = vadd.f32 %v3259, %v3431
        %v3536 = vadd.f32 %v3260, %v3433
        %v3537 = vadd.f32 %v3261, %v3435
        %v3538 = vadd.f32 %v3262, %v3436
        %v3539 = vadd.f32 %v3263, %v3438
        %v3540 = vadd.f32 %v3264, %v3440
        %v3541 = vadd.f32 %v3265, %v3441
        %v3542 = vadd.f32 %v3266, %v3443
        %v3543 = vadd.f32 %v3267, %v3445
        %v3544 = vadd.f32 %v3268, %v3446
        %v3545 = vadd.f32 %v3269, %v3448
        %v3546 = vadd.f32 %v3270, %v3450
        %v3547 = vlaneseq
        %v3548 = vshrl.u32 %v3547, 7
        %v3549 = vsub.s32 3, %v3548
        %v3550 = vrot.slane %v3005, %v3549
        %v3551 = vmul.f32 %v2937, %v3550
        %v3552 = vmul.f32 %v2938, %v3550
        %v3553 = vmul.f32 %v2939, %v3550
        %v3554 = vmul.f32 %v2941, %v3550
        %v3555 = vmul.f32 %v2942, %v3550
        %v3556 = vmul.f32 %v2943, %v3550
        %v3557 = vmul.f32 %v2945, %v3550
        %v3558 = vmul.f32 %v2946, %v3550
        %v3559 = vmul.f32 %v2947, %v3550
        %v3560 = vmul.f32 %v2949, %v3550
        %v3561 = vmul.f32 %v2950, %v3550
        %v3562 = vmul.f32 %v2951, %v3550
        %v3563 = vmul.f32 %v2953, %v3550
        %v3564 = vmul.f32 %v2954, %v3550
        %v3565 = vmul.f32 %v2955, %v3550
        %v3566 = vmul.f32 %v2957, %v3550
        %v3567 = vmul.f32 %v2958, %v3550
        %v3568 = vmul.f32 %v2959, %v3550
        %v3569 = vmul.f32 %v2961, %v3550
        %v3570 = vmul.f32 %v2962, %v3550
        %v3571 = vmul.f32 %v2963, %v3550
        %v3572 = vmul.f32 %v2965, %v3550
        %v3573 = vmul.f32 %v2966, %v3550
        %v3574 = vmul.f32 %v2967, %v3550
        %v3575 = vmul.f32 %v2969, %v3550
        %v3576 = vmul.f32 %v2970, %v3550
        %v3577 = vmul.f32 %v2971, %v3550
        %v3578 = vmul.f32 %v2973, %v3550
        %v3579 = vmul.f32 %v2974, %v3550
        %v3580 = vmul.f32 %v2975, %v3550
        %v3581 = vmul.f32 %v2977, %v3550
        %v3582 = vmul.f32 %v2978, %v3550
        %v3583 = vmul.f32 %v2979, %v3550
        %v3584 = vmul.f32 %v2981, %v3550
        %v3585 = vmul.f32 %v2982, %v3550
        %v3586 = vmul.f32 %v2983, %v3550
        %v3587 = vmul.f32 %v2985, %v3550
        %v3588 = vmul.f32 %v2986, %v3550
        %v3589 = vmul.f32 %v2987, %v3550
        %v3590 = vmul.f32 %v2989, %v3550
        %v3591 = vmul.f32 %v2990, %v3550
        %v3592 = vmul.f32 %v2991, %v3550
        %v3593 = vmul.f32 %v2993, %v3550
        %v3594 = vmul.f32 %v2994, %v3550
        %v3595 = vmul.f32 %v2995, %v3550
        %v3596 = vmul.f32 %v2997, %v3550
        %v3597 = vmul.f32 %v2998, %v3550
        %v3598 = vmul.f32 %v2999, %v3550
        %v3599 = vadd.f32 %v3499, %v3551
        %v3600 = vadd.f32 %v3500, %v3552
        %v3601 = vadd.f32 %v3501, %v3553
        %v3602 = vadd.f32 %v3502, %v3554
        %v3603 = vadd.f32 %v3503, %v3555
        %v3604 = vadd.f32 %v3504, %v3556
        %v3605 = vadd.f32 %v3505, %v3557
        %v3606 = vadd.f32 %v3506, %v3558
        %v3607 = vadd.f32 %v3507, %v3559
        %v3608 = vadd.f32 %v3508, %v3560
        %v3609 = vadd.f32 %v3509, %v3561
        %v3610 = vadd.f32 %v3510, %v3562
        %v3611 = vadd.f32 %v3511, %v3563
        %v3612 = vadd.f32 %v3512, %v3564
        %v3613 = vadd.f32 %v3513, %v3565
        %v3614 = vadd.f32 %v3514, %v3566
        %v3615 = vadd.f32 %v3515, %v3567
        %v3616 = vadd.f32 %v3516, %v3568
        %v3617 = vadd.f32 %v3517, %v3569
        %v3618 = vadd.f32 %v3518, %v3570
        %v3619 = vadd.f32 %v3519, %v3571
        %v3620 = vadd.f32 %v3520, %v3572
        %v3621 = vadd.f32 %v3521, %v3573
        %v3622 = vadd.f32 %v3522, %v3574
        %v3623 = vadd.f32 %v3523, %v3575
        %v3624 = vadd.f32 %v3524, %v3576
        %v3625 = vadd.f32 %v3525, %v3577
        %v3626 = vadd.f32 %v3526, %v3578
        %v3627 = vadd.f32 %v3527, %v3579
        %v3628 = vadd.f32 %v3528, %v3580
        %v3629 = vadd.f32 %v3529, %v3581
        %v3630 = vadd.f32 %v3530, %v3582
        %v3631 = vadd.f32 %v3531, %v3583
        %v3632 = vadd.f32 %v3532, %v3584
        %v3633 = vadd.f32 %v3533, %v3585
        %v3634 = vadd.f32 %v3534, %v3586
        %v3635 = vadd.f32 %v3535, %v3587
        %v3636 = vadd.f32 %v3536, %v3588
        %v3637 = vadd.f32 %v3537, %v3589
        %v3638 = vadd.f32 %v3538, %v3590
        %v3639 = vadd.f32 %v3539, %v3591
        %v3640 = vadd.f32 %v3540, %v3592
        %v3641 = vadd.f32 %v3541, %v3593
        %v3642 = vadd.f32 %v3542, %v3594
        %v3643 = vadd.f32 %v3543, %v3595
        %v3644 = vadd.f32 %v3544, %v3596
        %v3645 = vadd.f32 %v3545, %v3597
        %v3646 = vadd.f32 %v3546, %v3598
        %v3647 = vlaneseq
        %v3648 = vshrl.u32 %v3647, 7
        %v3649 = vsub.s32 4, %v3648
        %v3650 = vrot.slane %v3005, %v3649
        %v3651 = vmul.f32 %v2938, %v3650
        %v3652 = vmul.f32 %v2939, %v3650
        %v3653 = vmul.f32 %v2942, %v3650
        %v3654 = vmul.f32 %v2943, %v3650
        %v3655 = vmul.f32 %v2946, %v3650
        %v3656 = vmul.f32 %v2947, %v3650
        %v3657 = vmul.f32 %v2950, %v3650
        %v3658 = vmul.f32 %v2951, %v3650
        %v3659 = vmul.f32 %v2954, %v3650
        %v3660 = vmul.f32 %v2955, %v3650
        %v3661 = vmul.f32 %v2958, %v3650
        %v3662 = vmul.f32 %v2959, %v3650
        %v3663 = vmul.f32 %v2962, %v3650
        %v3664 = vmul.f32 %v2963, %v3650
        %v3665 = vmul.f32 %v2966, %v3650
        %v3666 = vmul.f32 %v2967, %v3650
        %v3667 = vmul.f32 %v2970, %v3650
        %v3668 = vmul.f32 %v2971, %v3650
        %v3669 = vmul.f32 %v2974, %v3650
        %v3670 = vmul.f32 %v2975, %v3650
        %v3671 = vmul.f32 %v2978, %v3650
        %v3672 = vmul.f32 %v2979, %v3650
        %v3673 = vmul.f32 %v2982, %v3650
        %v3674 = vmul.f32 %v2983, %v3650
        %v3675 = vmul.f32 %v2986, %v3650
        %v3676 = vmul.f32 %v2987, %v3650
        %v3677 = vmul.f32 %v2990, %v3650
        %v3678 = vmul.f32 %v2991, %v3650
        %v3679 = vmul.f32 %v2994, %v3650
        %v3680 = vmul.f32 %v2995, %v3650
        %v3681 = vmul.f32 %v2998, %v3650
        %v3682 = vmul.f32 %v2999, %v3650
        %v3715 = vrot.slane %v3651, 1
        %v3716 = vrot.slane %v3652, 1
        %v3717 = vsel %vm807, %v3715, %v3716
        %v3718 = vrot.slane %v3653, 1
        %v3719 = vrot.slane %v3654, 1
        %v3720 = vsel %vm807, %v3718, %v3719
        %v3721 = vrot.slane %v3655, 1
        %v3722 = vrot.slane %v3656, 1
        %v3723 = vsel %vm807, %v3721, %v3722
        %v3724 = vrot.slane %v3657, 1
        %v3725 = vrot.slane %v3658, 1
        %v3726 = vsel %vm807, %v3724, %v3725
        %v3727 = vrot.slane %v3659, 1
        %v3728 = vrot.slane %v3660, 1
        %v3729 = vsel %vm807, %v3727, %v3728
        %v3730 = vrot.slane %v3661, 1
        %v3731 = vrot.slane %v3662, 1
        %v3732 = vsel %vm807, %v3730, %v3731
        %v3733 = vrot.slane %v3663, 1
        %v3734 = vrot.slane %v3664, 1
        %v3735 = vsel %vm807, %v3733, %v3734
        %v3736 = vrot.slane %v3665, 1
        %v3737 = vrot.slane %v3666, 1
        %v3738 = vsel %vm807, %v3736, %v3737
        %v3739 = vrot.slane %v3667, 1
        %v3740 = vrot.slane %v3668, 1
        %v3741 = vsel %vm807, %v3739, %v3740
        %v3742 = vrot.slane %v3669, 1
        %v3743 = vrot.slane %v3670, 1
        %v3744 = vsel %vm807, %v3742, %v3743
        %v3745 = vrot.slane %v3671, 1
        %v3746 = vrot.slane %v3672, 1
        %v3747 = vsel %vm807, %v3745, %v3746
        %v3748 = vrot.slane %v3673, 1
        %v3749 = vrot.slane %v3674, 1
        %v3750 = vsel %vm807, %v3748, %v3749
        %v3751 = vrot.slane %v3675, 1
        %v3752 = vrot.slane %v3676, 1
        %v3753 = vsel %vm807, %v3751, %v3752
        %v3754 = vrot.slane %v3677, 1
        %v3755 = vrot.slane %v3678, 1
        %v3756 = vsel %vm807, %v3754, %v3755
        %v3757 = vrot.slane %v3679, 1
        %v3758 = vrot.slane %v3680, 1
        %v3759 = vsel %vm807, %v3757, %v3758
        %v3760 = vrot.slane %v3681, 1
        %v3761 = vrot.slane %v3682, 1
        %v3762 = vsel %vm807, %v3760, %v3761
        %v3811 = vadd.f32 %v3599, %v3715
        %v3812 = vadd.f32 %v3600, %v3717
        %v3813 = vadd.f32 %v3601, %v3716
        %v3814 = vadd.f32 %v3602, %v3718
        %v3815 = vadd.f32 %v3603, %v3720
        %v3816 = vadd.f32 %v3604, %v3719
        %v3817 = vadd.f32 %v3605, %v3721
        %v3818 = vadd.f32 %v3606, %v3723
        %v3819 = vadd.f32 %v3607, %v3722
        %v3820 = vadd.f32 %v3608, %v3724
        %v3821 = vadd.f32 %v3609, %v3726
        %v3822 = vadd.f32 %v3610, %v3725
        %v3823 = vadd.f32 %v3611, %v3727
        %v3824 = vadd.f32 %v3612, %v3729
        %v3825 = vadd.f32 %v3613, %v3728
        %v3826 = vadd.f32 %v3614, %v3730
        %v3827 = vadd.f32 %v3615, %v3732
        %v3828 = vadd.f32 %v3616, %v3731
        %v3829 = vadd.f32 %v3617, %v3733
        %v3830 = vadd.f32 %v3618, %v3735
        %v3831 = vadd.f32 %v3619, %v3734
        %v3832 = vadd.f32 %v3620, %v3736
        %v3833 = vadd.f32 %v3621, %v3738
        %v3834 = vadd.f32 %v3622, %v3737
        %v3835 = vadd.f32 %v3623, %v3739
        %v3836 = vadd.f32 %v3624, %v3741
        %v3837 = vadd.f32 %v3625, %v3740
        %v3838 = vadd.f32 %v3626, %v3742
        %v3839 = vadd.f32 %v3627, %v3744
        %v3840 = vadd.f32 %v3628, %v3743
        %v3841 = vadd.f32 %v3629, %v3745
        %v3842 = vadd.f32 %v3630, %v3747
        %v3843 = vadd.f32 %v3631, %v3746
        %v3844 = vadd.f32 %v3632, %v3748
        %v3845 = vadd.f32 %v3633, %v3750
        %v3846 = vadd.f32 %v3634, %v3749
        %v3847 = vadd.f32 %v3635, %v3751
        %v3848 = vadd.f32 %v3636, %v3753
        %v3849 = vadd.f32 %v3637, %v3752
        %v3850 = vadd.f32 %v3638, %v3754
        %v3851 = vadd.f32 %v3639, %v3756
        %v3852 = vadd.f32 %v3640, %v3755
        %v3853 = vadd.f32 %v3641, %v3757
        %v3854 = vadd.f32 %v3642, %v3759
        %v3855 = vadd.f32 %v3643, %v3758
        %v3856 = vadd.f32 %v3644, %v3760
        %v3857 = vadd.f32 %v3645, %v3762
        %v3858 = vadd.f32 %v3646, %v3761
        %v3859 = vlaneseq
        %v3860 = vshrl.u32 %v3859, 7
        %v3861 = vsub.s32 5, %v3860
        %v3862 = vrot.slane %v3005, %v3861
        %v3863 = vmul.f32 %v2938, %v3862
        %v3864 = vmul.f32 %v2939, %v3862
        %v3865 = vmul.f32 %v2940, %v3862
        %v3866 = vmul.f32 %v2942, %v3862
        %v3867 = vmul.f32 %v2943, %v3862
        %v3868 = vmul.f32 %v2944, %v3862
        %v3869 = vmul.f32 %v2946, %v3862
        %v3870 = vmul.f32 %v2947, %v3862
        %v3871 = vmul.f32 %v2948, %v3862
        %v3872 = vmul.f32 %v2950, %v3862
        %v3873 = vmul.f32 %v2951, %v3862
        %v3874 = vmul.f32 %v2952, %v3862
        %v3875 = vmul.f32 %v2954, %v3862
        %v3876 = vmul.f32 %v2955, %v3862
        %v3877 = vmul.f32 %v2956, %v3862
        %v3878 = vmul.f32 %v2958, %v3862
        %v3879 = vmul.f32 %v2959, %v3862
        %v3880 = vmul.f32 %v2960, %v3862
        %v3881 = vmul.f32 %v2962, %v3862
        %v3882 = vmul.f32 %v2963, %v3862
        %v3883 = vmul.f32 %v2964, %v3862
        %v3884 = vmul.f32 %v2966, %v3862
        %v3885 = vmul.f32 %v2967, %v3862
        %v3886 = vmul.f32 %v2968, %v3862
        %v3887 = vmul.f32 %v2970, %v3862
        %v3888 = vmul.f32 %v2971, %v3862
        %v3889 = vmul.f32 %v2972, %v3862
        %v3890 = vmul.f32 %v2974, %v3862
        %v3891 = vmul.f32 %v2975, %v3862
        %v3892 = vmul.f32 %v2976, %v3862
        %v3893 = vmul.f32 %v2978, %v3862
        %v3894 = vmul.f32 %v2979, %v3862
        %v3895 = vmul.f32 %v2980, %v3862
        %v3896 = vmul.f32 %v2982, %v3862
        %v3897 = vmul.f32 %v2983, %v3862
        %v3898 = vmul.f32 %v2984, %v3862
        %v3899 = vmul.f32 %v2986, %v3862
        %v3900 = vmul.f32 %v2987, %v3862
        %v3901 = vmul.f32 %v2988, %v3862
        %v3902 = vmul.f32 %v2990, %v3862
        %v3903 = vmul.f32 %v2991, %v3862
        %v3904 = vmul.f32 %v2992, %v3862
        %v3905 = vmul.f32 %v2994, %v3862
        %v3906 = vmul.f32 %v2995, %v3862
        %v3907 = vmul.f32 %v2996, %v3862
        %v3908 = vmul.f32 %v2998, %v3862
        %v3909 = vmul.f32 %v2999, %v3862
        %v3910 = vmul.f32 %v3000, %v3862
        %v3959 = vrot.slane %v3863, 2
        %v3960 = vrot.slane %v3864, 2
        %v3961 = vsel %vm1052, %v3959, %v3960
        %v3962 = vrot.slane %v3865, 2
        %v3963 = vsel %vm1052, %v3960, %v3962
        %v3964 = vrot.slane %v3866, 2
        %v3965 = vrot.slane %v3867, 2
        %v3966 = vsel %vm1052, %v3964, %v3965
        %v3967 = vrot.slane %v3868, 2
        %v3968 = vsel %vm1052, %v3965, %v3967
        %v3969 = vrot.slane %v3869, 2
        %v3970 = vrot.slane %v3870, 2
        %v3971 = vsel %vm1052, %v3969, %v3970
        %v3972 = vrot.slane %v3871, 2
        %v3973 = vsel %vm1052, %v3970, %v3972
        %v3974 = vrot.slane %v3872, 2
        %v3975 = vrot.slane %v3873, 2
        %v3976 = vsel %vm1052, %v3974, %v3975
        %v3977 = vrot.slane %v3874, 2
        %v3978 = vsel %vm1052, %v3975, %v3977
        %v3979 = vrot.slane %v3875, 2
        %v3980 = vrot.slane %v3876, 2
        %v3981 = vsel %vm1052, %v3979, %v3980
        %v3982 = vrot.slane %v3877, 2
        %v3983 = vsel %vm1052, %v3980, %v3982
        %v3984 = vrot.slane %v3878, 2
        %v3985 = vrot.slane %v3879, 2
        %v3986 = vsel %vm1052, %v3984, %v3985
        %v3987 = vrot.slane %v3880, 2
        %v3988 = vsel %vm1052, %v3985, %v3987
        %v3989 = vrot.slane %v3881, 2
        %v3990 = vrot.slane %v3882, 2
        %v3991 = vsel %vm1052, %v3989, %v3990
        %v3992 = vrot.slane %v3883, 2
        %v3993 = vsel %vm1052, %v3990, %v3992
        %v3994 = vrot.slane %v3884, 2
        %v3995 = vrot.slane %v3885, 2
        %v3996 = vsel %vm1052, %v3994, %v3995
        %v3997 = vrot.slane %v3886, 2
        %v3998 = vsel %vm1052, %v3995, %v3997
        %v3999 = vrot.slane %v3887, 2
        %v4000 = vrot.slane %v3888, 2
        %v4001 = vsel %vm1052, %v3999, %v4000
        %v4002 = vrot.slane %v3889, 2
        %v4003 = vsel %vm1052, %v4000, %v4002
        %v4004 = vrot.slane %v3890, 2
        %v4005 = vrot.slane %v3891, 2
        %v4006 = vsel %vm1052, %v4004, %v4005
        %v4007 = vrot.slane %v3892, 2
        %v4008 = vsel %vm1052, %v4005, %v4007
        %v4009 = vrot.slane %v3893, 2
        %v4010 = vrot.slane %v3894, 2
        %v4011 = vsel %vm1052, %v4009, %v4010
        %v4012 = vrot.slane %v3895, 2
        %v4013 = vsel %vm1052, %v4010, %v4012
        %v4014 = vrot.slane %v3896, 2
        %v4015 = vrot.slane %v3897, 2
        %v4016 = vsel %vm1052, %v4014, %v4015
        %v4017 = vrot.slane %v3898, 2
        %v4018 = vsel %vm1052, %v4015, %v4017
        %v4019 = vrot.slane %v3899, 2
        %v4020 = vrot.slane %v3900, 2
        %v4021 = vsel %vm1052, %v4019, %v4020
        %v4022 = vrot.slane %v3901, 2
        %v4023 = vsel %vm1052, %v4020, %v4022
        %v4024 = vrot.slane %v3902, 2
        %v4025 = vrot.slane %v3903, 2
        %v4026 = vsel %vm1052, %v4024, %v4025
        %v4027 = vrot.slane %v3904, 2
        %v4028 = vsel %vm1052, %v4025, %v4027
        %v4029 = vrot.slane %v3905, 2
        %v4030 = vrot.slane %v3906, 2
        %v4031 = vsel %vm1052, %v4029, %v4030
        %v4032 = vrot.slane %v3907, 2
        %v4033 = vsel %vm1052, %v4030, %v4032
        %v4034 = vrot.slane %v3908, 2
        %v4035 = vrot.slane %v3909, 2
        %v4036 = vsel %vm1052, %v4034, %v4035
        %v4037 = vrot.slane %v3910, 2
        %v4038 = vsel %vm1052, %v4035, %v4037
        %v4087 = vadd.f32 %v3811, %v3959
        %v4088 = vadd.f32 %v3812, %v3961
        %v4089 = vadd.f32 %v3813, %v3963
        %v4090 = vadd.f32 %v3814, %v3964
        %v4091 = vadd.f32 %v3815, %v3966
        %v4092 = vadd.f32 %v3816, %v3968
        %v4093 = vadd.f32 %v3817, %v3969
        %v4094 = vadd.f32 %v3818, %v3971
        %v4095 = vadd.f32 %v3819, %v3973
        %v4096 = vadd.f32 %v3820, %v3974
        %v4097 = vadd.f32 %v3821, %v3976
        %v4098 = vadd.f32 %v3822, %v3978
        %v4099 = vadd.f32 %v3823, %v3979
        %v4100 = vadd.f32 %v3824, %v3981
        %v4101 = vadd.f32 %v3825, %v3983
        %v4102 = vadd.f32 %v3826, %v3984
        %v4103 = vadd.f32 %v3827, %v3986
        %v4104 = vadd.f32 %v3828, %v3988
        %v4105 = vadd.f32 %v3829, %v3989
        %v4106 = vadd.f32 %v3830, %v3991
        %v4107 = vadd.f32 %v3831, %v3993
        %v4108 = vadd.f32 %v3832, %v3994
        %v4109 = vadd.f32 %v3833, %v3996
        %v4110 = vadd.f32 %v3834, %v3998
        %v4111 = vadd.f32 %v3835, %v3999
        %v4112 = vadd.f32 %v3836, %v4001
        %v4113 = vadd.f32 %v3837, %v4003
        %v4114 = vadd.f32 %v3838, %v4004
        %v4115 = vadd.f32 %v3839, %v4006
        %v4116 = vadd.f32 %v3840, %v4008
        %v4117 = vadd.f32 %v3841, %v4009
        %v4118 = vadd.f32 %v3842, %v4011
        %v4119 = vadd.f32 %v3843, %v4013
        %v4120 = vadd.f32 %v3844, %v4014
        %v4121 = vadd.f32 %v3845, %v4016
        %v4122 = vadd.f32 %v3846, %v4018
        %v4123 = vadd.f32 %v3847, %v4019
        %v4124 = vadd.f32 %v3848, %v4021
        %v4125 = vadd.f32 %v3849, %v4023
        %v4126 = vadd.f32 %v3850, %v4024
        %v4127 = vadd.f32 %v3851, %v4026
        %v4128 = vadd.f32 %v3852, %v4028
        %v4129 = vadd.f32 %v3853, %v4029
        %v4130 = vadd.f32 %v3854, %v4031
        %v4131 = vadd.f32 %v3855, %v4033
        %v4132 = vadd.f32 %v3856, %v4034
        %v4133 = vadd.f32 %v3857, %v4036
        %v4134 = vadd.f32 %v3858, %v4038
        %v4135 = vlaneseq
        %v4136 = vshrl.u32 %v4135, 7
        %v4137 = vsub.s32 6, %v4136
        %v4138 = vrot.slane %v3005, %v4137
        %v4139 = vmul.f32 %v2941, %v4138
        %v4140 = vmul.f32 %v2942, %v4138
        %v4141 = vmul.f32 %v2943, %v4138
        %v4142 = vmul.f32 %v2945, %v4138
        %v4143 = vmul.f32 %v2946, %v4138
        %v4144 = vmul.f32 %v2947, %v4138
        %v4145 = vmul.f32 %v2949, %v4138
        %v4146 = vmul.f32 %v2950, %v4138
        %v4147 = vmul.f32 %v2951, %v4138
        %v4148 = vmul.f32 %v2953, %v4138
        %v4149 = vmul.f32 %v2954, %v4138
        %v4150 = vmul.f32 %v2955, %v4138
        %v4151 = vmul.f32 %v2957, %v4138
        %v4152 = vmul.f32 %v2958, %v4138
        %v4153 = vmul.f32 %v2959, %v4138
        %v4154 = vmul.f32 %v2961, %v4138
        %v4155 = vmul.f32 %v2962, %v4138
        %v4156 = vmul.f32 %v2963, %v4138
        %v4157 = vmul.f32 %v2965, %v4138
        %v4158 = vmul.f32 %v2966, %v4138
        %v4159 = vmul.f32 %v2967, %v4138
        %v4160 = vmul.f32 %v2969, %v4138
        %v4161 = vmul.f32 %v2970, %v4138
        %v4162 = vmul.f32 %v2971, %v4138
        %v4163 = vmul.f32 %v2973, %v4138
        %v4164 = vmul.f32 %v2974, %v4138
        %v4165 = vmul.f32 %v2975, %v4138
        %v4166 = vmul.f32 %v2977, %v4138
        %v4167 = vmul.f32 %v2978, %v4138
        %v4168 = vmul.f32 %v2979, %v4138
        %v4169 = vmul.f32 %v2981, %v4138
        %v4170 = vmul.f32 %v2982, %v4138
        %v4171 = vmul.f32 %v2983, %v4138
        %v4172 = vmul.f32 %v2985, %v4138
        %v4173 = vmul.f32 %v2986, %v4138
        %v4174 = vmul.f32 %v2987, %v4138
        %v4175 = vmul.f32 %v2989, %v4138
        %v4176 = vmul.f32 %v2990, %v4138
        %v4177 = vmul.f32 %v2991, %v4138
        %v4178 = vmul.f32 %v2993, %v4138
        %v4179 = vmul.f32 %v2994, %v4138
        %v4180 = vmul.f32 %v2995, %v4138
        %v4181 = vmul.f32 %v2997, %v4138
        %v4182 = vmul.f32 %v2998, %v4138
        %v4183 = vmul.f32 %v2999, %v4138
        %v4184 = vmul.f32 %v3001, %v4138
        %v4185 = vmul.f32 %v3002, %v4138
        %v4186 = vmul.f32 %v3003, %v4138
        %v4187 = vadd.f32 %v4087, %v4139
        %v4188 = vadd.f32 %v4088, %v4140
        %v4189 = vadd.f32 %v4089, %v4141
        %v4190 = vadd.f32 %v4090, %v4142
        %v4191 = vadd.f32 %v4091, %v4143
        %v4192 = vadd.f32 %v4092, %v4144
        %v4193 = vadd.f32 %v4093, %v4145
        %v4194 = vadd.f32 %v4094, %v4146
        %v4195 = vadd.f32 %v4095, %v4147
        %v4196 = vadd.f32 %v4096, %v4148
        %v4197 = vadd.f32 %v4097, %v4149
        %v4198 = vadd.f32 %v4098, %v4150
        %v4199 = vadd.f32 %v4099, %v4151
        %v4200 = vadd.f32 %v4100, %v4152
        %v4201 = vadd.f32 %v4101, %v4153
        %v4202 = vadd.f32 %v4102, %v4154
        %v4203 = vadd.f32 %v4103, %v4155
        %v4204 = vadd.f32 %v4104, %v4156
        %v4205 = vadd.f32 %v4105, %v4157
        %v4206 = vadd.f32 %v4106, %v4158
        %v4207 = vadd.f32 %v4107, %v4159
        %v4208 = vadd.f32 %v4108, %v4160
        %v4209 = vadd.f32 %v4109, %v4161
        %v4210 = vadd.f32 %v4110, %v4162
        %v4211 = vadd.f32 %v4111, %v4163
        %v4212 = vadd.f32 %v4112, %v4164
        %v4213 = vadd.f32 %v4113, %v4165
        %v4214 = vadd.f32 %v4114, %v4166
        %v4215 = vadd.f32 %v4115, %v4167
        %v4216 = vadd.f32 %v4116, %v4168
        %v4217 = vadd.f32 %v4117, %v4169
        %v4218 = vadd.f32 %v4118, %v4170
        %v4219 = vadd.f32 %v4119, %v4171
        %v4220 = vadd.f32 %v4120, %v4172
        %v4221 = vadd.f32 %v4121, %v4173
        %v4222 = vadd.f32 %v4122, %v4174
        %v4223 = vadd.f32 %v4123, %v4175
        %v4224 = vadd.f32 %v4124, %v4176
        %v4225 = vadd.f32 %v4125, %v4177
        %v4226 = vadd.f32 %v4126, %v4178
        %v4227 = vadd.f32 %v4127, %v4179
        %v4228 = vadd.f32 %v4128, %v4180
        %v4229 = vadd.f32 %v4129, %v4181
        %v4230 = vadd.f32 %v4130, %v4182
        %v4231 = vadd.f32 %v4131, %v4183
        %v4232 = vadd.f32 %v4132, %v4184
        %v4233 = vadd.f32 %v4133, %v4185
        %v4234 = vadd.f32 %v4134, %v4186
        %v4235 = vlaneseq
        %v4236 = vshrl.u32 %v4235, 7
        %v4237 = vsub.s32 7, %v4236
        %v4238 = vrot.slane %v3005, %v4237
        %v4239 = vmul.f32 %v2942, %v4238
        %v4240 = vmul.f32 %v2943, %v4238
        %v4241 = vmul.f32 %v2946, %v4238
        %v4242 = vmul.f32 %v2947, %v4238
        %v4243 = vmul.f32 %v2950, %v4238
        %v4244 = vmul.f32 %v2951, %v4238
        %v4245 = vmul.f32 %v2954, %v4238
        %v4246 = vmul.f32 %v2955, %v4238
        %v4247 = vmul.f32 %v2958, %v4238
        %v4248 = vmul.f32 %v2959, %v4238
        %v4249 = vmul.f32 %v2962, %v4238
        %v4250 = vmul.f32 %v2963, %v4238
        %v4251 = vmul.f32 %v2966, %v4238
        %v4252 = vmul.f32 %v2967, %v4238
        %v4253 = vmul.f32 %v2970, %v4238
        %v4254 = vmul.f32 %v2971, %v4238
        %v4255 = vmul.f32 %v2974, %v4238
        %v4256 = vmul.f32 %v2975, %v4238
        %v4257 = vmul.f32 %v2978, %v4238
        %v4258 = vmul.f32 %v2979, %v4238
        %v4259 = vmul.f32 %v2982, %v4238
        %v4260 = vmul.f32 %v2983, %v4238
        %v4261 = vmul.f32 %v2986, %v4238
        %v4262 = vmul.f32 %v2987, %v4238
        %v4263 = vmul.f32 %v2990, %v4238
        %v4264 = vmul.f32 %v2991, %v4238
        %v4265 = vmul.f32 %v2994, %v4238
        %v4266 = vmul.f32 %v2995, %v4238
        %v4267 = vmul.f32 %v2998, %v4238
        %v4268 = vmul.f32 %v2999, %v4238
        %v4269 = vmul.f32 %v3002, %v4238
        %v4270 = vmul.f32 %v3003, %v4238
        %v4303 = vrot.slane %v4239, 1
        %v4304 = vrot.slane %v4240, 1
        %v4305 = vsel %vm807, %v4303, %v4304
        %v4306 = vrot.slane %v4241, 1
        %v4307 = vrot.slane %v4242, 1
        %v4308 = vsel %vm807, %v4306, %v4307
        %v4309 = vrot.slane %v4243, 1
        %v4310 = vrot.slane %v4244, 1
        %v4311 = vsel %vm807, %v4309, %v4310
        %v4312 = vrot.slane %v4245, 1
        %v4313 = vrot.slane %v4246, 1
        %v4314 = vsel %vm807, %v4312, %v4313
        %v4315 = vrot.slane %v4247, 1
        %v4316 = vrot.slane %v4248, 1
        %v4317 = vsel %vm807, %v4315, %v4316
        %v4318 = vrot.slane %v4249, 1
        %v4319 = vrot.slane %v4250, 1
        %v4320 = vsel %vm807, %v4318, %v4319
        %v4321 = vrot.slane %v4251, 1
        %v4322 = vrot.slane %v4252, 1
        %v4323 = vsel %vm807, %v4321, %v4322
        %v4324 = vrot.slane %v4253, 1
        %v4325 = vrot.slane %v4254, 1
        %v4326 = vsel %vm807, %v4324, %v4325
        %v4327 = vrot.slane %v4255, 1
        %v4328 = vrot.slane %v4256, 1
        %v4329 = vsel %vm807, %v4327, %v4328
        %v4330 = vrot.slane %v4257, 1
        %v4331 = vrot.slane %v4258, 1
        %v4332 = vsel %vm807, %v4330, %v4331
        %v4333 = vrot.slane %v4259, 1
        %v4334 = vrot.slane %v4260, 1
        %v4335 = vsel %vm807, %v4333, %v4334
        %v4336 = vrot.slane %v4261, 1
        %v4337 = vrot.slane %v4262, 1
        %v4338 = vsel %vm807, %v4336, %v4337
        %v4339 = vrot.slane %v4263, 1
        %v4340 = vrot.slane %v4264, 1
        %v4341 = vsel %vm807, %v4339, %v4340
        %v4342 = vrot.slane %v4265, 1
        %v4343 = vrot.slane %v4266, 1
        %v4344 = vsel %vm807, %v4342, %v4343
        %v4345 = vrot.slane %v4267, 1
        %v4346 = vrot.slane %v4268, 1
        %v4347 = vsel %vm807, %v4345, %v4346
        %v4348 = vrot.slane %v4269, 1
        %v4349 = vrot.slane %v4270, 1
        %v4350 = vsel %vm807, %v4348, %v4349
        %v4399 = vadd.f32 %v4187, %v4303
        %v4400 = vadd.f32 %v4188, %v4305
        %v4401 = vadd.f32 %v4189, %v4304
        %v4402 = vadd.f32 %v4190, %v4306
        %v4403 = vadd.f32 %v4191, %v4308
        %v4404 = vadd.f32 %v4192, %v4307
        %v4405 = vadd.f32 %v4193, %v4309
        %v4406 = vadd.f32 %v4194, %v4311
        %v4407 = vadd.f32 %v4195, %v4310
        %v4408 = vadd.f32 %v4196, %v4312
        %v4409 = vadd.f32 %v4197, %v4314
        %v4410 = vadd.f32 %v4198, %v4313
        %v4411 = vadd.f32 %v4199, %v4315
        %v4412 = vadd.f32 %v4200, %v4317
        %v4413 = vadd.f32 %v4201, %v4316
        %v4414 = vadd.f32 %v4202, %v4318
        %v4415 = vadd.f32 %v4203, %v4320
        %v4416 = vadd.f32 %v4204, %v4319
        %v4417 = vadd.f32 %v4205, %v4321
        %v4418 = vadd.f32 %v4206, %v4323
        %v4419 = vadd.f32 %v4207, %v4322
        %v4420 = vadd.f32 %v4208, %v4324
        %v4421 = vadd.f32 %v4209, %v4326
        %v4422 = vadd.f32 %v4210, %v4325
        %v4423 = vadd.f32 %v4211, %v4327
        %v4424 = vadd.f32 %v4212, %v4329
        %v4425 = vadd.f32 %v4213, %v4328
        %v4426 = vadd.f32 %v4214, %v4330
        %v4427 = vadd.f32 %v4215, %v4332
        %v4428 = vadd.f32 %v4216, %v4331
        %v4429 = vadd.f32 %v4217, %v4333
        %v4430 = vadd.f32 %v4218, %v4335
        %v4431 = vadd.f32 %v4219, %v4334
        %v4432 = vadd.f32 %v4220, %v4336
        %v4433 = vadd.f32 %v4221, %v4338
        %v4434 = vadd.f32 %v4222, %v4337
        %v4435 = vadd.f32 %v4223, %v4339
        %v4436 = vadd.f32 %v4224, %v4341
        %v4437 = vadd.f32 %v4225, %v4340
        %v4438 = vadd.f32 %v4226, %v4342
        %v4439 = vadd.f32 %v4227, %v4344
        %v4440 = vadd.f32 %v4228, %v4343
        %v4441 = vadd.f32 %v4229, %v4345
        %v4442 = vadd.f32 %v4230, %v4347
        %v4443 = vadd.f32 %v4231, %v4346
        %v4444 = vadd.f32 %v4232, %v4348
        %v4445 = vadd.f32 %v4233, %v4350
        %v4446 = vadd.f32 %v4234, %v4349
        %v4447 = vlaneseq
        %v4448 = vshrl.u32 %v4447, 7
        %v4449 = vsub.s32 0, %v4448
        %v4450 = vrot.slane %v3006, %v4449
        %v4451 = vmul.f32 %v2942, %v4450
        %v4452 = vmul.f32 %v2943, %v4450
        %v4453 = vmul.f32 %v2944, %v4450
        %v4454 = vmul.f32 %v2946, %v4450
        %v4455 = vmul.f32 %v2947, %v4450
        %v4456 = vmul.f32 %v2948, %v4450
        %v4457 = vmul.f32 %v2950, %v4450
        %v4458 = vmul.f32 %v2951, %v4450
        %v4459 = vmul.f32 %v2952, %v4450
        %v4460 = vmul.f32 %v2954, %v4450
        %v4461 = vmul.f32 %v2955, %v4450
        %v4462 = vmul.f32 %v2956, %v4450
        %v4463 = vmul.f32 %v2958, %v4450
        %v4464 = vmul.f32 %v2959, %v4450
        %v4465 = vmul.f32 %v2960, %v4450
        %v4466 = vmul.f32 %v2962, %v4450
        %v4467 = vmul.f32 %v2963, %v4450
        %v4468 = vmul.f32 %v2964, %v4450
        %v4469 = vmul.f32 %v2966, %v4450
        %v4470 = vmul.f32 %v2967, %v4450
        %v4471 = vmul.f32 %v2968, %v4450
        %v4472 = vmul.f32 %v2970, %v4450
        %v4473 = vmul.f32 %v2971, %v4450
        %v4474 = vmul.f32 %v2972, %v4450
        %v4475 = vmul.f32 %v2974, %v4450
        %v4476 = vmul.f32 %v2975, %v4450
        %v4477 = vmul.f32 %v2976, %v4450
        %v4478 = vmul.f32 %v2978, %v4450
        %v4479 = vmul.f32 %v2979, %v4450
        %v4480 = vmul.f32 %v2980, %v4450
        %v4481 = vmul.f32 %v2982, %v4450
        %v4482 = vmul.f32 %v2983, %v4450
        %v4483 = vmul.f32 %v2984, %v4450
        %v4484 = vmul.f32 %v2986, %v4450
        %v4485 = vmul.f32 %v2987, %v4450
        %v4486 = vmul.f32 %v2988, %v4450
        %v4487 = vmul.f32 %v2990, %v4450
        %v4488 = vmul.f32 %v2991, %v4450
        %v4489 = vmul.f32 %v2992, %v4450
        %v4490 = vmul.f32 %v2994, %v4450
        %v4491 = vmul.f32 %v2995, %v4450
        %v4492 = vmul.f32 %v2996, %v4450
        %v4493 = vmul.f32 %v2998, %v4450
        %v4494 = vmul.f32 %v2999, %v4450
        %v4495 = vmul.f32 %v3000, %v4450
        %v4496 = vmul.f32 %v3002, %v4450
        %v4497 = vmul.f32 %v3003, %v4450
        %v4498 = vmul.f32 %v3004, %v4450
        %v4547 = vrot.slane %v4451, 2
        %v4548 = vrot.slane %v4452, 2
        %v4549 = vsel %vm1052, %v4547, %v4548
        %v4550 = vrot.slane %v4453, 2
        %v4551 = vsel %vm1052, %v4548, %v4550
        %v4552 = vrot.slane %v4454, 2
        %v4553 = vrot.slane %v4455, 2
        %v4554 = vsel %vm1052, %v4552, %v4553
        %v4555 = vrot.slane %v4456, 2
        %v4556 = vsel %vm1052, %v4553, %v4555
        %v4557 = vrot.slane %v4457, 2
        %v4558 = vrot.slane %v4458, 2
        %v4559 = vsel %vm1052, %v4557, %v4558
        %v4560 = vrot.slane %v4459, 2
        %v4561 = vsel %vm1052, %v4558, %v4560
        %v4562 = vrot.slane %v4460, 2
        %v4563 = vrot.slane %v4461, 2
        %v4564 = vsel %vm1052, %v4562, %v4563
        %v4565 = vrot.slane %v4462, 2
        %v4566 = vsel %vm1052, %v4563, %v4565
        %v4567 = vrot.slane %v4463, 2
        %v4568 = vrot.slane %v4464, 2
        %v4569 = vsel %vm1052, %v4567, %v4568
        %v4570 = vrot.slane %v4465, 2
        %v4571 = vsel %vm1052, %v4568, %v4570
        %v4572 = vrot.slane %v4466, 2
        %v4573 = vrot.slane %v4467, 2
        %v4574 = vsel %vm1052, %v4572, %v4573
        %v4575 = vrot.slane %v4468, 2
        %v4576 = vsel %vm1052, %v4573, %v4575
        %v4577 = vrot.slane %v4469, 2
        %v4578 = vrot.slane %v4470, 2
        %v4579 = vsel %vm1052, %v4577, %v4578
        %v4580 = vrot.slane %v4471, 2
        %v4581 = vsel %vm1052, %v4578, %v4580
        %v4582 = vrot.slane %v4472, 2
        %v4583 = vrot.slane %v4473, 2
        %v4584 = vsel %vm1052, %v4582, %v4583
        %v4585 = vrot.slane %v4474, 2
        %v4586 = vsel %vm1052, %v4583, %v4585
        %v4587 = vrot.slane %v4475, 2
        %v4588 = vrot.slane %v4476, 2
        %v4589 = vsel %vm1052, %v4587, %v4588
        %v4590 = vrot.slane %v4477, 2
        %v4591 = vsel %vm1052, %v4588, %v4590
        %v4592 = vrot.slane %v4478, 2
        %v4593 = vrot.slane %v4479, 2
        %v4594 = vsel %vm1052, %v4592, %v4593
        %v4595 = vrot.slane %v4480, 2
        %v4596 = vsel %vm1052, %v4593, %v4595
        %v4597 = vrot.slane %v4481, 2
        %v4598 = vrot.slane %v4482, 2
        %v4599 = vsel %vm1052, %v4597, %v4598
        %v4600 = vrot.slane %v4483, 2
        %v4601 = vsel %vm1052, %v4598, %v4600
        %v4602 = vrot.slane %v4484, 2
        %v4603 = vrot.slane %v4485, 2
        %v4604 = vsel %vm1052, %v4602, %v4603
        %v4605 = vrot.slane %v4486, 2
        %v4606 = vsel %vm1052, %v4603, %v4605
        %v4607 = vrot.slane %v4487, 2
        %v4608 = vrot.slane %v4488, 2
        %v4609 = vsel %vm1052, %v4607, %v4608
        %v4610 = vrot.slane %v4489, 2
        %v4611 = vsel %vm1052, %v4608, %v4610
        %v4612 = vrot.slane %v4490, 2
        %v4613 = vrot.slane %v4491, 2
        %v4614 = vsel %vm1052, %v4612, %v4613
        %v4615 = vrot.slane %v4492, 2
        %v4616 = vsel %vm1052, %v4613, %v4615
        %v4617 = vrot.slane %v4493, 2
        %v4618 = vrot.slane %v4494, 2
        %v4619 = vsel %vm1052, %v4617, %v4618
        %v4620 = vrot.slane %v4495, 2
        %v4621 = vsel %vm1052, %v4618, %v4620
        %v4622 = vrot.slane %v4496, 2
        %v4623 = vrot.slane %v4497, 2
        %v4624 = vsel %vm1052, %v4622, %v4623
        %v4625 = vrot.slane %v4498, 2
        %v4626 = vsel %vm1052, %v4623, %v4625
        %v4675 = vadd.f32 %v4399, %v4547
        %v4676 = vadd.f32 %v4400, %v4549
        %v4677 = vadd.f32 %v4401, %v4551
        %v4678 = vadd.f32 %v4402, %v4552
        %v4679 = vadd.f32 %v4403, %v4554
        %v4680 = vadd.f32 %v4404, %v4556
        %v4681 = vadd.f32 %v4405, %v4557
        %v4682 = vadd.f32 %v4406, %v4559
        %v4683 = vadd.f32 %v4407, %v4561
        %v4684 = vadd.f32 %v4408, %v4562
        %v4685 = vadd.f32 %v4409, %v4564
        %v4686 = vadd.f32 %v4410, %v4566
        %v4687 = vadd.f32 %v4411, %v4567
        %v4688 = vadd.f32 %v4412, %v4569
        %v4689 = vadd.f32 %v4413, %v4571
        %v4690 = vadd.f32 %v4414, %v4572
        %v4691 = vadd.f32 %v4415, %v4574
        %v4692 = vadd.f32 %v4416, %v4576
        %v4693 = vadd.f32 %v4417, %v4577
        %v4694 = vadd.f32 %v4418, %v4579
        %v4695 = vadd.f32 %v4419, %v4581
        %v4696 = vadd.f32 %v4420, %v4582
        %v4697 = vadd.f32 %v4421, %v4584
        %v4698 = vadd.f32 %v4422, %v4586
        %v4699 = vadd.f32 %v4423, %v4587
        %v4700 = vadd.f32 %v4424, %v4589
        %v4701 = vadd.f32 %v4425, %v4591
        %v4702 = vadd.f32 %v4426, %v4592
        %v4703 = vadd.f32 %v4427, %v4594
        %v4704 = vadd.f32 %v4428, %v4596
        %v4705 = vadd.f32 %v4429, %v4597
        %v4706 = vadd.f32 %v4430, %v4599
        %v4707 = vadd.f32 %v4431, %v4601
        %v4708 = vadd.f32 %v4432, %v4602
        %v4709 = vadd.f32 %v4433, %v4604
        %v4710 = vadd.f32 %v4434, %v4606
        %v4711 = vadd.f32 %v4435, %v4607
        %v4712 = vadd.f32 %v4436, %v4609
        %v4713 = vadd.f32 %v4437, %v4611
        %v4714 = vadd.f32 %v4438, %v4612
        %v4715 = vadd.f32 %v4439, %v4614
        %v4716 = vadd.f32 %v4440, %v4616
        %v4717 = vadd.f32 %v4441, %v4617
        %v4718 = vadd.f32 %v4442, %v4619
        %v4719 = vadd.f32 %v4443, %v4621
        %v4720 = vadd.f32 %v4444, %v4622
        %v4721 = vadd.f32 %v4445, %v4624
        %v4722 = vadd.f32 %v4446, %v4626
        %v4723 = vld [vmem:[#allocation9] sm:$0x1]
        %v4725 = vlaneseq
        %v4726 = vshrl.u32 %v4725, 7
        %v4727 = vsub.s32 0, %v4726
        %v4728 = vrot.slane %v4723, %v4727
        %v4730 = vadd.f32 %v4675, %v4728
        %v4731 = vadd.f32 %v4676, %v4728
        %v4732 = vadd.f32 %v4677, %v4728
        %v4733 = vadd.f32 %v4678, %v4728
        %v4734 = vadd.f32 %v4679, %v4728
        %v4735 = vadd.f32 %v4680, %v4728
        %v4736 = vadd.f32 %v4681, %v4728
        %v4737 = vadd.f32 %v4682, %v4728
        %v4738 = vadd.f32 %v4683, %v4728
        %v4739 = vadd.f32 %v4684, %v4728
        %v4740 = vadd.f32 %v4685, %v4728
        %v4741 = vadd.f32 %v4686, %v4728
        %v4742 = vadd.f32 %v4687, %v4728
        %v4743 = vadd.f32 %v4688, %v4728
        %v4744 = vadd.f32 %v4689, %v4728
        %v4745 = vadd.f32 %v4690, %v4728
        %v4746 = vadd.f32 %v4691, %v4728
        %v4747 = vadd.f32 %v4692, %v4728
        %v4748 = vadd.f32 %v4693, %v4728
        %v4749 = vadd.f32 %v4694, %v4728
        %v4750 = vadd.f32 %v4695, %v4728
        %v4751 = vadd.f32 %v4696, %v4728
        %v4752 = vadd.f32 %v4697, %v4728
        %v4753 = vadd.f32 %v4698, %v4728
        %v4754 = vadd.f32 %v4699, %v4728
        %v4755 = vadd.f32 %v4700, %v4728
        %v4756 = vadd.f32 %v4701, %v4728
        %v4757 = vadd.f32 %v4702, %v4728
        %v4758 = vadd.f32 %v4703, %v4728
        %v4759 = vadd.f32 %v4704, %v4728
        %v4760 = vadd.f32 %v4705, %v4728
        %v4761 = vadd.f32 %v4706, %v4728
        %v4762 = vadd.f32 %v4707, %v4728
        %v4763 = vadd.f32 %v4708, %v4728
        %v4764 = vadd.f32 %v4709, %v4728
        %v4765 = vadd.f32 %v4710, %v4728
        %v4766 = vadd.f32 %v4711, %v4728
        %v4767 = vadd.f32 %v4712, %v4728
        %v4768 = vadd.f32 %v4713, %v4728
        %v4769 = vadd.f32 %v4714, %v4728
        %v4770 = vadd.f32 %v4715, %v4728
        %v4771 = vadd.f32 %v4716, %v4728
        %v4772 = vadd.f32 %v4717, %v4728
        %v4773 = vadd.f32 %v4718, %v4728
        %v4774 = vadd.f32 %v4719, %v4728
        %v4775 = vadd.f32 %v4720, %v4728
        %v4776 = vadd.f32 %v4721, %v4728
        %v4777 = vadd.f32 %v4722, %v4728
        %v4826 = vrot.slane %v4730, 7
        %v4827 = vrot.slane %v4731, 7
        %v4828 = vsel %vm2508, %v4826, %v4827
        %v4829 = vrot.slane %v4732, 7
        %v4830 = vsel %vm2508, %v4827, %v4829
        %v4831 = vrot.slane %v4733, 7
        %v4832 = vrot.slane %v4734, 7
        %v4833 = vsel %vm2508, %v4831, %v4832
        %v4834 = vrot.slane %v4735, 7
        %v4835 = vsel %vm2508, %v4832, %v4834
        %v4836 = vrot.slane %v4736, 7
        %v4837 = vrot.slane %v4737, 7
        %v4838 = vsel %vm2508, %v4836, %v4837
        %v4839 = vrot.slane %v4738, 7
        %v4840 = vsel %vm2508, %v4837, %v4839
        %v4841 = vrot.slane %v4739, 7
        %v4842 = vrot.slane %v4740, 7
        %v4843 = vsel %vm2508, %v4841, %v4842
        %v4844 = vrot.slane %v4741, 7
        %v4845 = vsel %vm2508, %v4842, %v4844
        %v4846 = vrot.slane %v4742, 7
        %v4847 = vrot.slane %v4743, 7
        %v4848 = vsel %vm2508, %v4846, %v4847
        %v4849 = vrot.slane %v4744, 7
        %v4850 = vsel %vm2508, %v4847, %v4849
        %v4851 = vrot.slane %v4745, 7
        %v4852 = vrot.slane %v4746, 7
        %v4853 = vsel %vm2508, %v4851, %v4852
        %v4854 = vrot.slane %v4747, 7
        %v4855 = vsel %vm2508, %v4852, %v4854
        %v4856 = vrot.slane %v4748, 7
        %v4857 = vrot.slane %v4749, 7
        %v4858 = vsel %vm2508, %v4856, %v4857
        %v4859 = vrot.slane %v4750, 7
        %v4860 = vsel %vm2508, %v4857, %v4859
        %v4861 = vrot.slane %v4751, 7
        %v4862 = vrot.slane %v4752, 7
        %v4863 = vsel %vm2508, %v4861, %v4862
        %v4864 = vrot.slane %v4753, 7
        %v4865 = vsel %vm2508, %v4862, %v4864
        %v4866 = vrot.slane %v4754, 7
        %v4867 = vrot.slane %v4755, 7
        %v4868 = vsel %vm2508, %v4866, %v4867
        %v4869 = vrot.slane %v4756, 7
        %v4870 = vsel %vm2508, %v4867, %v4869
        %v4871 = vrot.slane %v4757, 7
        %v4872 = vrot.slane %v4758, 7
        %v4873 = vsel %vm2508, %v4871, %v4872
        %v4874 = vrot.slane %v4759, 7
        %v4875 = vsel %vm2508, %v4872, %v4874
        %v4876 = vrot.slane %v4760, 7
        %v4877 = vrot.slane %v4761, 7
        %v4878 = vsel %vm2508, %v4876, %v4877
        %v4879 = vrot.slane %v4762, 7
        %v4880 = vsel %vm2508, %v4877, %v4879
        %v4881 = vrot.slane %v4763, 7
        %v4882 = vrot.slane %v4764, 7
        %v4883 = vsel %vm2508, %v4881, %v4882
        %v4884 = vrot.slane %v4765, 7
        %v4885 = vsel %vm2508, %v4882, %v4884
        %v4886 = vrot.slane %v4766, 7
        %v4887 = vrot.slane %v4767, 7
        %v4888 = vsel %vm2508, %v4886, %v4887
        %v4889 = vrot.slane %v4768, 7
        %v4890 = vsel %vm2508, %v4887, %v4889
        %v4891 = vrot.slane %v4769, 7
        %v4892 = vrot.slane %v4770, 7
        %v4893 = vsel %vm2508, %v4891, %v4892
        %v4894 = vrot.slane %v4771, 7
        %v4895 = vsel %vm2508, %v4892, %v4894
        %v4896 = vrot.slane %v4772, 7
        %v4897 = vrot.slane %v4773, 7
        %v4898 = vsel %vm2508, %v4896, %v4897
        %v4899 = vrot.slane %v4774, 7
        %v4900 = vsel %vm2508, %v4897, %v4899
        %v4901 = vrot.slane %v4775, 7
        %v4902 = vrot.slane %v4776, 7
        %v4903 = vsel %vm2508, %v4901, %v4902
        %v4904 = vrot.slane %v4777, 7
        %v4905 = vsel %vm2508, %v4902, %v4904
        %v4938 = vadd.f32 %v2621, %v4828
        %v4939 = vadd.f32 %v2622, %v4830
        %v4940 = vadd.f32 %v2623, %v4833
        %v4941 = vadd.f32 %v2624, %v4835
        %v4942 = vadd.f32 %v2625, %v4838
        %v4943 = vadd.f32 %v2626, %v4840
        %v4944 = vadd.f32 %v2627, %v4843
        %v4945 = vadd.f32 %v2628, %v4845
        %v4946 = vadd.f32 %v2629, %v4848
        %v4947 = vadd.f32 %v2630, %v4850
        %v4948 = vadd.f32 %v2631, %v4853
        %v4949 = vadd.f32 %v2632, %v4855
        %v4950 = vadd.f32 %v2633, %v4858
        %v4951 = vadd.f32 %v2634, %v4860
        %v4952 = vadd.f32 %v2635, %v4863
        %v4953 = vadd.f32 %v2636, %v4865
        %v4954 = vadd.f32 %v2637, %v4868
        %v4955 = vadd.f32 %v2638, %v4870
        %v4956 = vadd.f32 %v2639, %v4873
        %v4957 = vadd.f32 %v2640, %v4875
        %v4958 = vadd.f32 %v2641, %v4878
        %v4959 = vadd.f32 %v2642, %v4880
        %v4960 = vadd.f32 %v2643, %v4883
        %v4961 = vadd.f32 %v2644, %v4885
        %v4962 = vadd.f32 %v2645, %v4888
        %v4963 = vadd.f32 %v2646, %v4890
        %v4964 = vadd.f32 %v2647, %v4893
        %v4965 = vadd.f32 %v2648, %v4895
        %v4966 = vadd.f32 %v2649, %v4898
        %v4967 = vadd.f32 %v2650, %v4900
        %v4968 = vadd.f32 %v2651, %v4903
        %v4969 = vadd.f32 %v2652, %v4905
        %v4970 = vpack.c.bf16 %v4939, %v4938
        %v4971 = vpack.c.bf16 %v4941, %v4940
        %v4972 = vpack.c.bf16 %v4943, %v4942
        %v4973 = vpack.c.bf16 %v4945, %v4944
        %v4974 = vpack.c.bf16 %v4947, %v4946
        %v4975 = vpack.c.bf16 %v4949, %v4948
        %v4976 = vpack.c.bf16 %v4951, %v4950
        %v4977 = vpack.c.bf16 %v4953, %v4952
        %v4978 = vpack.c.bf16 %v4955, %v4954
        %v4979 = vpack.c.bf16 %v4957, %v4956
        %v4980 = vpack.c.bf16 %v4959, %v4958
        %v4981 = vpack.c.bf16 %v4961, %v4960
        %v4982 = vpack.c.bf16 %v4963, %v4962
        %v4983 = vpack.c.bf16 %v4965, %v4964
        %v4984 = vpack.c.bf16 %v4967, %v4966
        %v4985 = vpack.c.bf16 %v4969, %v4968
        %v4986 = vld [vmem:[#allocation11] sm:$0xf]
        %v4987 = vld [vmem:[#allocation11 + $0x4] sm:$0xf]
        %v4988 = vld [vmem:[#allocation11 + $0x8] sm:$0xf]
        %v4989 = vld [vmem:[#allocation11 + $0xc] sm:$0xf]
        %v4990 = vld [vmem:[#allocation12] sm:$0x1]
        %v4992 = vlaneseq
        %v4993 = vshrl.u32 %v4992, 7
        %v4994 = vsub.s32 0, %v4993
        %v4995 = vrot.slane %v4990, %v4994
        %v5001 = vunpack.c.l.b16 %v4986
        %v5002 = vunpack.c.l.b16 %v4987
        %v5003 = vunpack.c.l.b16 %v4988
        %v5004 = vunpack.c.l.b16 %v4989
        %v5005 = vpack.c.b16 %v5002, %v5001
        %v5006 = vpack.c.b16 %v5004, %v5003
        %v5010 = vsel %vm475, %v4970, 0
        %v5013 = vsel %vm475, %v4971, 0
        %v5016 = vsel %vm475, %v4972, 0
        %v5019 = vsel %vm475, %v4973, 0
        %v5022 = vsel %vm475, %v4974, 0
        %v5025 = vsel %vm475, %v4975, 0
        %v5028 = vsel %vm475, %v4976, 0
        %v5031 = vsel %vm475, %v4977, 0
        %v5034 = vsel %vm475, %v4978, 0
        %v5037 = vsel %vm475, %v4979, 0
        %v5040 = vsel %vm475, %v4980, 0
        %v5043 = vsel %vm475, %v4981, 0
        %v5046 = vsel %vm475, %v4982, 0
        %v5049 = vsel %vm475, %v4983, 0
        %v5052 = vsel %vm475, %v4984, 0
        %v5055 = vsel %vm475, %v4985, 0
        %5057 = vmatprep.subr.bf16.mxu0 0
        %5058 = vmatpush1.bf16.msra.mxu0 %v5005
        %5059 = vmatprep.subr.bf16.mxu0 0
        %5060 = vmatpush1.bf16.msra.mxu0 %v5006
        %5061 = vmatprep.subr.bf16.mxu0 0
        %5062 = vmatpush1.bf16.msra.mxu0 0
        %5063 = vmatprep.subr.bf16.mxu0 0
        %5064 = vmatpush1.bf16.msra.mxu0 0
        %5065 = vmatprep.subr.bf16.mxu0 0
        %5066 = vmatpush1.bf16.msra.mxu0 0
        %5067 = vmatprep.subr.bf16.mxu0 0
        %5068 = vmatpush1.bf16.msra.mxu0 0
        %5069 = vmatprep.subr.bf16.mxu0 0
        %5070 = vmatpush1.bf16.msra.mxu0 0
        %5071 = vmatprep.subr.bf16.mxu0 0
        %5072 = vmatpush1.bf16.msra.mxu0 0
        %5073 = vmatprep.subr.bf16.mxu0 0
        %5074 = vmatpush1.bf16.msra.mxu0 0
        %5075 = vmatprep.subr.bf16.mxu0 0
        %5076 = vmatpush1.bf16.msra.mxu0 0
        %5077 = vmatprep.subr.bf16.mxu0 0
        %5078 = vmatpush1.bf16.msra.mxu0 0
        %5079 = vmatprep.subr.bf16.mxu0 0
        %5080 = vmatpush1.bf16.msra.mxu0 0
        %5081 = vmatprep.subr.bf16.mxu0 0
        %5082 = vmatpush1.bf16.msra.mxu0 0
        %5083 = vmatprep.subr.bf16.mxu0 0
        %5084 = vmatpush1.bf16.msra.mxu0 0
        %5085 = vmatprep.subr.bf16.mxu0 0
        %5086 = vmatpush1.bf16.msra.mxu0 0
        %5087 = vmatprep.subr.bf16.mxu0 0
        %5088 = vmatpush1.bf16.msra.mxu0 0
        %5089 = vmatprep.mubr.bf16.mxu0 0
        %5090 = vmatmul.mubr.bf16.gmra.mrb[0].mxu0 %v5010
        %v5091 = vpop.f32.mrb[0].mxu0
        %v5092 = vadd.f32 %v4995, %v5091
        %v5093 = vpop.f32.mrb[0].mxu0
        %v5094 = vpop.f32.mrb[0].mxu0
        %v5095 = vadd.f32 %v4995, %v5094
        %v5096 = vpop.f32.mrb[0].mxu0
        %5097 = vmatprep.mubr.bf16.mxu0 0
        %5098 = vmatmul.mubr.bf16.gmra.mrb[0].mxu0 %v5013
        %v5099 = vpop.f32.mrb[0].mxu0
        %v5100 = vadd.f32 %v4995, %v5099
        %v5101 = vpop.f32.mrb[0].mxu0
        %v5102 = vpop.f32.mrb[0].mxu0
        %v5103 = vadd.f32 %v4995, %v5102
        %v5104 = vpop.f32.mrb[0].mxu0
        %5105 = vmatprep.mubr.bf16.mxu0 0
        %5106 = vmatmul.mubr.bf16.gmra.mrb[0].mxu0 %v5016
        %v5107 = vpop.f32.mrb[0].mxu0
        %v5108 = vadd.f32 %v4995, %v5107
        %v5109 = vpop.f32.mrb[0].mxu0
        %v5110 = vpop.f32.mrb[0].mxu0
        %v5111 = vadd.f32 %v4995, %v5110
        %v5112 = vpop.f32.mrb[0].mxu0
        %5113 = vmatprep.mubr.bf16.mxu0 0
        %5114 = vmatmul.mubr.bf16.gmra.mrb[0].mxu0 %v5019
        %v5115 = vpop.f32.mrb[0].mxu0
        %v5116 = vadd.f32 %v4995, %v5115
        %v5117 = vpop.f32.mrb[0].mxu0
        %v5118 = vpop.f32.mrb[0].mxu0
        %v5119 = vadd.f32 %v4995, %v5118
        %v5120 = vpop.f32.mrb[0].mxu0
        %5121 = vmatprep.mubr.bf16.mxu0 0
        %5122 = vmatmul.mubr.bf16.gmra.mrb[0].mxu0 %v5022
        %v5123 = vpop.f32.mrb[0].mxu0
        %v5124 = vadd.f32 %v4995, %v5123
        %v5125 = vpop.f32.mrb[0].mxu0
        %v5126 = vpop.f32.mrb[0].mxu0
        %v5127 = vadd.f32 %v4995, %v5126
        %v5128 = vpop.f32.mrb[0].mxu0
        %5129 = vmatprep.mubr.bf16.mxu0 0
        %5130 = vmatmul.mubr.bf16.gmra.mrb[0].mxu0 %v5025
        %v5131 = vpop.f32.mrb[0].mxu0
        %v5132 = vadd.f32 %v4995, %v5131
        %v5133 = vpop.f32.mrb[0].mxu0
        %v5134 = vpop.f32.mrb[0].mxu0
        %v5135 = vadd.f32 %v4995, %v5134
        %v5136 = vpop.f32.mrb[0].mxu0
        %5137 = vmatprep.mubr.bf16.mxu0 0
        %5138 = vmatmul.mubr.bf16.gmra.mrb[0].mxu0 %v5028
        %v5139 = vpop.f32.mrb[0].mxu0
        %v5140 = vadd.f32 %v4995, %v5139
        %v5141 = vpop.f32.mrb[0].mxu0
        %v5142 = vpop.f32.mrb[0].mxu0
        %v5143 = vadd.f32 %v4995, %v5142
        %v5144 = vpop.f32.mrb[0].mxu0
        %5145 = vmatprep.mubr.bf16.mxu0 0
        %5146 = vmatmul.mubr.bf16.gmra.mrb[0].mxu0 %v5031
        %v5147 = vpop.f32.mrb[0].mxu0
        %v5148 = vadd.f32 %v4995, %v5147
        %v5149 = vpop.f32.mrb[0].mxu0
        %v5150 = vpop.f32.mrb[0].mxu0
        %v5151 = vadd.f32 %v4995, %v5150
        %v5152 = vpop.f32.mrb[0].mxu0
        %5153 = vmatprep.mubr.bf16.mxu0 0
        %5154 = vmatmul.mubr.bf16.gmra.mrb[0].mxu0 %v5034
        %v5155 = vpop.f32.mrb[0].mxu0
        %v5156 = vadd.f32 %v4995, %v5155
        %v5157 = vpop.f32.mrb[0].mxu0
        %v5158 = vpop.f32.mrb[0].mxu0
        %v5159 = vadd.f32 %v4995, %v5158
        %v5160 = vpop.f32.mrb[0].mxu0
        %5161 = vmatprep.mubr.bf16.mxu0 0
        %5162 = vmatmul.mubr.bf16.gmra.mrb[0].mxu0 %v5037
        %v5163 = vpop.f32.mrb[0].mxu0
        %v5164 = vadd.f32 %v4995, %v5163
        %v5165 = vpop.f32.mrb[0].mxu0
        %v5166 = vpop.f32.mrb[0].mxu0
        %v5167 = vadd.f32 %v4995, %v5166
        %v5168 = vpop.f32.mrb[0].mxu0
        %5169 = vmatprep.mubr.bf16.mxu0 0
        %5170 = vmatmul.mubr.bf16.gmra.mrb[0].mxu0 %v5040
        %v5171 = vpop.f32.mrb[0].mxu0
        %v5172 = vadd.f32 %v4995, %v5171
        %v5173 = vpop.f32.mrb[0].mxu0
        %v5174 = vpop.f32.mrb[0].mxu0
        %v5175 = vadd.f32 %v4995, %v5174
        %v5176 = vpop.f32.mrb[0].mxu0
        %5177 = vmatprep.mubr.bf16.mxu0 0
        %5178 = vmatmul.mubr.bf16.gmra.mrb[0].mxu0 %v5043
        %v5179 = vpop.f32.mrb[0].mxu0
        %v5180 = vadd.f32 %v4995, %v5179
        %v5181 = vpop.f32.mrb[0].mxu0
        %v5182 = vpop.f32.mrb[0].mxu0
        %v5183 = vadd.f32 %v4995, %v5182
        %v5184 = vpop.f32.mrb[0].mxu0
        %5185 = vmatprep.mubr.bf16.mxu0 0
        %5186 = vmatmul.mubr.bf16.gmra.mrb[0].mxu0 %v5046
        %v5187 = vpop.f32.mrb[0].mxu0
        %v5188 = vadd.f32 %v4995, %v5187
        %v5189 = vpop.f32.mrb[0].mxu0
        %v5190 = vpop.f32.mrb[0].mxu0
        %v5191 = vadd.f32 %v4995, %v5190
        %v5192 = vpop.f32.mrb[0].mxu0
        %5193 = vmatprep.mubr.bf16.mxu0 0
        %5194 = vmatmul.mubr.bf16.gmra.mrb[0].mxu0 %v5049
        %v5195 = vpop.f32.mrb[0].mxu0
        %v5196 = vadd.f32 %v4995, %v5195
        %v5197 = vpop.f32.mrb[0].mxu0
        %v5198 = vpop.f32.mrb[0].mxu0
        %v5199 = vadd.f32 %v4995, %v5198
        %v5200 = vpop.f32.mrb[0].mxu0
        %5201 = vmatprep.mubr.bf16.mxu0 0
        %5202 = vmatmul.mubr.bf16.gmra.mrb[0].mxu0 %v5052
        %v5203 = vpop.f32.mrb[0].mxu0
        %v5204 = vadd.f32 %v4995, %v5203
        %v5205 = vpop.f32.mrb[0].mxu0
        %v5206 = vpop.f32.mrb[0].mxu0
        %v5207 = vadd.f32 %v4995, %v5206
        %v5208 = vpop.f32.mrb[0].mxu0
        %5209 = vmatprep.mubr.bf16.mxu0 0
        %5210 = vmatmul.mubr.bf16.gmra.mrb[0].mxu0 %v5055
        %v5211 = vpop.f32.mrb[0].mxu0
        %v5212 = vadd.f32 %v4995, %v5211
        %v5213 = vpop.f32.mrb[0].mxu0
        %v5214 = vpop.f32.mrb[0].mxu0
        %v5215 = vadd.f32 %v4995, %v5214
        %v5216 = vpop.f32.mrb[0].mxu0
        %5217 = vdwg.mxu0
        %v5218 = vmul.f32 %v5092, %v5092
        %v5219 = vmul.f32 %v5095, %v5095
        %v5220 = vmul.f32 %v5100, %v5100
        %v5221 = vmul.f32 %v5103, %v5103
        %v5222 = vmul.f32 %v5108, %v5108
        %v5223 = vmul.f32 %v5111, %v5111
        %v5224 = vmul.f32 %v5116, %v5116
        %v5225 = vmul.f32 %v5119, %v5119
        %v5226 = vmul.f32 %v5124, %v5124
        %v5227 = vmul.f32 %v5127, %v5127
        %v5228 = vmul.f32 %v5132, %v5132
        %v5229 = vmul.f32 %v5135, %v5135
        %v5230 = vmul.f32 %v5140, %v5140
        %v5231 = vmul.f32 %v5143, %v5143
        %v5232 = vmul.f32 %v5148, %v5148
        %v5233 = vmul.f32 %v5151, %v5151
        %v5234 = vmul.f32 %v5156, %v5156
        %v5235 = vmul.f32 %v5159, %v5159
        %v5236 = vmul.f32 %v5164, %v5164
        %v5237 = vmul.f32 %v5167, %v5167
        %v5238 = vmul.f32 %v5172, %v5172
        %v5239 = vmul.f32 %v5175, %v5175
        %v5240 = vmul.f32 %v5180, %v5180
        %v5241 = vmul.f32 %v5183, %v5183
        %v5242 = vmul.f32 %v5188, %v5188
        %v5243 = vmul.f32 %v5191, %v5191
        %v5244 = vmul.f32 %v5196, %v5196
        %v5245 = vmul.f32 %v5199, %v5199
        %v5246 = vmul.f32 %v5204, %v5204
        %v5247 = vmul.f32 %v5207, %v5207
        %v5248 = vmul.f32 %v5212, %v5212
        %v5249 = vmul.f32 %v5215, %v5215
        %v5250 = vmul.f32 %v5092, %v5218
        %v5251 = vmul.f32 %v5095, %v5219
        %v5252 = vmul.f32 %v5100, %v5220
        %v5253 = vmul.f32 %v5103, %v5221
        %v5254 = vmul.f32 %v5108, %v5222
        %v5255 = vmul.f32 %v5111, %v5223
        %v5256 = vmul.f32 %v5116, %v5224
        %v5257 = vmul.f32 %v5119, %v5225
        %v5258 = vmul.f32 %v5124, %v5226
        %v5259 = vmul.f32 %v5127, %v5227
        %v5260 = vmul.f32 %v5132, %v5228
        %v5261 = vmul.f32 %v5135, %v5229
        %v5262 = vmul.f32 %v5140, %v5230
        %v5263 = vmul.f32 %v5143, %v5231
        %v5264 = vmul.f32 %v5148, %v5232
        %v5265 = vmul.f32 %v5151, %v5233
        %v5266 = vmul.f32 %v5156, %v5234
        %v5267 = vmul.f32 %v5159, %v5235
        %v5268 = vmul.f32 %v5164, %v5236
        %v5269 = vmul.f32 %v5167, %v5237
        %v5270 = vmul.f32 %v5172, %v5238
        %v5271 = vmul.f32 %v5175, %v5239
        %v5272 = vmul.f32 %v5180, %v5240
        %v5273 = vmul.f32 %v5183, %v5241
        %v5274 = vmul.f32 %v5188, %v5242
        %v5275 = vmul.f32 %v5191, %v5243
        %v5276 = vmul.f32 %v5196, %v5244
        %v5277 = vmul.f32 %v5199, %v5245
        %v5278 = vmul.f32 %v5204, %v5246
        %v5279 = vmul.f32 %v5207, %v5247
        %v5280 = vmul.f32 %v5212, %v5248
        %v5281 = vmul.f32 %v5215, %v5249
        %v5282 = vmul.f32 %v5250, 0.044715
        %v5283 = vmul.f32 %v5251, 0.044715
        %v5284 = vmul.f32 %v5252, 0.044715
        %v5285 = vmul.f32 %v5253, 0.044715
        %v5286 = vmul.f32 %v5254, 0.044715
        %v5287 = vmul.f32 %v5255, 0.044715
        %v5288 = vmul.f32 %v5256, 0.044715
        %v5289 = vmul.f32 %v5257, 0.044715
        %v5290 = vmul.f32 %v5258, 0.044715
        %v5291 = vmul.f32 %v5259, 0.044715
        %v5292 = vmul.f32 %v5260, 0.044715
        %v5293 = vmul.f32 %v5261, 0.044715
        %v5294 = vmul.f32 %v5262, 0.044715
        %v5295 = vmul.f32 %v5263, 0.044715
        %v5296 = vmul.f32 %v5264, 0.044715
        %v5297 = vmul.f32 %v5265, 0.044715
        %v5298 = vmul.f32 %v5266, 0.044715
        %v5299 = vmul.f32 %v5267, 0.044715
        %v5300 = vmul.f32 %v5268, 0.044715
        %v5301 = vmul.f32 %v5269, 0.044715
        %v5302 = vmul.f32 %v5270, 0.044715
        %v5303 = vmul.f32 %v5271, 0.044715
        %v5304 = vmul.f32 %v5272, 0.044715
        %v5305 = vmul.f32 %v5273, 0.044715
        %v5306 = vmul.f32 %v5274, 0.044715
        %v5307 = vmul.f32 %v5275, 0.044715
        %v5308 = vmul.f32 %v5276, 0.044715
        %v5309 = vmul.f32 %v5277, 0.044715
        %v5310 = vmul.f32 %v5278, 0.044715
        %v5311 = vmul.f32 %v5279, 0.044715
        %v5312 = vmul.f32 %v5280, 0.044715
        %v5313 = vmul.f32 %v5281, 0.044715
        %v5314 = vadd.f32 %v5092, %v5282
        %v5315 = vadd.f32 %v5095, %v5283
        %v5316 = vadd.f32 %v5100, %v5284
        %v5317 = vadd.f32 %v5103, %v5285
        %v5318 = vadd.f32 %v5108, %v5286
        %v5319 = vadd.f32 %v5111, %v5287
        %v5320 = vadd.f32 %v5116, %v5288
        %v5321 = vadd.f32 %v5119, %v5289
        %v5322 = vadd.f32 %v5124, %v5290
        %v5323 = vadd.f32 %v5127, %v5291
        %v5324 = vadd.f32 %v5132, %v5292
        %v5325 = vadd.f32 %v5135, %v5293
        %v5326 = vadd.f32 %v5140, %v5294
        %v5327 = vadd.f32 %v5143, %v5295
        %v5328 = vadd.f32 %v5148, %v5296
        %v5329 = vadd.f32 %v5151, %v5297
        %v5330 = vadd.f32 %v5156, %v5298
        %v5331 = vadd.f32 %v5159, %v5299
        %v5332 = vadd.f32 %v5164, %v5300
        %v5333 = vadd.f32 %v5167, %v5301
        %v5334 = vadd.f32 %v5172, %v5302
        %v5335 = vadd.f32 %v5175, %v5303
        %v5336 = vadd.f32 %v5180, %v5304
        %v5337 = vadd.f32 %v5183, %v5305
        %v5338 = vadd.f32 %v5188, %v5306
        %v5339 = vadd.f32 %v5191, %v5307
        %v5340 = vadd.f32 %v5196, %v5308
        %v5341 = vadd.f32 %v5199, %v5309
        %v5342 = vadd.f32 %v5204, %v5310
        %v5343 = vadd.f32 %v5207, %v5311
        %v5344 = vadd.f32 %v5212, %v5312
        %v5345 = vadd.f32 %v5215, %v5313
        %v5346 = vmul.f32 %v5314, 0.7978846
        %v5347 = vmul.f32 %v5315, 0.7978846
        %v5348 = vmul.f32 %v5316, 0.7978846
        %v5349 = vmul.f32 %v5317, 0.7978846
        %v5350 = vmul.f32 %v5318, 0.7978846
        %v5351 = vmul.f32 %v5319, 0.7978846
        %v5352 = vmul.f32 %v5320, 0.7978846
        %v5353 = vmul.f32 %v5321, 0.7978846
        %v5354 = vmul.f32 %v5322, 0.7978846
        %v5355 = vmul.f32 %v5323, 0.7978846
        %v5356 = vmul.f32 %v5324, 0.7978846
        %v5357 = vmul.f32 %v5325, 0.7978846
        %v5358 = vmul.f32 %v5326, 0.7978846
        %v5359 = vmul.f32 %v5327, 0.7978846
        %v5360 = vmul.f32 %v5328, 0.7978846
        %v5361 = vmul.f32 %v5329, 0.7978846
        %v5362 = vmul.f32 %v5330, 0.7978846
        %v5363 = vmul.f32 %v5331, 0.7978846
        %v5364 = vmul.f32 %v5332, 0.7978846
        %v5365 = vmul.f32 %v5333, 0.7978846
        %v5366 = vmul.f32 %v5334, 0.7978846
        %v5367 = vmul.f32 %v5335, 0.7978846
        %v5368 = vmul.f32 %v5336, 0.7978846
        %v5369 = vmul.f32 %v5337, 0.7978846
        %v5370 = vmul.f32 %v5338, 0.7978846
        %v5371 = vmul.f32 %v5339, 0.7978846
        %v5372 = vmul.f32 %v5340, 0.7978846
        %v5373 = vmul.f32 %v5341, 0.7978846
        %v5374 = vmul.f32 %v5342, 0.7978846
        %v5375 = vmul.f32 %v5343, 0.7978846
        %v5376 = vmul.f32 %v5344, 0.7978846
        %v5377 = vmul.f32 %v5345, 0.7978846
        %v5378 = vtanh.pop %v5346
        %v5379 = vtanh.pop %v5347
        %v5380 = vtanh.pop %v5348
        %v5381 = vtanh.pop %v5349
        %v5382 = vtanh.pop %v5350
        %v5383 = vtanh.pop %v5351
        %v5384 = vtanh.pop %v5352
        %v5385 = vtanh.pop %v5353
        %v5386 = vtanh.pop %v5354
        %v5387 = vtanh.pop %v5355
        %v5388 = vtanh.pop %v5356
        %v5389 = vtanh.pop %v5357
        %v5390 = vtanh.pop %v5358
        %v5391 = vtanh.pop %v5359
        %v5392 = vtanh.pop %v5360
        %v5393 = vtanh.pop %v5361
        %v5394 = vtanh.pop %v5362
        %v5395 = vtanh.pop %v5363
        %v5396 = vtanh.pop %v5364
        %v5397 = vtanh.pop %v5365
        %v5398 = vtanh.pop %v5366
        %v5399 = vtanh.pop %v5367
        %v5400 = vtanh.pop %v5368
        %v5401 = vtanh.pop %v5369
        %v5402 = vtanh.pop %v5370
        %v5403 = vtanh.pop %v5371
        %v5404 = vtanh.pop %v5372
        %v5405 = vtanh.pop %v5373
        %v5406 = vtanh.pop %v5374
        %v5407 = vtanh.pop %v5375
        %v5408 = vtanh.pop %v5376
        %v5409 = vtanh.pop %v5377
        %v5410 = vadd.f32 %v5378, 1.0
        %v5411 = vadd.f32 %v5379, 1.0
        %v5412 = vadd.f32 %v5380, 1.0
        %v5413 = vadd.f32 %v5381, 1.0
        %v5414 = vadd.f32 %v5382, 1.0
        %v5415 = vadd.f32 %v5383, 1.0
        %v5416 = vadd.f32 %v5384, 1.0
        %v5417 = vadd.f32 %v5385, 1.0
        %v5418 = vadd.f32 %v5386, 1.0
        %v5419 = vadd.f32 %v5387, 1.0
        %v5420 = vadd.f32 %v5388, 1.0
        %v5421 = vadd.f32 %v5389, 1.0
        %v5422 = vadd.f32 %v5390, 1.0
        %v5423 = vadd.f32 %v5391, 1.0
        %v5424 = vadd.f32 %v5392, 1.0
        %v5425 = vadd.f32 %v5393, 1.0
        %v5426 = vadd.f32 %v5394, 1.0
        %v5427 = vadd.f32 %v5395, 1.0
        %v5428 = vadd.f32 %v5396, 1.0
        %v5429 = vadd.f32 %v5397, 1.0
        %v5430 = vadd.f32 %v5398, 1.0
        %v5431 = vadd.f32 %v5399, 1.0
        %v5432 = vadd.f32 %v5400, 1.0
        %v5433 = vadd.f32 %v5401, 1.0
        %v5434 = vadd.f32 %v5402, 1.0
        %v5435 = vadd.f32 %v5403, 1.0
        %v5436 = vadd.f32 %v5404, 1.0
        %v5437 = vadd.f32 %v5405, 1.0
        %v5438 = vadd.f32 %v5406, 1.0
        %v5439 = vadd.f32 %v5407, 1.0
        %v5440 = vadd.f32 %v5408, 1.0
        %v5441 = vadd.f32 %v5409, 1.0
        %v5442 = vmul.f32 %v5410, 0.5
        %v5443 = vmul.f32 %v5411, 0.5
        %v5444 = vmul.f32 %v5412, 0.5
        %v5445 = vmul.f32 %v5413, 0.5
        %v5446 = vmul.f32 %v5414, 0.5
        %v5447 = vmul.f32 %v5415, 0.5
        %v5448 = vmul.f32 %v5416, 0.5
        %v5449 = vmul.f32 %v5417, 0.5
        %v5450 = vmul.f32 %v5418, 0.5
        %v5451 = vmul.f32 %v5419, 0.5
        %v5452 = vmul.f32 %v5420, 0.5
        %v5453 = vmul.f32 %v5421, 0.5
        %v5454 = vmul.f32 %v5422, 0.5
        %v5455 = vmul.f32 %v5423, 0.5
        %v5456 = vmul.f32 %v5424, 0.5
        %v5457 = vmul.f32 %v5425, 0.5
        %v5458 = vmul.f32 %v5426, 0.5
        %v5459 = vmul.f32 %v5427, 0.5
        %v5460 = vmul.f32 %v5428, 0.5
        %v5461 = vmul.f32 %v5429, 0.5
        %v5462 = vmul.f32 %v5430, 0.5
        %v5463 = vmul.f32 %v5431, 0.5
        %v5464 = vmul.f32 %v5432, 0.5
        %v5465 = vmul.f32 %v5433, 0.5
        %v5466 = vmul.f32 %v5434, 0.5
        %v5467 = vmul.f32 %v5435, 0.5
        %v5468 = vmul.f32 %v5436, 0.5
        %v5469 = vmul.f32 %v5437, 0.5
        %v5470 = vmul.f32 %v5438, 0.5
        %v5471 = vmul.f32 %v5439, 0.5
        %v5472 = vmul.f32 %v5440, 0.5
        %v5473 = vmul.f32 %v5441, 0.5
        %v5474 = vmul.f32 %v5092, %v5442
        %v5475 = vmul.f32 %v5095, %v5443
        %v5476 = vmul.f32 %v5100, %v5444
        %v5477 = vmul.f32 %v5103, %v5445
        %v5478 = vmul.f32 %v5108, %v5446
        %v5479 = vmul.f32 %v5111, %v5447
        %v5480 = vmul.f32 %v5116, %v5448
        %v5481 = vmul.f32 %v5119, %v5449
        %v5482 = vmul.f32 %v5124, %v5450
        %v5483 = vmul.f32 %v5127, %v5451
        %v5484 = vmul.f32 %v5132, %v5452
        %v5485 = vmul.f32 %v5135, %v5453
        %v5486 = vmul.f32 %v5140, %v5454
        %v5487 = vmul.f32 %v5143, %v5455
        %v5488 = vmul.f32 %v5148, %v5456
        %v5489 = vmul.f32 %v5151, %v5457
        %v5490 = vmul.f32 %v5156, %v5458
        %v5491 = vmul.f32 %v5159, %v5459
        %v5492 = vmul.f32 %v5164, %v5460
        %v5493 = vmul.f32 %v5167, %v5461
        %v5494 = vmul.f32 %v5172, %v5462
        %v5495 = vmul.f32 %v5175, %v5463
        %v5496 = vmul.f32 %v5180, %v5464
        %v5497 = vmul.f32 %v5183, %v5465
        %v5498 = vmul.f32 %v5188, %v5466
        %v5499 = vmul.f32 %v5191, %v5467
        %v5500 = vmul.f32 %v5196, %v5468
        %v5501 = vmul.f32 %v5199, %v5469
        %v5502 = vmul.f32 %v5204, %v5470
        %v5503 = vmul.f32 %v5207, %v5471
        %v5504 = vmul.f32 %v5212, %v5472
        %v5505 = vmul.f32 %v5215, %v5473
        %v5506 = vpack.c.bf16 %v5475, %v5474
        %v5507 = vpack.c.bf16 %v5477, %v5476
        %v5508 = vpack.c.bf16 %v5479, %v5478
        %v5509 = vpack.c.bf16 %v5481, %v5480
        %v5510 = vpack.c.bf16 %v5483, %v5482
        %v5511 = vpack.c.bf16 %v5485, %v5484
        %v5512 = vpack.c.bf16 %v5487, %v5486
        %v5513 = vpack.c.bf16 %v5489, %v5488
        %v5514 = vpack.c.bf16 %v5491, %v5490
        %v5515 = vpack.c.bf16 %v5493, %v5492
        %v5516 = vpack.c.bf16 %v5495, %v5494
        %v5517 = vpack.c.bf16 %v5497, %v5496
        %v5518 = vpack.c.bf16 %v5499, %v5498
        %v5519 = vpack.c.bf16 %v5501, %v5500
        %v5520 = vpack.c.bf16 %v5503, %v5502
        %v5521 = vpack.c.bf16 %v5505, %v5504
        %v5522 = vld [vmem:[%s9] sm:$0xf]
        %v5523 = vld [vmem:[%s9 + $0x4] sm:$0xf]
        %v5524 = vld [vmem:[%s9 + $0x8] sm:$0xf]
        %v5525 = vld [vmem:[%s9 + $0xc] sm:$0xf]
        %v5526 = vld [vmem:[%s10] sm:$0x1]
        %v5528 = vlaneseq
        %v5529 = vshrl.u32 %v5528, 7
        %v5530 = vsub.s32 0, %v5529
        %v5531 = vrot.slane %v5526, %v5530
        %v5537 = vunpack.c.l.b16 %v5522
        %v5538 = vunpack.c.l.b16 %v5523
        %v5539 = vunpack.c.l.b16 %v5524
        %v5540 = vunpack.c.l.b16 %v5525
        %v5541 = vpack.c.b16 %v5538, %v5537
        %v5542 = vpack.c.b16 %v5540, %v5539
        %v5546 = vsel %vm475, %v5506, 0
        %v5549 = vsel %vm475, %v5507, 0
        %v5552 = vsel %vm475, %v5508, 0
        %v5555 = vsel %vm475, %v5509, 0
        %v5558 = vsel %vm475, %v5510, 0
        %v5561 = vsel %vm475, %v5511, 0
        %v5564 = vsel %vm475, %v5512, 0
        %v5567 = vsel %vm475, %v5513, 0
        %v5570 = vsel %vm475, %v5514, 0
        %v5573 = vsel %vm475, %v5515, 0
        %v5576 = vsel %vm475, %v5516, 0
        %v5579 = vsel %vm475, %v5517, 0
        %v5582 = vsel %vm475, %v5518, 0
        %v5585 = vsel %vm475, %v5519, 0
        %v5588 = vsel %vm475, %v5520, 0
        %v5591 = vsel %vm475, %v5521, 0
        %5593 = vmatprep.subr.bf16.mxu0 0
        %5594 = vmatpush1.bf16.msra.mxu0 %v5541
        %5595 = vmatprep.subr.bf16.mxu0 0
        %5596 = vmatpush1.bf16.msra.mxu0 %v5542
        %5597 = vmatprep.subr.bf16.mxu0 0
        %5598 = vmatpush1.bf16.msra.mxu0 0
        %5599 = vmatprep.subr.bf16.mxu0 0
        %5600 = vmatpush1.bf16.msra.mxu0 0
        %5601 = vmatprep.subr.bf16.mxu0 0
        %5602 = vmatpush1.bf16.msra.mxu0 0
        %5603 = vmatprep.subr.bf16.mxu0 0
        %5604 = vmatpush1.bf16.msra.mxu0 0
        %5605 = vmatprep.subr.bf16.mxu0 0
        %5606 = vmatpush1.bf16.msra.mxu0 0
        %5607 = vmatprep.subr.bf16.mxu0 0
        %5608 = vmatpush1.bf16.msra.mxu0 0
        %5609 = vmatprep.subr.bf16.mxu0 0
        %5610 = vmatpush1.bf16.msra.mxu0 0
        %5611 = vmatprep.subr.bf16.mxu0 0
        %5612 = vmatpush1.bf16.msra.mxu0 0
        %5613 = vmatprep.subr.bf16.mxu0 0
        %5614 = vmatpush1.bf16.msra.mxu0 0
        %5615 = vmatprep.subr.bf16.mxu0 0
        %5616 = vmatpush1.bf16.msra.mxu0 0
        %5617 = vmatprep.subr.bf16.mxu0 0
        %5618 = vmatpush1.bf16.msra.mxu0 0
        %5619 = vmatprep.subr.bf16.mxu0 0
        %5620 = vmatpush1.bf16.msra.mxu0 0
        %5621 = vmatprep.subr.bf16.mxu0 0
        %5622 = vmatpush1.bf16.msra.mxu0 0
        %5623 = vmatprep.subr.bf16.mxu0 0
        %5624 = vmatpush1.bf16.msra.mxu0 0
        %5625 = vmatprep.mubr.bf16.mxu0 0
        %5626 = vmatmul.mubr.bf16.gmra.mrb[0].mxu0 %v5546
        %v5627 = vpop.f32.mrb[0].mxu0
        %v5628 = vadd.f32 %v5531, %v5627
        %v5629 = vpop.f32.mrb[0].mxu0
        %v5630 = vpop.f32.mrb[0].mxu0
        %v5631 = vadd.f32 %v5531, %v5630
        %v5632 = vpop.f32.mrb[0].mxu0
        %5633 = vmatprep.mubr.bf16.mxu0 0
        %5634 = vmatmul.mubr.bf16.gmra.mrb[0].mxu0 %v5549
        %v5635 = vpop.f32.mrb[0].mxu0
        %v5636 = vadd.f32 %v5531, %v5635
        %v5637 = vpop.f32.mrb[0].mxu0
        %v5638 = vpop.f32.mrb[0].mxu0
        %v5639 = vadd.f32 %v5531, %v5638
        %v5640 = vpop.f32.mrb[0].mxu0
        %5641 = vmatprep.mubr.bf16.mxu0 0
        %5642 = vmatmul.mubr.bf16.gmra.mrb[0].mxu0 %v5552
        %v5643 = vpop.f32.mrb[0].mxu0
        %v5644 = vadd.f32 %v5531, %v5643
        %v5645 = vpop.f32.mrb[0].mxu0
        %v5646 = vpop.f32.mrb[0].mxu0
        %v5647 = vadd.f32 %v5531, %v5646
        %v5648 = vpop.f32.mrb[0].mxu0
        %5649 = vmatprep.mubr.bf16.mxu0 0
        %5650 = vmatmul.mubr.bf16.gmra.mrb[0].mxu0 %v5555
        %v5651 = vpop.f32.mrb[0].mxu0
        %v5652 = vadd.f32 %v5531, %v5651
        %v5653 = vpop.f32.mrb[0].mxu0
        %v5654 = vpop.f32.mrb[0].mxu0
        %v5655 = vadd.f32 %v5531, %v5654
        %v5656 = vpop.f32.mrb[0].mxu0
        %5657 = vmatprep.mubr.bf16.mxu0 0
        %5658 = vmatmul.mubr.bf16.gmra.mrb[0].mxu0 %v5558
        %v5659 = vpop.f32.mrb[0].mxu0
        %v5660 = vadd.f32 %v5531, %v5659
        %v5661 = vpop.f32.mrb[0].mxu0
        %v5662 = vpop.f32.mrb[0].mxu0
        %v5663 = vadd.f32 %v5531, %v5662
        %v5664 = vpop.f32.mrb[0].mxu0
        %5665 = vmatprep.mubr.bf16.mxu0 0
        %5666 = vmatmul.mubr.bf16.gmra.mrb[0].mxu0 %v5561
        %v5667 = vpop.f32.mrb[0].mxu0
        %v5668 = vadd.f32 %v5531, %v5667
        %v5669 = vpop.f32.mrb[0].mxu0
        %v5670 = vpop.f32.mrb[0].mxu0
        %v5671 = vadd.f32 %v5531, %v5670
        %v5672 = vpop.f32.mrb[0].mxu0
        %5673 = vmatprep.mubr.bf16.mxu0 0
        %5674 = vmatmul.mubr.bf16.gmra.mrb[0].mxu0 %v5564
        %v5675 = vpop.f32.mrb[0].mxu0
        %v5676 = vadd.f32 %v5531, %v5675
        %v5677 = vpop.f32.mrb[0].mxu0
        %v5678 = vpop.f32.mrb[0].mxu0
        %v5679 = vadd.f32 %v5531, %v5678
        %v5680 = vpop.f32.mrb[0].mxu0
        %5681 = vmatprep.mubr.bf16.mxu0 0
        %5682 = vmatmul.mubr.bf16.gmra.mrb[0].mxu0 %v5567
        %v5683 = vpop.f32.mrb[0].mxu0
        %v5684 = vadd.f32 %v5531, %v5683
        %v5685 = vpop.f32.mrb[0].mxu0
        %v5686 = vpop.f32.mrb[0].mxu0
        %v5687 = vadd.f32 %v5531, %v5686
        %v5688 = vpop.f32.mrb[0].mxu0
        %5689 = vmatprep.mubr.bf16.mxu0 0
        %5690 = vmatmul.mubr.bf16.gmra.mrb[0].mxu0 %v5570
        %v5691 = vpop.f32.mrb[0].mxu0
        %v5692 = vadd.f32 %v5531, %v5691
        %v5693 = vpop.f32.mrb[0].mxu0
        %v5694 = vpop.f32.mrb[0].mxu0
        %v5695 = vadd.f32 %v5531, %v5694
        %v5696 = vpop.f32.mrb[0].mxu0
        %5697 = vmatprep.mubr.bf16.mxu0 0
        %5698 = vmatmul.mubr.bf16.gmra.mrb[0].mxu0 %v5573
        %v5699 = vpop.f32.mrb[0].mxu0
        %v5700 = vadd.f32 %v5531, %v5699
        %v5701 = vpop.f32.mrb[0].mxu0
        %v5702 = vpop.f32.mrb[0].mxu0
        %v5703 = vadd.f32 %v5531, %v5702
        %v5704 = vpop.f32.mrb[0].mxu0
        %5705 = vmatprep.mubr.bf16.mxu0 0
        %5706 = vmatmul.mubr.bf16.gmra.mrb[0].mxu0 %v5576
        %v5707 = vpop.f32.mrb[0].mxu0
        %v5708 = vadd.f32 %v5531, %v5707
        %v5709 = vpop.f32.mrb[0].mxu0
        %v5710 = vpop.f32.mrb[0].mxu0
        %v5711 = vadd.f32 %v5531, %v5710
        %v5712 = vpop.f32.mrb[0].mxu0
        %5713 = vmatprep.mubr.bf16.mxu0 0
        %5714 = vmatmul.mubr.bf16.gmra.mrb[0].mxu0 %v5579
        %v5715 = vpop.f32.mrb[0].mxu0
        %v5716 = vadd.f32 %v5531, %v5715
        %v5717 = vpop.f32.mrb[0].mxu0
        %v5718 = vpop.f32.mrb[0].mxu0
        %v5719 = vadd.f32 %v5531, %v5718
        %v5720 = vpop.f32.mrb[0].mxu0
        %5721 = vmatprep.mubr.bf16.mxu0 0
        %5722 = vmatmul.mubr.bf16.gmra.mrb[0].mxu0 %v5582
        %v5723 = vpop.f32.mrb[0].mxu0
        %v5724 = vadd.f32 %v5531, %v5723
        %v5725 = vpop.f32.mrb[0].mxu0
        %v5726 = vpop.f32.mrb[0].mxu0
        %v5727 = vadd.f32 %v5531, %v5726
        %v5728 = vpop.f32.mrb[0].mxu0
        %5729 = vmatprep.mubr.bf16.mxu0 0
        %5730 = vmatmul.mubr.bf16.gmra.mrb[0].mxu0 %v5585
        %v5731 = vpop.f32.mrb[0].mxu0
        %v5732 = vadd.f32 %v5531, %v5731
        %v5733 = vpop.f32.mrb[0].mxu0
        %v5734 = vpop.f32.mrb[0].mxu0
        %v5735 = vadd.f32 %v5531, %v5734
        %v5736 = vpop.f32.mrb[0].mxu0
        %5737 = vmatprep.mubr.bf16.mxu0 0
        %5738 = vmatmul.mubr.bf16.gmra.mrb[0].mxu0 %v5588
        %v5739 = vpop.f32.mrb[0].mxu0
        %v5740 = vadd.f32 %v5531, %v5739
        %v5741 = vpop.f32.mrb[0].mxu0
        %v5742 = vpop.f32.mrb[0].mxu0
        %v5743 = vadd.f32 %v5531, %v5742
        %v5744 = vpop.f32.mrb[0].mxu0
        %5745 = vmatprep.mubr.bf16.mxu0 0
        %5746 = vmatmul.mubr.bf16.gmra.mrb[0].mxu0 %v5591
        %v5747 = vpop.f32.mrb[0].mxu0
        %v5748 = vadd.f32 %v5531, %v5747
        %v5749 = vpop.f32.mrb[0].mxu0
        %v5750 = vpop.f32.mrb[0].mxu0
        %v5751 = vadd.f32 %v5531, %v5750
        %v5752 = vpop.f32.mrb[0].mxu0
        %5753 = vdwg.mxu0
        %v5754 = vadd.f32 %v4938, %v5628
        %v5755 = vadd.f32 %v4939, %v5631
        %v5756 = vadd.f32 %v4940, %v5636
        %v5757 = vadd.f32 %v4941, %v5639
        %v5758 = vadd.f32 %v4942, %v5644
        %v5759 = vadd.f32 %v4943, %v5647
        %v5760 = vadd.f32 %v4944, %v5652
        %v5761 = vadd.f32 %v4945, %v5655
        %v5762 = vadd.f32 %v4946, %v5660
        %v5763 = vadd.f32 %v4947, %v5663
        %v5764 = vadd.f32 %v4948, %v5668
        %v5765 = vadd.f32 %v4949, %v5671
        %v5766 = vadd.f32 %v4950, %v5676
        %v5767 = vadd.f32 %v4951, %v5679
        %v5768 = vadd.f32 %v4952, %v5684
        %v5769 = vadd.f32 %v4953, %v5687
        %v5770 = vadd.f32 %v4954, %v5692
        %v5771 = vadd.f32 %v4955, %v5695
        %v5772 = vadd.f32 %v4956, %v5700
        %v5773 = vadd.f32 %v4957, %v5703
        %v5774 = vadd.f32 %v4958, %v5708
        %v5775 = vadd.f32 %v4959, %v5711
        %v5776 = vadd.f32 %v4960, %v5716
        %v5777 = vadd.f32 %v4961, %v5719
        %v5778 = vadd.f32 %v4962, %v5724
        %v5779 = vadd.f32 %v4963, %v5727
        %v5780 = vadd.f32 %v4964, %v5732
        %v5781 = vadd.f32 %v4965, %v5735
        %v5782 = vadd.f32 %v4966, %v5740
        %v5783 = vadd.f32 %v4967, %v5743
        %v5784 = vadd.f32 %v4968, %v5748
        %v5785 = vadd.f32 %v4969, %v5751
        %5786 = vst.msk [vmem:[%s473] sm:$0xff] %vm475, %v5754
        %5787 = vst.msk [vmem:[%s473 + $0x8] sm:$0xff] %vm475, %v5755
        %5788 = vst.msk [vmem:[%s473 + $0x10] sm:$0xff] %vm475, %v5756
        %5789 = vst.msk [vmem:[%s473 + $0x18] sm:$0xff] %vm475, %v5757
        %5790 = vst.msk [vmem:[%s473 + $0x20] sm:$0xff] %vm475, %v5758
        %5791 = vst.msk [vmem:[%s473 + $0x28] sm:$0xff] %vm475, %v5759
        %5792 = vst.msk [vmem:[%s473 + $0x30] sm:$0xff] %vm475, %v5760
        %5793 = vst.msk [vmem:[%s473 + $0x38] sm:$0xff] %vm475, %v5761
        %5794 = vst.msk [vmem:[%s473 + $0x40] sm:$0xff] %vm475, %v5762
        %5795 = vst.msk [vmem:[%s473 + $0x48] sm:$0xff] %vm475, %v5763
        %5796 = vst.msk [vmem:[%s473 + $0x50] sm:$0xff] %vm475, %v5764
        %5797 = vst.msk [vmem:[%s473 + $0x58] sm:$0xff] %vm475, %v5765
        %5798 = vst.msk [vmem:[%s473 + $0x60] sm:$0xff] %vm475, %v5766
        %5799 = vst.msk [vmem:[%s473 + $0x68] sm:$0xff] %vm475, %v5767
        %5800 = vst.msk [vmem:[%s473 + $0x70] sm:$0xff] %vm475, %v5768
        %5801 = vst.msk [vmem:[%s473 + $0x78] sm:$0xff] %vm475, %v5769
        %5802 = vst.msk [vmem:[%s473 + $0x80] sm:$0xff] %vm475, %v5770
        %5803 = vst.msk [vmem:[%s473 + $0x88] sm:$0xff] %vm475, %v5771
        %5804 = vst.msk [vmem:[%s473 + $0x90] sm:$0xff] %vm475, %v5772
        %5805 = vst.msk [vmem:[%s473 + $0x98] sm:$0xff] %vm475, %v5773
        %5806 = vst.msk [vmem:[%s473 + $0xa0] sm:$0xff] %vm475, %v5774
        %5807 = vst.msk [vmem:[%s473 + $0xa8] sm:$0xff] %vm475, %v5775
        %5808 = vst.msk [vmem:[%s473 + $0xb0] sm:$0xff] %vm475, %v5776
        %5809 = vst.msk [vmem:[%s473 + $0xb8] sm:$0xff] %vm475, %v5777
        %5810 = vst.msk [vmem:[%s473 + $0xc0] sm:$0xff] %vm475, %v5778
        %5811 = vst.msk [vmem:[%s473 + $0xc8] sm:$0xff] %vm475, %v5779
        %5812 = vst.msk [vmem:[%s473 + $0xd0] sm:$0xff] %vm475, %v5780
        %5813 = vst.msk [vmem:[%s473 + $0xd8] sm:$0xff] %vm475, %v5781
        %5814 = vst.msk [vmem:[%s473 + $0xe0] sm:$0xff] %vm475, %v5782
        %5815 = vst.msk [vmem:[%s473 + $0xe8] sm:$0xff] %vm475, %v5783
        %5816 = vst.msk [vmem:[%s473 + $0xf0] sm:$0xff] %vm475, %v5784
        %5817 = vst.msk [vmem:[%s473 + $0xf8] sm:$0xff] %vm475, %v5785
        %s5818 = sand.u32 %s275, 1
        %s5819 = scalar_lea.sflag [#allocation5], %s5818
        %s5820 = sand.u32 %s275, 1
        %s5821 = smul.addr %s5820, 256
        %s5822 = scalar_lea.vmem [#allocation14], %s5821
        // Predicated region
        $region89: #{tpu_custom_call.1} parent=63 // pred_check
          %p5823 = pneg %p285
        $region90: #{tpu_custom_call.1} parent=63 // pred_check_branch
          %5825 = sbr.rel (%p5823) target = $region92
        $region91: #{tpu_custom_call.1} parent=63 // pred_region
          %s5827 = ssub.s32 4096, 4096
          %5828 = vsyncadd %s5819, %s5827
          %s5829 = smul.addr %s31, 32
          %s5830 = smul.addr %s5829, 128
          %s5831 = scalar_lea.hbm %s11, %s5830
          %s5832 = sshll.u32 %s5822, 4
          %s5833 = int_to_ptr.vmem [resolvable:$true] %s5832
          %5838 = dma.vmem_to_hbm [thread:$0]  %s5833, 4096, %s5831, %s5819, 128, 128, 8
        $region92: #{tpu_custom_call.1} parent=63 // pred_fallthru
          _
      $region64: #{tpu_custom_call.1} parent=5 // pred_fallthru
        _
      %p5839 = scmp.le.s32.totalorder 2, %s26
      // Predicated region
      $region93: #{tpu_custom_call.1} parent=5 // pred_check
        %p5840 = pneg %p5839
      $region94: #{tpu_custom_call.1} parent=5 // pred_check_branch
        %5842 = sbr.rel (%p5840) target = $region96
      $region95: #{tpu_custom_call.1} parent=5 // pred_region
        %s5843 = ssub.s32 %s26, 2
        // Predicated region
        $region97: #{tpu_custom_call.1} parent=95 // pred_check
          %p5844 = pneg %p291
        $region98: #{tpu_custom_call.1} parent=95 // pred_check_branch
          %5846 = sbr.rel (%p5844) target = $region100
        $region99: #{tpu_custom_call.1} parent=95 // pred_region
          %s5847 = sand.u32 %s276, 1
          %s5848 = scalar_lea.sflag [#allocation5], %s5847
          %s5849 = sand.u32 %s276, 1
          %s5850 = smul.addr %s5849, 256
          %s5851 = scalar_lea.vmem [#allocation14], %s5850
          %5852 = dma.done %s5848, 4096
        $region100: #{tpu_custom_call.1} parent=95 // pred_fallthru
          _
      $region96: #{tpu_custom_call.1} parent=5 // pred_fallthru
        _
    $region6: #{tpu_custom_call.1} parent=1 // loop_footer
      %s30 = sadd.s32 1, %s26
    $region7: #{tpu_custom_call.1} parent=1 // loop_footer_branch
      %25 = sbr.rel target = $region3
    $region8: #{tpu_custom_call.1} parent=1 // loop_exit
      _
    %5853 = vsyncpa [#allocation4], 1
    %s5854 = scalar_lea.sflag [#allocation4], 1
    %5855 = vsyncpa %s5854, 1
    %5856 = vsyncpa [#allocation7], 1
    %5857 = vsyncpa [#allocation10], 1
    %5858 = vsyncpa [#allocation13], 1
    %5859 = vsyncpa [#allocation5], 1
    %s5860 = scalar_lea.sflag [#allocation5], 1
    %5861 = vsyncpa %s5860, 1

</llo_original>
